<compile_context>
chip_gen: v6e
topology: v6e:2x2x1
jax: 0.10.0
libtpu: 0.0.40
codegen_flags: <defaults>
</compile_context>

<pallas_src>
import jax
import jax.numpy as jnp
from jax.experimental import pallas as pl
from jax.experimental.pallas import tpu as pltpu


def _round_up(x, m):
    return (x + m - 1) // m * m


def _resblock_kernel(x_ref, w_ref, scale_ref, shift_ref, o_ref):
    """One batch tile of: relu(x + BN(conv3x3(x))).

    x_ref    : (Nblk, H+2, W+2, Cp) compute dtype; zero-padded NHWC input
    w_ref    : (3, 3, Cp, Cp)       conv weights (ky, kx, Cin, Cout)
    scale_ref: (1, Cp)  f32         folded BN scale
    shift_ref: (1, Cp)  f32         folded BN shift
    o_ref    : (Nblk*H*W, Cp) f32   output tile (sample-major rows, lane-dense)
    """
    nblk, hp, wp, cp = x_ref.shape
    h, w = hp - 2, wp - 2
    rows = nblk * h * w

    # 3x3 conv as 9 lane-dense MXU matmuls with a Cp-deep contraction each,
    # accumulated directly into the f32 output ref (acts as the accumulator).
    for ky in range(3):
        for kx in range(3):
            tap = x_ref[:, ky:ky + h, kx:kx + w, :].reshape(rows, cp)
            contrib = jax.lax.dot_general(
                tap, w_ref[ky, kx, :, :],
                dimension_numbers=(((1,), (0,)), ((), ())),
                preferred_element_type=jnp.float32)
            if ky == 0 and kx == 0:
                o_ref[...] = contrib
            else:
                o_ref[...] += contrib

    # Residual = centre of the padded tile, i.e. the original un-convolved x;
    # no separate residual input is streamed.
    resid = x_ref[:, 1:h + 1, 1:w + 1, :].astype(jnp.float32).reshape(rows, cp)

    # Folded BN + residual add + ReLU, all in f32 on the VPU.
    o_ref[...] = jnp.maximum(
        resid + o_ref[...] * scale_ref[...] + shift_ref[...], 0.0)


def _pick_batch_tile(n, h, w, cp, in_itemsize):
    """Largest batch tile whose double-buffered VMEM footprint fits the budget."""
    per_in = (h + 2) * (w + 2) * cp * in_itemsize   # padded input, per sample
    per_out = h * w * cp * 4                        # f32 output tile, per sample
    weights = 2 * 9 * cp * cp * in_itemsize         # conv weights (worst case 2x)
    budget = 28 * 1024 * 1024 - weights             # safe even on v7x (64 MiB VMEM)
    denom = 2 * per_in + 2 * per_out                # double-buffered in + out
    nblk = max(1, budget // max(denom, 1))
    if n >= 2:
        # keep at least 2 grid steps so pipelining / megacore sharding has work
        nblk = min(nblk, -(-n // 2))
    nblk = int(min(nblk, n))
    # shrink until the tile divides the batch and keeps rows 8-divisible
    # ((8,128) rule for the 2-D output block).
    while nblk > 1 and (n % nblk != 0 or (nblk * h * w) % 8 != 0):
        nblk -= 1
    if (nblk * h * w) % 8 != 0:
        nblk = n   # single full block: block dims == array dims is always legal
    return nblk


def residual_block_pallas(x_nchw, w_oihw, gamma, beta, running_mean,
                          running_var, eps=1e-5, compute_dtype=jnp.bfloat16):
    """Forward of ResidualBlock. x_nchw: (N, C, H, W) f32 -> (N, C, H, W) f32."""
    n, c, h, w = x_nchw.shape
    cp = _round_up(c, 128)  # lane-dense channel width
    # TODO(synk): for very small channel counts (C=4 here) a VPU-only conv
    #             (no channel padding / MXU) would be cheaper; the MXU path is
    #             kept since production AlphaZero filter counts are 64-256.

    # NCHW -> NHWC; zero-pad spatial halo of 1 and channels to Cp (lane-dense).
    # TODO(synk): keep the whole network NHWC end-to-end so this transpose pair
    #             (full HBM read+write) is not paid around every residual block.
    x = jnp.transpose(x_nchw, (0, 2, 3, 1)).astype(jnp.float32)
    xpad = jnp.pad(x, ((0, 0), (1, 1), (1, 1), (0, cp - c))).astype(compute_dtype)

    # Conv weights: OIHW -> (ky, kx, Cin, Cout), channel-padded to Cp.
    wk = jnp.transpose(w_oihw, (2, 3, 1, 0)).astype(jnp.float32)
    wk = jnp.pad(wk, ((0, 0), (0, 0), (0, cp - c), (0, cp - c)))
    wk = wk.astype(compute_dtype)

    # Inference-mode BN folded to per-channel scale/shift (kept in f32).
    scale = (gamma / jnp.sqrt(running_var + eps)).astype(jnp.float32)
    shift = (beta - running_mean * scale).astype(jnp.float32)
    scale = jnp.pad(scale, (0, cp - c)).reshape(1, cp)
    shift = jnp.pad(shift, (0, cp - c)).reshape(1, cp)

    nblk = _pick_batch_tile(n, h, w, cp, jnp.dtype(compute_dtype).itemsize)
    grid = (pl.cdiv(n, nblk),)

    grid_spec = pltpu.PrefetchScalarGridSpec(
        num_scalar_prefetch=0,
        grid=grid,
        in_specs=[
            pl.BlockSpec((nblk, h + 2, w + 2, cp), lambda i: (i, 0, 0, 0)),
            pl.BlockSpec((3, 3, cp, cp), lambda i: (0, 0, 0, 0)),
            pl.BlockSpec((1, cp), lambda i: (0, 0)),
            pl.BlockSpec((1, cp), lambda i: (0, 0)),
        ],
        out_specs=pl.BlockSpec((nblk * h * w, cp), lambda i: (i, 0)),
    )

    out2d = pl.pallas_call(
        _resblock_kernel,
        out_shape=jax.ShapeDtypeStruct((n * h * w, cp), jnp.float32),
        grid_spec=grid_spec,
        compiler_params=pltpu.CompilerParams(
            dimension_semantics=("parallel",),
            vmem_limit_bytes=48 * 1024 * 1024),
    )(xpad, wk, scale, shift)

    out_nhwc = out2d.reshape(n, h, w, cp)[..., :c]
    return jnp.transpose(out_nhwc, (0, 3, 1, 2))


def _reference(x_nchw, w_oihw, gamma, beta, running_mean, running_var,
               eps=1e-5):
    hconv = jax.lax.conv_general_dilated(
        x_nchw, w_oihw, window_strides=(1, 1), padding=((1, 1), (1, 1)),
        dimension_numbers=("NCHW", "OIHW", "NCHW"),
        precision=jax.lax.Precision.HIGHEST)
    scale = gamma / jnp.sqrt(running_var + eps)
    shift = beta - running_mean * scale
    hconv = hconv * scale[None, :, None, None] + shift[None, :, None, None]
    return jnp.maximum(x_nchw + hconv, 0.0)


if __name__ == "__main__":
    key = jax.random.PRNGKey(0)
    k0, k1, k2, k3, k4, k5 = jax.random.split(key, 6)

    N, C, H, W = 2, 4, 16, 16           # filters = 4 (toy shapes)
    x = jax.random.normal(k0, (N, C, H, W), dtype=jnp.float32)
    fan_in = C * 3 * 3
    w = jax.random.normal(k1, (C, C, 3, 3), dtype=jnp.float32) / jnp.sqrt(fan_in)
    gamma = 1.0 + 0.1 * jax.random.normal(k2, (C,), dtype=jnp.float32)
    beta = 0.1 * jax.random.normal(k3, (C,), dtype=jnp.float32)
    running_mean = 0.1 * jax.random.normal(k4, (C,), dtype=jnp.float32)
    running_var = 1.0 + 0.1 * jax.random.uniform(k5, (C,), dtype=jnp.float32)

    # f32 compute path: tight check against the f32 reference.
    out_f32 = jax.block_until_ready(residual_block_pallas(
        x, w, gamma, beta, running_mean, running_var,
        compute_dtype=jnp.float32))
    ref_f32 = _reference(x, w, gamma, beta, running_mean, running_var)
    assert out_f32.shape == (N, C, H, W)
    assert jnp.allclose(out_f32, ref_f32, atol=1e-4, rtol=1e-4), "f32 mismatch"

    # bf16-input / f32-accumulate path: check against a reference that uses the
    # same bf16-quantized inputs (only accumulation-order noise remains).
    out_bf16 = jax.block_until_ready(residual_block_pallas(
        x, w, gamma, beta, running_mean, running_var,
        compute_dtype=jnp.bfloat16))
    xq = x.astype(jnp.bfloat16).astype(jnp.float32)
    wq = w.astype(jnp.bfloat16).astype(jnp.float32)
    ref_bf16 = _reference(xq, wq, gamma, beta, running_mean, running_var)
    assert jnp.allclose(out_bf16, ref_bf16, atol=1e-3, rtol=1e-3), "bf16 mismatch"

    print("KERNEL_OK")
</pallas_src>

<mosaic_0001>
module attributes {stable_mosaic.version = 11 : i64} {
  func.func @_resblock_kernel(%arg0: i32, %arg1: memref<1x18x18x128xf32, #tpu.memory_space<vmem>>, %arg2: memref<3x3x128x128xf32, #tpu.memory_space<vmem>>, %arg3: memref<1x128xf32, #tpu.memory_space<vmem>>, %arg4: memref<1x128xf32, #tpu.memory_space<vmem>>, %arg5: memref<256x128xf32, #tpu.memory_space<vmem>>) attributes {dimension_semantics = [#tpu.dimension_semantics<parallel>], iteration_bounds = array<i64: 2>, scalar_prefetch = 0 : i64, scratch_operands = 0 : i64, tpu.core_type = #tpu.core_type<tc>, window_params = [{transform_indices = @transform_0, window_bounds = array<i64: 1, 18, 18, 128>}, {pipeline_mode = #tpu.pipeline_mode<synchronous>, transform_indices = @transform_1, window_bounds = array<i64: 3, 3, 128, 128>}, {pipeline_mode = #tpu.pipeline_mode<synchronous>, transform_indices = @transform_2, window_bounds = array<i64: 1, 128>}, {pipeline_mode = #tpu.pipeline_mode<synchronous>, transform_indices = @transform_3, window_bounds = array<i64: 1, 128>}, {transform_indices = @transform_4, window_bounds = array<i64: 256, 128>}]} {
    %c0 = arith.constant 0 : index
    %c0_0 = arith.constant 0 : index
    %c0_1 = arith.constant 0 : index
    %c0_2 = arith.constant 0 : index
    %0 = vector.load %arg1[%c0, %c0_0, %c0_1, %c0_2] : memref<1x18x18x128xf32, #tpu.memory_space<vmem>>, vector<1x16x16x128xf32>
    %1 = vector.shape_cast %0 : vector<1x16x16x128xf32> to vector<256x128xf32>
    %c0_3 = arith.constant 0 : index
    %c0_4 = arith.constant 0 : index
    %c0_5 = arith.constant 0 : index
    %c0_6 = arith.constant 0 : index
    %2 = vector.load %arg2[%c0_3, %c0_4, %c0_5, %c0_6] : memref<3x3x128x128xf32, #tpu.memory_space<vmem>>, vector<1x1x128x128xf32>
    %3 = vector.shape_cast %2 : vector<1x1x128x128xf32> to vector<128x128xf32>
    %cst = arith.constant dense<0.000000e+00> : vector<256x128xf32>
    %4 = tpu.matmul %1, %3, %cst {dimension_numbers = #tpu.dot_dimension_numbers<[1], [0], [0], [1], [0, 0, 1, 1], [], []>} : vector<256x128xf32>, vector<128x128xf32>, vector<256x128xf32> -> vector<256x128xf32>
    %c0_7 = arith.constant 0 : index
    %c0_8 = arith.constant 0 : index
    %5 = vector.load %arg5[%c0_7, %c0_8] : memref<256x128xf32, #tpu.memory_space<vmem>>, vector<256x128xf32>
    tpu.vector_store %arg5[%c0_7, %c0_8], %4 {strides = array<i32>} : memref<256x128xf32, #tpu.memory_space<vmem>>, vector<256x128xf32>,
    %c0_9 = arith.constant 0 : index
    %c0_10 = arith.constant 0 : index
    %c1 = arith.constant 1 : index
    %c0_11 = arith.constant 0 : index
    %6 = vector.load %arg1[%c0_9, %c0_10, %c1, %c0_11] : memref<1x18x18x128xf32, #tpu.memory_space<vmem>>, vector<1x16x16x128xf32>
    %7 = vector.shape_cast %6 : vector<1x16x16x128xf32> to vector<256x128xf32>
    %c0_12 = arith.constant 0 : index
    %c1_13 = arith.constant 1 : index
    %c0_14 = arith.constant 0 : index
    %c0_15 = arith.constant 0 : index
    %8 = vector.load %arg2[%c0_12, %c1_13, %c0_14, %c0_15] : memref<3x3x128x128xf32, #tpu.memory_space<vmem>>, vector<1x1x128x128xf32>
    %9 = vector.shape_cast %8 : vector<1x1x128x128xf32> to vector<128x128xf32>
    %cst_16 = arith.constant dense<0.000000e+00> : vector<256x128xf32>
    %10 = tpu.matmul %7, %9, %cst_16 {dimension_numbers = #tpu.dot_dimension_numbers<[1], [0], [0], [1], [0, 0, 1, 1], [], []>} : vector<256x128xf32>, vector<128x128xf32>, vector<256x128xf32> -> vector<256x128xf32>
    %c0_17 = arith.constant 0 : index
    %c0_18 = arith.constant 0 : index
    %11 = vector.load %arg5[%c0_17, %c0_18] : memref<256x128xf32, #tpu.memory_space<vmem>>, vector<256x128xf32>
    %12 = arith.addf %11, %10 : vector<256x128xf32>
    %c0_19 = arith.constant 0 : index
    %c0_20 = arith.constant 0 : index
    %13 = vector.load %arg5[%c0_19, %c0_20] : memref<256x128xf32, #tpu.memory_space<vmem>>, vector<256x128xf32>
    tpu.vector_store %arg5[%c0_19, %c0_20], %12 {strides = array<i32>} : memref<256x128xf32, #tpu.memory_space<vmem>>, vector<256x128xf32>,
    %c0_21 = arith.constant 0 : index
    %c0_22 = arith.constant 0 : index
    %c2 = arith.constant 2 : index
    %c0_23 = arith.constant 0 : index
    %14 = vector.load %arg1[%c0_21, %c0_22, %c2, %c0_23] : memref<1x18x18x128xf32, #tpu.memory_space<vmem>>, vector<1x16x16x128xf32>
    %15 = vector.shape_cast %14 : vector<1x16x16x128xf32> to vector<256x128xf32>
    %c0_24 = arith.constant 0 : index
    %c2_25 = arith.constant 2 : index
    %c0_26 = arith.constant 0 : index
    %c0_27 = arith.constant 0 : index
    %16 = vector.load %arg2[%c0_24, %c2_25, %c0_26, %c0_27] : memref<3x3x128x128xf32, #tpu.memory_space<vmem>>, vector<1x1x128x128xf32>
    %17 = vector.shape_cast %16 : vector<1x1x128x128xf32> to vector<128x128xf32>
    %cst_28 = arith.constant dense<0.000000e+00> : vector<256x128xf32>
    %18 = tpu.matmul %15, %17, %cst_28 {dimension_numbers = #tpu.dot_dimension_numbers<[1], [0], [0], [1], [0, 0, 1, 1], [], []>} : vector<256x128xf32>, vector<128x128xf32>, vector<256x128xf32> -> vector<256x128xf32>
    %c0_29 = arith.constant 0 : index
    %c0_30 = arith.constant 0 : index
    %19 = vector.load %arg5[%c0_29, %c0_30] : memref<256x128xf32, #tpu.memory_space<vmem>>, vector<256x128xf32>
    %20 = arith.addf %19, %18 : vector<256x128xf32>
    %c0_31 = arith.constant 0 : index
    %c0_32 = arith.constant 0 : index
    %21 = vector.load %arg5[%c0_31, %c0_32] : memref<256x128xf32, #tpu.memory_space<vmem>>, vector<256x128xf32>
    tpu.vector_store %arg5[%c0_31, %c0_32], %20 {strides = array<i32>} : memref<256x128xf32, #tpu.memory_space<vmem>>, vector<256x128xf32>,
    %c0_33 = arith.constant 0 : index
    %c1_34 = arith.constant 1 : index
    %c0_35 = arith.constant 0 : index
    %c0_36 = arith.constant 0 : index
    %22 = vector.load %arg1[%c0_33, %c1_34, %c0_35, %c0_36] : memref<1x18x18x128xf32, #tpu.memory_space<vmem>>, vector<1x16x16x128xf32>
    %23 = vector.shape_cast %22 : vector<1x16x16x128xf32> to vector<256x128xf32>
    %c1_37 = arith.constant 1 : index
    %c0_38 = arith.constant 0 : index
    %c0_39 = arith.constant 0 : index
    %c0_40 = arith.constant 0 : index
    %24 = vector.load %arg2[%c1_37, %c0_38, %c0_39, %c0_40] : memref<3x3x128x128xf32, #tpu.memory_space<vmem>>, vector<1x1x128x128xf32>
    %25 = vector.shape_cast %24 : vector<1x1x128x128xf32> to vector<128x128xf32>
    %cst_41 = arith.constant dense<0.000000e+00> : vector<256x128xf32>
    %26 = tpu.matmul %23, %25, %cst_41 {dimension_numbers = #tpu.dot_dimension_numbers<[1], [0], [0], [1], [0, 0, 1, 1], [], []>} : vector<256x128xf32>, vector<128x128xf32>, vector<256x128xf32> -> vector<256x128xf32>
    %c0_42 = arith.constant 0 : index
    %c0_43 = arith.constant 0 : index
    %27 = vector.load %arg5[%c0_42, %c0_43] : memref<256x128xf32, #tpu.memory_space<vmem>>, vector<256x128xf32>
    %28 = arith.addf %27, %26 : vector<256x128xf32>
    %c0_44 = arith.constant 0 : index
    %c0_45 = arith.constant 0 : index
    %29 = vector.load %arg5[%c0_44, %c0_45] : memref<256x128xf32, #tpu.memory_space<vmem>>, vector<256x128xf32>
    tpu.vector_store %arg5[%c0_44, %c0_45], %28 {strides = array<i32>} : memref<256x128xf32, #tpu.memory_space<vmem>>, vector<256x128xf32>,
    %c0_46 = arith.constant 0 : index
    %c1_47 = arith.constant 1 : index
    %c1_48 = arith.constant 1 : index
    %c0_49 = arith.constant 0 : index
    %30 = vector.load %arg1[%c0_46, %c1_47, %c1_48, %c0_49] : memref<1x18x18x128xf32, #tpu.memory_space<vmem>>, vector<1x16x16x128xf32>
    %31 = vector.shape_cast %30 : vector<1x16x16x128xf32> to vector<256x128xf32>
    %c1_50 = arith.constant 1 : index
    %c1_51 = arith.constant 1 : index
    %c0_52 = arith.constant 0 : index
    %c0_53 = arith.constant 0 : index
    %32 = vector.load %arg2[%c1_50, %c1_51, %c0_52, %c0_53] : memref<3x3x128x128xf32, #tpu.memory_space<vmem>>, vector<1x1x128x128xf32>
    %33 = vector.shape_cast %32 : vector<1x1x128x128xf32> to vector<128x128xf32>
    %cst_54 = arith.constant dense<0.000000e+00> : vector<256x128xf32>
    %34 = tpu.matmul %31, %33, %cst_54 {dimension_numbers = #tpu.dot_dimension_numbers<[1], [0], [0], [1], [0, 0, 1, 1], [], []>} : vector<256x128xf32>, vector<128x128xf32>, vector<256x128xf32> -> vector<256x128xf32>
    %c0_55 = arith.constant 0 : index
    %c0_56 = arith.constant 0 : index
    %35 = vector.load %arg5[%c0_55, %c0_56] : memref<256x128xf32, #tpu.memory_space<vmem>>, vector<256x128xf32>
    %36 = arith.addf %35, %34 : vector<256x128xf32>
    %c0_57 = arith.constant 0 : index
    %c0_58 = arith.constant 0 : index
    %37 = vector.load %arg5[%c0_57, %c0_58] : memref<256x128xf32, #tpu.memory_space<vmem>>, vector<256x128xf32>
    tpu.vector_store %arg5[%c0_57, %c0_58], %36 {strides = array<i32>} : memref<256x128xf32, #tpu.memory_space<vmem>>, vector<256x128xf32>,
    %c0_59 = arith.constant 0 : index
    %c1_60 = arith.constant 1 : index
    %c2_61 = arith.constant 2 : index
    %c0_62 = arith.constant 0 : index
    %38 = vector.load %arg1[%c0_59, %c1_60, %c2_61, %c0_62] : memref<1x18x18x128xf32, #tpu.memory_space<vmem>>, vector<1x16x16x128xf32>
    %39 = vector.shape_cast %38 : vector<1x16x16x128xf32> to vector<256x128xf32>
    %c1_63 = arith.constant 1 : index
    %c2_64 = arith.constant 2 : index
    %c0_65 = arith.constant 0 : index
    %c0_66 = arith.constant 0 : index
    %40 = vector.load %arg2[%c1_63, %c2_64, %c0_65, %c0_66] : memref<3x3x128x128xf32, #tpu.memory_space<vmem>>, vector<1x1x128x128xf32>
    %41 = vector.shape_cast %40 : vector<1x1x128x128xf32> to vector<128x128xf32>
    %cst_67 = arith.constant dense<0.000000e+00> : vector<256x128xf32>
    %42 = tpu.matmul %39, %41, %cst_67 {dimension_numbers = #tpu.dot_dimension_numbers<[1], [0], [0], [1], [0, 0, 1, 1], [], []>} : vector<256x128xf32>, vector<128x128xf32>, vector<256x128xf32> -> vector<256x128xf32>
    %c0_68 = arith.constant 0 : index
    %c0_69 = arith.constant 0 : index
    %43 = vector.load %arg5[%c0_68, %c0_69] : memref<256x128xf32, #tpu.memory_space<vmem>>, vector<256x128xf32>
    %44 = arith.addf %43, %42 : vector<256x128xf32>
    %c0_70 = arith.constant 0 : index
    %c0_71 = arith.constant 0 : index
    %45 = vector.load %arg5[%c0_70, %c0_71] : memref<256x128xf32, #tpu.memory_space<vmem>>, vector<256x128xf32>
    tpu.vector_store %arg5[%c0_70, %c0_71], %44 {strides = array<i32>} : memref<256x128xf32, #tpu.memory_space<vmem>>, vector<256x128xf32>,
    %c0_72 = arith.constant 0 : index
    %c2_73 = arith.constant 2 : index
    %c0_74 = arith.constant 0 : index
    %c0_75 = arith.constant 0 : index
    %46 = vector.load %arg1[%c0_72, %c2_73, %c0_74, %c0_75] : memref<1x18x18x128xf32, #tpu.memory_space<vmem>>, vector<1x16x16x128xf32>
    %47 = vector.shape_cast %46 : vector<1x16x16x128xf32> to vector<256x128xf32>
    %c2_76 = arith.constant 2 : index
    %c0_77 = arith.constant 0 : index
    %c0_78 = arith.constant 0 : index
    %c0_79 = arith.constant 0 : index
    %48 = vector.load %arg2[%c2_76, %c0_77, %c0_78, %c0_79] : memref<3x3x128x128xf32, #tpu.memory_space<vmem>>, vector<1x1x128x128xf32>
    %49 = vector.shape_cast %48 : vector<1x1x128x128xf32> to vector<128x128xf32>
    %cst_80 = arith.constant dense<0.000000e+00> : vector<256x128xf32>
    %50 = tpu.matmul %47, %49, %cst_80 {dimension_numbers = #tpu.dot_dimension_numbers<[1], [0], [0], [1], [0, 0, 1, 1], [], []>} : vector<256x128xf32>, vector<128x128xf32>, vector<256x128xf32> -> vector<256x128xf32>
    %c0_81 = arith.constant 0 : index
    %c0_82 = arith.constant 0 : index
    %51 = vector.load %arg5[%c0_81, %c0_82] : memref<256x128xf32, #tpu.memory_space<vmem>>, vector<256x128xf32>
    %52 = arith.addf %51, %50 : vector<256x128xf32>
    %c0_83 = arith.constant 0 : index
    %c0_84 = arith.constant 0 : index
    %53 = vector.load %arg5[%c0_83, %c0_84] : memref<256x128xf32, #tpu.memory_space<vmem>>, vector<256x128xf32>
    tpu.vector_store %arg5[%c0_83, %c0_84], %52 {strides = array<i32>} : memref<256x128xf32, #tpu.memory_space<vmem>>, vector<256x128xf32>,
    %c0_85 = arith.constant 0 : index
    %c2_86 = arith.constant 2 : index
    %c1_87 = arith.constant 1 : index
    %c0_88 = arith.constant 0 : index
    %54 = vector.load %arg1[%c0_85, %c2_86, %c1_87, %c0_88] : memref<1x18x18x128xf32, #tpu.memory_space<vmem>>, vector<1x16x16x128xf32>
    %55 = vector.shape_cast %54 : vector<1x16x16x128xf32> to vector<256x128xf32>
    %c2_89 = arith.constant 2 : index
    %c1_90 = arith.constant 1 : index
    %c0_91 = arith.constant 0 : index
    %c0_92 = arith.constant 0 : index
    %56 = vector.load %arg2[%c2_89, %c1_90, %c0_91, %c0_92] : memref<3x3x128x128xf32, #tpu.memory_space<vmem>>, vector<1x1x128x128xf32>
    %57 = vector.shape_cast %56 : vector<1x1x128x128xf32> to vector<128x128xf32>
    %cst_93 = arith.constant dense<0.000000e+00> : vector<256x128xf32>
    %58 = tpu.matmul %55, %57, %cst_93 {dimension_numbers = #tpu.dot_dimension_numbers<[1], [0], [0], [1], [0, 0, 1, 1], [], []>} : vector<256x128xf32>, vector<128x128xf32>, vector<256x128xf32> -> vector<256x128xf32>
    %c0_94 = arith.constant 0 : index
    %c0_95 = arith.constant 0 : index
    %59 = vector.load %arg5[%c0_94, %c0_95] : memref<256x128xf32, #tpu.memory_space<vmem>>, vector<256x128xf32>
    %60 = arith.addf %59, %58 : vector<256x128xf32>
    %c0_96 = arith.constant 0 : index
    %c0_97 = arith.constant 0 : index
    %61 = vector.load %arg5[%c0_96, %c0_97] : memref<256x128xf32, #tpu.memory_space<vmem>>, vector<256x128xf32>
    tpu.vector_store %arg5[%c0_96, %c0_97], %60 {strides = array<i32>} : memref<256x128xf32, #tpu.memory_space<vmem>>, vector<256x128xf32>,
    %c0_98 = arith.constant 0 : index
    %c2_99 = arith.constant 2 : index
    %c2_100 = arith.constant 2 : index
    %c0_101 = arith.constant 0 : index
    %62 = vector.load %arg1[%c0_98, %c2_99, %c2_100, %c0_101] : memref<1x18x18x128xf32, #tpu.memory_space<vmem>>, vector<1x16x16x128xf32>
    %63 = vector.shape_cast %62 : vector<1x16x16x128xf32> to vector<256x128xf32>
    %c2_102 = arith.constant 2 : index
    %c2_103 = arith.constant 2 : index
    %c0_104 = arith.constant 0 : index
    %c0_105 = arith.constant 0 : index
    %64 = vector.load %arg2[%c2_102, %c2_103, %c0_104, %c0_105] : memref<3x3x128x128xf32, #tpu.memory_space<vmem>>, vector<1x1x128x128xf32>
    %65 = vector.shape_cast %64 : vector<1x1x128x128xf32> to vector<128x128xf32>
    %cst_106 = arith.constant dense<0.000000e+00> : vector<256x128xf32>
    %66 = tpu.matmul %63, %65, %cst_106 {dimension_numbers = #tpu.dot_dimension_numbers<[1], [0], [0], [1], [0, 0, 1, 1], [], []>} : vector<256x128xf32>, vector<128x128xf32>, vector<256x128xf32> -> vector<256x128xf32>
    %c0_107 = arith.constant 0 : index
    %c0_108 = arith.constant 0 : index
    %67 = vector.load %arg5[%c0_107, %c0_108] : memref<256x128xf32, #tpu.memory_space<vmem>>, vector<256x128xf32>
    %68 = arith.addf %67, %66 : vector<256x128xf32>
    %c0_109 = arith.constant 0 : index
    %c0_110 = arith.constant 0 : index
    %69 = vector.load %arg5[%c0_109, %c0_110] : memref<256x128xf32, #tpu.memory_space<vmem>>, vector<256x128xf32>
    tpu.vector_store %arg5[%c0_109, %c0_110], %68 {strides = array<i32>} : memref<256x128xf32, #tpu.memory_space<vmem>>, vector<256x128xf32>,
    %c0_111 = arith.constant 0 : index
    %c1_112 = arith.constant 1 : index
    %c1_113 = arith.constant 1 : index
    %c0_114 = arith.constant 0 : index
    %70 = vector.load %arg1[%c0_111, %c1_112, %c1_113, %c0_114] : memref<1x18x18x128xf32, #tpu.memory_space<vmem>>, vector<1x16x16x128xf32>
    %71 = vector.shape_cast %70 : vector<1x16x16x128xf32> to vector<256x128xf32>
    %c0_115 = arith.constant 0 : index
    %c0_116 = arith.constant 0 : index
    %72 = vector.load %arg5[%c0_115, %c0_116] : memref<256x128xf32, #tpu.memory_space<vmem>>, vector<256x128xf32>
    %c0_117 = arith.constant 0 : index
    %c0_118 = arith.constant 0 : index
    %73 = vector.load %arg3[%c0_117, %c0_118] : memref<1x128xf32, #tpu.memory_space<vmem>>, vector<1x128xf32>
    %74 = vector.broadcast %73 : vector<1x128xf32> to vector<256x128xf32>
    %75 = arith.mulf %72, %74 : vector<256x128xf32>
    %76 = arith.addf %71, %75 : vector<256x128xf32>
    %c0_119 = arith.constant 0 : index
    %c0_120 = arith.constant 0 : index
    %77 = vector.load %arg4[%c0_119, %c0_120] : memref<1x128xf32, #tpu.memory_space<vmem>>, vector<1x128xf32>
    %78 = vector.broadcast %77 : vector<1x128xf32> to vector<256x128xf32>
    %79 = arith.addf %76, %78 : vector<256x128xf32>
    %cst_121 = arith.constant 0.000000e+00 : f32
    %80 = vector.broadcast %cst_121 : f32 to vector<256x128xf32>
    %81 = arith.maximumf %79, %80 : vector<256x128xf32>
    %c0_122 = arith.constant 0 : index
    %c0_123 = arith.constant 0 : index
    %82 = vector.load %arg5[%c0_122, %c0_123] : memref<256x128xf32, #tpu.memory_space<vmem>>, vector<256x128xf32>
    tpu.vector_store %arg5[%c0_122, %c0_123], %81 {strides = array<i32>} : memref<256x128xf32, #tpu.memory_space<vmem>>, vector<256x128xf32>,
    return
  }
  func.func @transform_0(%arg0: i32) -> (i32, i32, i32, i32) {
    %c0_i32 = arith.constant 0 : i32
    %c0_i32_0 = arith.constant 0 : i32
    %c0_i32_1 = arith.constant 0 : i32
    %c0_i32_2 = arith.constant 0 : i32
    return %arg0, %c0_i32, %c0_i32_0, %c0_i32_1 : i32, i32, i32, i32
  }
  func.func @transform_1(%arg0: i32) -> (i32, i32, i32, i32) {
    %c0_i32 = arith.constant 0 : i32
    %c0_i32_0 = arith.constant 0 : i32
    %c0_i32_1 = arith.constant 0 : i32
    %c0_i32_2 = arith.constant 0 : i32
    %c0_i32_3 = arith.constant 0 : i32
    return %c0_i32, %c0_i32_0, %c0_i32_1, %c0_i32_2 : i32, i32, i32, i32
  }
  func.func @transform_2(%arg0: i32) -> (i32, i32) {
    %c0_i32 = arith.constant 0 : i32
    %c0_i32_0 = arith.constant 0 : i32
    %c0_i32_1 = arith.constant 0 : i32
    return %c0_i32, %c0_i32_0 : i32, i32
  }
  func.func @transform_3(%arg0: i32) -> (i32, i32) {
    %c0_i32 = arith.constant 0 : i32
    %c0_i32_0 = arith.constant 0 : i32
    %c0_i32_1 = arith.constant 0 : i32
    return %c0_i32, %c0_i32_0 : i32, i32
  }
  func.func @transform_4(%arg0: i32) -> (i32, i32) {
    %c0_i32 = arith.constant 0 : i32
    %c0_i32_0 = arith.constant 0 : i32
    return %arg0, %c0_i32 : i32, i32
  }
}

</mosaic_0001>

<llo_original>
// kernel: tpu_custom_call.1
$region0: #{tpu_custom_call.1}
  #allocation0 [shape = 'u32[]', space=smem, size = 0x4, offset = 0x4, fixed_abs, tag = 'smem constant byte address 0x4 - core index']
  #allocation1 [shape = 'u32[144,128]{1,0:T(1,128)}', space=vmem, size = 0x12000, scoped, tag = 'internal scratch']
  %s0 = inlined_call_operand.vmem [shape: f32[2,18,18,128], index: 0, kind: input, shape index: {}]
  %s1 = inlined_call_operand.vmem [shape: f32[3,3,128,128], index: 1, kind: input, shape index: {}]
  %s2 = inlined_call_operand.vmem [shape: f32[1,128], index: 2, kind: input, shape index: {}]
  %s3 = inlined_call_operand.vmem [shape: f32[1,128], index: 3, kind: input, shape index: {}]
  %s4 = inlined_call_operand.hbm [shape: f32[512,128], index: 4, kind: output, shape index: {}]
  %s5 = sld [smem:[#allocation0]]
  $region49: #{tpu_custom_call.1} parent=0
    _
  %s7 = ssub.s32 1, %s5
  %s8 = scalar_select 0, %s7, %s5
  $region1: #{tpu_custom_call.1} parent=0
    #allocation2 [shape = 'u8[262144]{0}', space=vmem, size = 0x40000, scoped, tag = 'output window, operand 0']
    #allocation3 [shape = 's32[2]{0}', space=sflag, size = 0x8, scoped, tag = 'scoped memory for tpu_custom_call.1']
    %9 = vsyncpa [#allocation3], 0
    %s10 = scalar_lea.sflag [#allocation3], 1
    %11 = vsyncpa %s10, 0
    loop: start=0, step=1, limit=4
    $region2: #{tpu_custom_call.1} parent=1 // loop_pre_header
      _
    $region3: #{tpu_custom_call.1} parent=1 // loop_header
      %s13 = sphi 0, %s17
      %p14 = scmp.ge.s32.totalorder %s13, 4
      %s23 = sphi 0, %s25
      %s26 = sphi 0, %s23
      %s27 = sphi 0, %s26
      %s43 = sphi 0, %s27
      %s47 = sphi 0, %s47
      %s49 = sphi 0, %s47
      %s50 = sphi 0, %s49
      %s64 = sphi 0, %s50
      %s68 = sphi 0, %s68
      %s70 = sphi 0, %s68
      %s71 = sphi 0, %s70
      %s85 = sphi 0, %s71
      %s89 = sphi 0, %s89
      %s91 = sphi 0, %s89
      %s92 = sphi 0, %s91
      %s106 = sphi 0, %s92
      %s112 = sphi 0, %s114
      %s115 = sphi 0, %s112
      %s116 = sphi 0, %s115
      %s132 = sphi 0, %s116
    $region4: #{tpu_custom_call.1} parent=1 // loop_header_branch
      %16 = sbr.rel (%p14) target = $region8
    $region5: #{tpu_custom_call.1} parent=1 // loop_body
      %s18 = ssub.s32 %s13, 1
      %s19 = ssub.s32 %s13, 2
      %s20 = sadd.s32 %s13, 1
      %s21 = ssub.s32 %s13, %s20
      %p22 = scmp.eq.s32.totalorder %s21, 0
      %s24 = sadd.s32 %s23, 1
      %s25 = scalar_select %p22, %s23, %s24
      %p28 = pneg %p22
      %p29 = scmp.eq.s32.totalorder %s13, 1
      %p30 = por %p28, %p29
      %p31 = scmp.ne.s32.totalorder %s23, %s26
      %p32 = scmp.eq.s32.totalorder %s13, 0
      %p33 = por %p31, %p32
      %p34 = scmp.ne.s32.totalorder %s23, %s26
      %p35 = scmp.eq.s32.totalorder %s18, 1
      %p36 = por %p34, %p35
      %p37 = scmp.ne.s32.totalorder %s26, %s27
      %p38 = scmp.eq.s32.totalorder %s18, 0
      %p39 = por %p37, %p38
      %p40 = scmp.ne.s32.totalorder %s26, %s27
      %p41 = scmp.eq.s32.totalorder %s19, 1
      %p42 = por %p40, %p41
      %p44 = scmp.ne.s32.totalorder %s27, %s43
      %p45 = scmp.eq.s32.totalorder %s19, 0
      %p46 = por %p44, %p45
      %s48 = sadd.s32 %s47, 1
      %p51 = scmp.eq.s32.totalorder %s13, 1
      %p52 = scmp.ne.s32.totalorder %s47, %s49
      %p53 = scmp.eq.s32.totalorder %s13, 0
      %p54 = por %p52, %p53
      %p55 = scmp.ne.s32.totalorder %s47, %s49
      %p56 = scmp.eq.s32.totalorder %s18, 1
      %p57 = por %p55, %p56
      %p58 = scmp.ne.s32.totalorder %s49, %s50
      %p59 = scmp.eq.s32.totalorder %s18, 0
      %p60 = por %p58, %p59
      %p61 = scmp.ne.s32.totalorder %s49, %s50
      %p62 = scmp.eq.s32.totalorder %s19, 1
      %p63 = por %p61, %p62
      %p65 = scmp.ne.s32.totalorder %s50, %s64
      %p66 = scmp.eq.s32.totalorder %s19, 0
      %p67 = por %p65, %p66
      %s69 = sadd.s32 %s68, 1
      %p72 = scmp.eq.s32.totalorder %s13, 1
      %p73 = scmp.ne.s32.totalorder %s68, %s70
      %p74 = scmp.eq.s32.totalorder %s13, 0
      %p75 = por %p73, %p74
      %p76 = scmp.ne.s32.totalorder %s68, %s70
      %p77 = scmp.eq.s32.totalorder %s18, 1
      %p78 = por %p76, %p77
      %p79 = scmp.ne.s32.totalorder %s70, %s71
      %p80 = scmp.eq.s32.totalorder %s18, 0
      %p81 = por %p79, %p80
      %p82 = scmp.ne.s32.totalorder %s70, %s71
      %p83 = scmp.eq.s32.totalorder %s19, 1
      %p84 = por %p82, %p83
      %p86 = scmp.ne.s32.totalorder %s71, %s85
      %p87 = scmp.eq.s32.totalorder %s19, 0
      %p88 = por %p86, %p87
      %s90 = sadd.s32 %s89, 1
      %p93 = scmp.eq.s32.totalorder %s13, 1
      %p94 = scmp.ne.s32.totalorder %s89, %s91
      %p95 = scmp.eq.s32.totalorder %s13, 0
      %p96 = por %p94, %p95
      %p97 = scmp.ne.s32.totalorder %s89, %s91
      %p98 = scmp.eq.s32.totalorder %s18, 1
      %p99 = por %p97, %p98
      %p100 = scmp.ne.s32.totalorder %s91, %s92
      %p101 = scmp.eq.s32.totalorder %s18, 0
      %p102 = por %p100, %p101
      %p103 = scmp.ne.s32.totalorder %s91, %s92
      %p104 = scmp.eq.s32.totalorder %s19, 1
      %p105 = por %p103, %p104
      %p107 = scmp.ne.s32.totalorder %s92, %s106
      %p108 = scmp.eq.s32.totalorder %s19, 0
      %p109 = por %p107, %p108
      %s110 = ssub.s32 %s13, %s20
      %p111 = scmp.eq.s32.totalorder %s110, 0
      %s113 = sadd.s32 %s112, 1
      %s114 = scalar_select %p111, %s112, %s113
      %p117 = pneg %p111
      %p118 = scmp.eq.s32.totalorder %s13, 1
      %p119 = por %p117, %p118
      %p120 = scmp.ne.s32.totalorder %s112, %s115
      %p121 = scmp.eq.s32.totalorder %s13, 0
      %p122 = por %p120, %p121
      %p123 = scmp.ne.s32.totalorder %s112, %s115
      %p124 = scmp.eq.s32.totalorder %s18, 1
      %p125 = por %p123, %p124
      %p126 = scmp.ne.s32.totalorder %s115, %s116
      %p127 = scmp.eq.s32.totalorder %s18, 0
      %p128 = por %p126, %p127
      %p129 = scmp.ne.s32.totalorder %s115, %s116
      %p130 = scmp.eq.s32.totalorder %s19, 1
      %p131 = por %p129, %p130
      %p133 = scmp.ne.s32.totalorder %s116, %s132
      %p134 = scmp.eq.s32.totalorder %s19, 0
      %p135 = por %p133, %p134
      %p136 = scmp.le.s32.totalorder 1, %s13
      %p137 = scmp.lt.s32.totalorder %s13, 3
      %p138 = pnand %p136, %p137
      %p139 = pneg %p138
      // Predicated region
      $region9: #{tpu_custom_call.1} parent=5 // pred_check
        _
      $region10: #{tpu_custom_call.1} parent=5 // pred_check_branch
        %141 = sbr.rel (%p138) target = $region12
      $region11: #{tpu_custom_call.1} parent=5 // pred_region
        %s142 = ssub.s32 %s13, 1
        // Predicated region
        $region13: #{tpu_custom_call.1} parent=11 // pred_check
          %p143 = pneg %p60
        $region14: #{tpu_custom_call.1} parent=11 // pred_check_branch
          %145 = sbr.rel (%p143) target = $region16
        $region15: #{tpu_custom_call.1} parent=11 // pred_region
          _
        $region16: #{tpu_custom_call.1} parent=11 // pred_fallthru
          _
        // Predicated region
        $region17: #{tpu_custom_call.1} parent=11 // pred_check
          %p146 = pneg %p81
        $region18: #{tpu_custom_call.1} parent=11 // pred_check_branch
          %148 = sbr.rel (%p146) target = $region20
        $region19: #{tpu_custom_call.1} parent=11 // pred_region
          _
        $region20: #{tpu_custom_call.1} parent=11 // pred_fallthru
          _
        // Predicated region
        $region21: #{tpu_custom_call.1} parent=11 // pred_check
          %p149 = pneg %p102
        $region22: #{tpu_custom_call.1} parent=11 // pred_check_branch
          %151 = sbr.rel (%p149) target = $region24
        $region23: #{tpu_custom_call.1} parent=11 // pred_region
          _
        $region24: #{tpu_custom_call.1} parent=11 // pred_fallthru
          _
      $region12: #{tpu_custom_call.1} parent=5 // pred_fallthru
        _
      %p152 = scmp.lt.s32.totalorder %s13, 2
      // Predicated region
      $region25: #{tpu_custom_call.1} parent=5 // pred_check
        %p153 = pneg %p152
      $region26: #{tpu_custom_call.1} parent=5 // pred_check_branch
        %155 = sbr.rel (%p153) target = $region28
      $region27: #{tpu_custom_call.1} parent=5 // pred_region
        // Predicated region
        $region29: #{tpu_custom_call.1} parent=27 // pred_check
          %p156 = pneg %p33
        $region30: #{tpu_custom_call.1} parent=27 // pred_check_branch
          %158 = sbr.rel (%p156) target = $region32
        $region31: #{tpu_custom_call.1} parent=27 // pred_region
          %p159 = scmp.lt.s32.totalorder %s13, 1
          %s160 = scalar_select %p159, %s13, 1
          %s161 = smul.addr %s160, 54
          %s162 = smul.addr %s161, 8
          %s163 = scalar_lea.vmem %s0, %s162
        $region32: #{tpu_custom_call.1} parent=27 // pred_fallthru
          _
      $region28: #{tpu_custom_call.1} parent=5 // pred_fallthru
        _
      %p164 = scmp.le.s32.totalorder 1, %s13
      %p165 = scmp.lt.s32.totalorder %s13, 3
      %p166 = pnand %p164, %p165
      %p167 = pneg %p166
      // Predicated region
      $region33: #{tpu_custom_call.1} parent=5 // pred_check
        _
      $region34: #{tpu_custom_call.1} parent=5 // pred_check_branch
        %169 = sbr.rel (%p166) target = $region36
      $region35: #{tpu_custom_call.1} parent=5 // pred_region
        %s170 = ssub.s32 %s13, 1
        %p171 = scmp.lt.s32.totalorder %s18, 1
        %s172 = scalar_select %p171, %s18, 1
        %s173 = smul.addr %s172, 54
        %s174 = smul.addr %s173, 8
        %s175 = scalar_lea.vmem %s0, %s174
        %p176 = pneg %p39
        %p177 = pneg %p36
        %p178 = pneg %p60
        %p179 = pneg %p57
        %p180 = pneg %p81
        %p181 = pneg %p78
        %p182 = pneg %p102
        %p183 = pneg %p99
        %p184 = pneg %p128
        %p185 = pneg %p125
        %s186 = sand.u32 %s115, 1
        %s187 = scalar_lea.sflag [#allocation3], %s186
        %s188 = sand.u32 %s115, 1
        %s189 = smul.addr %s188, 256
        %s190 = scalar_lea.vmem [#allocation2], %s189
        %p191 = scmp.lt.s32.totalorder %s18, 1
        %s192 = scalar_select %p191, %s18, 1
        %s193 = smul.addr %s192, 54
        %s194 = smul.addr %s193, 8
        %s195 = scalar_lea.vmem %s0, %s194
        %s196 = smul.u32 32, %s18
        %v197 = vld [vmem:[%s195] sm:$0xff]
        %v198 = vld [vmem:[%s195 + $0x8] sm:$0xff]
        %v199 = vld [vmem:[%s195 + $0x18] sm:$0xff]
        %v200 = vld [vmem:[%s195 + $0x20] sm:$0xff]
        %v201 = vld [vmem:[%s195 + $0x30] sm:$0xff]
        %v202 = vld [vmem:[%s195 + $0x38] sm:$0xff]
        %v203 = vld [vmem:[%s195 + $0x48] sm:$0xff]
        %v204 = vld [vmem:[%s195 + $0x50] sm:$0xff]
        %v205 = vld [vmem:[%s195 + $0x60] sm:$0xff]
        %v206 = vld [vmem:[%s195 + $0x68] sm:$0xff]
        %v207 = vld [vmem:[%s195 + $0x78] sm:$0xff]
        %v208 = vld [vmem:[%s195 + $0x80] sm:$0xff]
        %v209 = vld [vmem:[%s195 + $0x90] sm:$0xff]
        %v210 = vld [vmem:[%s195 + $0x98] sm:$0xff]
        %v211 = vld [vmem:[%s195 + $0xa8] sm:$0xff]
        %v212 = vld [vmem:[%s195 + $0xb0] sm:$0xff]
        %v213 = vld [vmem:[%s195 + $0xc0] sm:$0xff]
        %v214 = vld [vmem:[%s195 + $0xc8] sm:$0xff]
        %v215 = vld [vmem:[%s195 + $0xd8] sm:$0xff]
        %v216 = vld [vmem:[%s195 + $0xe0] sm:$0xff]
        %v217 = vld [vmem:[%s195 + $0xf0] sm:$0xff]
        %v218 = vld [vmem:[%s195 + $0xf8] sm:$0xff]
        %v219 = vld [vmem:[%s195 + $0x108] sm:$0xff]
        %v220 = vld [vmem:[%s195 + $0x110] sm:$0xff]
        %v221 = vld [vmem:[%s195 + $0x120] sm:$0xff]
        %v222 = vld [vmem:[%s195 + $0x128] sm:$0xff]
        %v223 = vld [vmem:[%s195 + $0x138] sm:$0xff]
        %v224 = vld [vmem:[%s195 + $0x140] sm:$0xff]
        %v225 = vld [vmem:[%s195 + $0x150] sm:$0xff]
        %v226 = vld [vmem:[%s195 + $0x158] sm:$0xff]
        %v227 = vld [vmem:[%s195 + $0x168] sm:$0xff]
        %v228 = vld [vmem:[%s195 + $0x170] sm:$0xff]
        %v229 = vld [vmem:[%s1] sm:$0xff]
        %v230 = vld [vmem:[%s1 + $0x8] sm:$0xff]
        %v231 = vld [vmem:[%s1 + $0x10] sm:$0xff]
        %v232 = vld [vmem:[%s1 + $0x18] sm:$0xff]
        %v233 = vld [vmem:[%s1 + $0x20] sm:$0xff]
        %v234 = vld [vmem:[%s1 + $0x28] sm:$0xff]
        %v235 = vld [vmem:[%s1 + $0x30] sm:$0xff]
        %v236 = vld [vmem:[%s1 + $0x38] sm:$0xff]
        %v237 = vld [vmem:[%s1 + $0x40] sm:$0xff]
        %v238 = vld [vmem:[%s1 + $0x48] sm:$0xff]
        %v239 = vld [vmem:[%s1 + $0x50] sm:$0xff]
        %v240 = vld [vmem:[%s1 + $0x58] sm:$0xff]
        %v241 = vld [vmem:[%s1 + $0x60] sm:$0xff]
        %v242 = vld [vmem:[%s1 + $0x68] sm:$0xff]
        %v243 = vld [vmem:[%s1 + $0x70] sm:$0xff]
        %v244 = vld [vmem:[%s1 + $0x78] sm:$0xff]
        %245 = vmatprep.subr.mxu0 0.0
        %246 = vmatpush1.msra.mxu0 %v244
        %247 = vmatprep.subr.mxu0 0.0
        %248 = vmatpush1.msra.mxu0 %v243
        %249 = vmatprep.subr.mxu0 0.0
        %250 = vmatpush1.msra.mxu0 %v242
        %251 = vmatprep.subr.mxu0 0.0
        %252 = vmatpush1.msra.mxu0 %v241
        %253 = vmatprep.subr.mxu0 0.0
        %254 = vmatpush1.msra.mxu0 %v240
        %255 = vmatprep.subr.mxu0 0.0
        %256 = vmatpush1.msra.mxu0 %v239
        %257 = vmatprep.subr.mxu0 0.0
        %258 = vmatpush1.msra.mxu0 %v238
        %259 = vmatprep.subr.mxu0 0.0
        %260 = vmatpush1.msra.mxu0 %v237
        %261 = vmatprep.subr.mxu0 0.0
        %262 = vmatpush1.msra.mxu0 %v236
        %263 = vmatprep.subr.mxu0 0.0
        %264 = vmatpush1.msra.mxu0 %v235
        %265 = vmatprep.subr.mxu0 0.0
        %266 = vmatpush1.msra.mxu0 %v234
        %267 = vmatprep.subr.mxu0 0.0
        %268 = vmatpush1.msra.mxu0 %v233
        %269 = vmatprep.subr.mxu0 0.0
        %270 = vmatpush1.msra.mxu0 %v232
        %271 = vmatprep.subr.mxu0 0.0
        %272 = vmatpush1.msra.mxu0 %v231
        %273 = vmatprep.subr.mxu0 0.0
        %274 = vmatpush1.msra.mxu0 %v230
        %275 = vmatprep.subr.mxu0 0.0
        %276 = vmatpush1.msra.mxu0 %v229
        %277 = vmatprep.subr.mxu0 0.0
        %278 = vmatpush2.msra.mxu0 0.0
        %279 = vmatprep.subr.mxu0 0.0
        %280 = vmatpush2.msra.mxu0 0.0
        %281 = vmatprep.subr.mxu0 0.0
        %282 = vmatpush2.msra.mxu0 0.0
        %283 = vmatprep.subr.mxu0 0.0
        %284 = vmatpush2.msra.mxu0 0.0
        %285 = vmatprep.subr.mxu0 0.0
        %286 = vmatpush2.msra.mxu0 0.0
        %287 = vmatprep.subr.mxu0 0.0
        %288 = vmatpush2.msra.mxu0 0.0
        %289 = vmatprep.subr.mxu0 0.0
        %290 = vmatpush2.msra.mxu0 0.0
        %291 = vmatprep.subr.mxu0 0.0
        %292 = vmatpush2.msra.mxu0 0.0
        %293 = vmatprep.subr.mxu0 0.0
        %294 = vmatpush2.msra.mxu0 0.0
        %295 = vmatprep.subr.mxu0 0.0
        %296 = vmatpush2.msra.mxu0 0.0
        %297 = vmatprep.subr.mxu0 0.0
        %298 = vmatpush2.msra.mxu0 0.0
        %299 = vmatprep.subr.mxu0 0.0
        %300 = vmatpush2.msra.mxu0 0.0
        %301 = vmatprep.subr.mxu0 0.0
        %302 = vmatpush2.msra.mxu0 0.0
        %303 = vmatprep.subr.mxu0 0.0
        %304 = vmatpush2.msra.mxu0 0.0
        %305 = vmatprep.subr.mxu0 0.0
        %306 = vmatpush2.msra.mxu0 0.0
        %307 = vmatprep.subr.mxu0 0.0
        %308 = vmatpush2.msra.mxu0 0.0
        %309 = vmatprep.mubr.f32.mxu0 0.0
        %310 = vmatmul.mubr.f32.gmra.mxu0 %v197
        %v311 = vpop.f32.mrf.mxu0
        %v312 = vadd.f32 0.0, %v311
        %v313 = vpop.f32.mrf.mxu0
        %314 = vmatprep.mubr.f32.mxu0 0.0
        %315 = vmatmul.mubr.f32.gmra.mxu0 %v198
        %v316 = vpop.f32.mrf.mxu0
        %v317 = vadd.f32 0.0, %v316
        %v318 = vpop.f32.mrf.mxu0
        %319 = vmatprep.mubr.f32.mxu0 0.0
        %320 = vmatmul.mubr.f32.gmra.mxu0 %v199
        %v321 = vpop.f32.mrf.mxu0
        %v322 = vadd.f32 0.0, %v321
        %v323 = vpop.f32.mrf.mxu0
        %324 = vmatprep.mubr.f32.mxu0 0.0
        %325 = vmatmul.mubr.f32.gmra.mxu0 %v200
        %v326 = vpop.f32.mrf.mxu0
        %v327 = vadd.f32 0.0, %v326
        %v328 = vpop.f32.mrf.mxu0
        %329 = vmatprep.mubr.f32.mxu0 0.0
        %330 = vmatmul.mubr.f32.gmra.mxu0 %v201
        %v331 = vpop.f32.mrf.mxu0
        %v332 = vadd.f32 0.0, %v331
        %v333 = vpop.f32.mrf.mxu0
        %334 = vmatprep.mubr.f32.mxu0 0.0
        %335 = vmatmul.mubr.f32.gmra.mxu0 %v202
        %v336 = vpop.f32.mrf.mxu0
        %v337 = vadd.f32 0.0, %v336
        %v338 = vpop.f32.mrf.mxu0
        %339 = vmatprep.mubr.f32.mxu0 0.0
        %340 = vmatmul.mubr.f32.gmra.mxu0 %v203
        %v341 = vpop.f32.mrf.mxu0
        %v342 = vadd.f32 0.0, %v341
        %v343 = vpop.f32.mrf.mxu0
        %344 = vmatprep.mubr.f32.mxu0 0.0
        %345 = vmatmul.mubr.f32.gmra.mxu0 %v204
        %v346 = vpop.f32.mrf.mxu0
        %v347 = vadd.f32 0.0, %v346
        %v348 = vpop.f32.mrf.mxu0
        %349 = vmatprep.mubr.f32.mxu0 0.0
        %350 = vmatmul.mubr.f32.gmra.mxu0 %v205
        %v351 = vpop.f32.mrf.mxu0
        %v352 = vadd.f32 0.0, %v351
        %v353 = vpop.f32.mrf.mxu0
        %354 = vmatprep.mubr.f32.mxu0 0.0
        %355 = vmatmul.mubr.f32.gmra.mxu0 %v206
        %v356 = vpop.f32.mrf.mxu0
        %v357 = vadd.f32 0.0, %v356
        %v358 = vpop.f32.mrf.mxu0
        %359 = vmatprep.mubr.f32.mxu0 0.0
        %360 = vmatmul.mubr.f32.gmra.mxu0 %v207
        %v361 = vpop.f32.mrf.mxu0
        %v362 = vadd.f32 0.0, %v361
        %v363 = vpop.f32.mrf.mxu0
        %364 = vmatprep.mubr.f32.mxu0 0.0
        %365 = vmatmul.mubr.f32.gmra.mxu0 %v208
        %v366 = vpop.f32.mrf.mxu0
        %v367 = vadd.f32 0.0, %v366
        %v368 = vpop.f32.mrf.mxu0
        %369 = vmatprep.mubr.f32.mxu0 0.0
        %370 = vmatmul.mubr.f32.gmra.mxu0 %v209
        %v371 = vpop.f32.mrf.mxu0
        %v372 = vadd.f32 0.0, %v371
        %v373 = vpop.f32.mrf.mxu0
        %374 = vmatprep.mubr.f32.mxu0 0.0
        %375 = vmatmul.mubr.f32.gmra.mxu0 %v210
        %v376 = vpop.f32.mrf.mxu0
        %v377 = vadd.f32 0.0, %v376
        %v378 = vpop.f32.mrf.mxu0
        %379 = vmatprep.mubr.f32.mxu0 0.0
        %380 = vmatmul.mubr.f32.gmra.mxu0 %v211
        %v381 = vpop.f32.mrf.mxu0
        %v382 = vadd.f32 0.0, %v381
        %v383 = vpop.f32.mrf.mxu0
        %384 = vmatprep.mubr.f32.mxu0 0.0
        %385 = vmatmul.mubr.f32.gmra.mxu0 %v212
        %v386 = vpop.f32.mrf.mxu0
        %v387 = vadd.f32 0.0, %v386
        %v388 = vpop.f32.mrf.mxu0
        %389 = vmatprep.mubr.f32.mxu0 0.0
        %390 = vmatmul.mubr.f32.gmra.mxu0 %v213
        %v391 = vpop.f32.mrf.mxu0
        %v392 = vadd.f32 0.0, %v391
        %v393 = vpop.f32.mrf.mxu0
        %394 = vmatprep.mubr.f32.mxu0 0.0
        %395 = vmatmul.mubr.f32.gmra.mxu0 %v214
        %v396 = vpop.f32.mrf.mxu0
        %v397 = vadd.f32 0.0, %v396
        %v398 = vpop.f32.mrf.mxu0
        %399 = vmatprep.mubr.f32.mxu0 0.0
        %400 = vmatmul.mubr.f32.gmra.mxu0 %v215
        %v401 = vpop.f32.mrf.mxu0
        %v402 = vadd.f32 0.0, %v401
        %v403 = vpop.f32.mrf.mxu0
        %404 = vmatprep.mubr.f32.mxu0 0.0
        %405 = vmatmul.mubr.f32.gmra.mxu0 %v216
        %v406 = vpop.f32.mrf.mxu0
        %v407 = vadd.f32 0.0, %v406
        %v408 = vpop.f32.mrf.mxu0
        %409 = vmatprep.mubr.f32.mxu0 0.0
        %410 = vmatmul.mubr.f32.gmra.mxu0 %v217
        %v411 = vpop.f32.mrf.mxu0
        %v412 = vadd.f32 0.0, %v411
        %v413 = vpop.f32.mrf.mxu0
        %414 = vmatprep.mubr.f32.mxu0 0.0
        %415 = vmatmul.mubr.f32.gmra.mxu0 %v218
        %v416 = vpop.f32.mrf.mxu0
        %v417 = vadd.f32 0.0, %v416
        %v418 = vpop.f32.mrf.mxu0
        %419 = vmatprep.mubr.f32.mxu0 0.0
        %420 = vmatmul.mubr.f32.gmra.mxu0 %v219
        %v421 = vpop.f32.mrf.mxu0
        %v422 = vadd.f32 0.0, %v421
        %v423 = vpop.f32.mrf.mxu0
        %424 = vmatprep.mubr.f32.mxu0 0.0
        %425 = vmatmul.mubr.f32.gmra.mxu0 %v220
        %v426 = vpop.f32.mrf.mxu0
        %v427 = vadd.f32 0.0, %v426
        %v428 = vpop.f32.mrf.mxu0
        %429 = vmatprep.mubr.f32.mxu0 0.0
        %430 = vmatmul.mubr.f32.gmra.mxu0 %v221
        %v431 = vpop.f32.mrf.mxu0
        %v432 = vadd.f32 0.0, %v431
        %v433 = vpop.f32.mrf.mxu0
        %434 = vmatprep.mubr.f32.mxu0 0.0
        %435 = vmatmul.mubr.f32.gmra.mxu0 %v222
        %v436 = vpop.f32.mrf.mxu0
        %v437 = vadd.f32 0.0, %v436
        %v438 = vpop.f32.mrf.mxu0
        %439 = vmatprep.mubr.f32.mxu0 0.0
        %440 = vmatmul.mubr.f32.gmra.mxu0 %v223
        %v441 = vpop.f32.mrf.mxu0
        %v442 = vadd.f32 0.0, %v441
        %v443 = vpop.f32.mrf.mxu0
        %444 = vmatprep.mubr.f32.mxu0 0.0
        %445 = vmatmul.mubr.f32.gmra.mxu0 %v224
        %v446 = vpop.f32.mrf.mxu0
        %v447 = vadd.f32 0.0, %v446
        %v448 = vpop.f32.mrf.mxu0
        %449 = vmatprep.mubr.f32.mxu0 0.0
        %450 = vmatmul.mubr.f32.gmra.mxu0 %v225
        %v451 = vpop.f32.mrf.mxu0
        %v452 = vadd.f32 0.0, %v451
        %v453 = vpop.f32.mrf.mxu0
        %454 = vmatprep.mubr.f32.mxu0 0.0
        %455 = vmatmul.mubr.f32.gmra.mxu0 %v226
        %v456 = vpop.f32.mrf.mxu0
        %v457 = vadd.f32 0.0, %v456
        %v458 = vpop.f32.mrf.mxu0
        %459 = vmatprep.mubr.f32.mxu0 0.0
        %460 = vmatmul.mubr.f32.gmra.mxu0 %v227
        %v461 = vpop.f32.mrf.mxu0
        %v462 = vadd.f32 0.0, %v461
        %v463 = vpop.f32.mrf.mxu0
        %464 = vmatprep.mubr.f32.mxu0 0.0
        %465 = vmatmul.mubr.f32.gmra.mxu0 %v228
        %v466 = vpop.f32.mrf.mxu0
        %v467 = vadd.f32 0.0, %v466
        %v468 = vpop.f32.mrf.mxu0
        %469 = vdwg.mxu0
        %470 = vst [vmem:[%s190] sm:$0xff] %v312
        %471 = vst [vmem:[%s190 + $0x8] sm:$0xff] %v317
        %472 = vst [vmem:[%s190 + $0x10] sm:$0xff] %v322
        %473 = vst [vmem:[%s190 + $0x18] sm:$0xff] %v327
        %474 = vst [vmem:[%s190 + $0x20] sm:$0xff] %v332
        %475 = vst [vmem:[%s190 + $0x28] sm:$0xff] %v337
        %476 = vst [vmem:[%s190 + $0x30] sm:$0xff] %v342
        %477 = vst [vmem:[%s190 + $0x38] sm:$0xff] %v347
        %478 = vst [vmem:[%s190 + $0x40] sm:$0xff] %v352
        %479 = vst [vmem:[%s190 + $0x48] sm:$0xff] %v357
        %480 = vst [vmem:[%s190 + $0x50] sm:$0xff] %v362
        %481 = vst [vmem:[%s190 + $0x58] sm:$0xff] %v367
        %482 = vst [vmem:[%s190 + $0x60] sm:$0xff] %v372
        %483 = vst [vmem:[%s190 + $0x68] sm:$0xff] %v377
        %484 = vst [vmem:[%s190 + $0x70] sm:$0xff] %v382
        %485 = vst [vmem:[%s190 + $0x78] sm:$0xff] %v387
        %486 = vst [vmem:[%s190 + $0x80] sm:$0xff] %v392
        %487 = vst [vmem:[%s190 + $0x88] sm:$0xff] %v397
        %488 = vst [vmem:[%s190 + $0x90] sm:$0xff] %v402
        %489 = vst [vmem:[%s190 + $0x98] sm:$0xff] %v407
        %490 = vst [vmem:[%s190 + $0xa0] sm:$0xff] %v412
        %491 = vst [vmem:[%s190 + $0xa8] sm:$0xff] %v417
        %492 = vst [vmem:[%s190 + $0xb0] sm:$0xff] %v422
        %493 = vst [vmem:[%s190 + $0xb8] sm:$0xff] %v427
        %494 = vst [vmem:[%s190 + $0xc0] sm:$0xff] %v432
        %495 = vst [vmem:[%s190 + $0xc8] sm:$0xff] %v437
        %496 = vst [vmem:[%s190 + $0xd0] sm:$0xff] %v442
        %497 = vst [vmem:[%s190 + $0xd8] sm:$0xff] %v447
        %498 = vst [vmem:[%s190 + $0xe0] sm:$0xff] %v452
        %499 = vst [vmem:[%s190 + $0xe8] sm:$0xff] %v457
        %500 = vst [vmem:[%s190 + $0xf0] sm:$0xff] %v462
        %501 = vst [vmem:[%s190 + $0xf8] sm:$0xff] %v467
        %v502 = vld [vmem:[%s195 + $0x1] sm:$0xff]
        %v503 = vld [vmem:[%s195 + $0x9] sm:$0xff]
        %v504 = vld [vmem:[%s195 + $0x19] sm:$0xff]
        %v505 = vld [vmem:[%s195 + $0x21] sm:$0xff]
        %v506 = vld [vmem:[%s195 + $0x31] sm:$0xff]
        %v507 = vld [vmem:[%s195 + $0x39] sm:$0xff]
        %v508 = vld [vmem:[%s195 + $0x49] sm:$0xff]
        %v509 = vld [vmem:[%s195 + $0x51] sm:$0xff]
        %v510 = vld [vmem:[%s195 + $0x61] sm:$0xff]
        %v511 = vld [vmem:[%s195 + $0x69] sm:$0xff]
        %v512 = vld [vmem:[%s195 + $0x79] sm:$0xff]
        %v513 = vld [vmem:[%s195 + $0x81] sm:$0xff]
        %v514 = vld [vmem:[%s195 + $0x91] sm:$0xff]
        %v515 = vld [vmem:[%s195 + $0x99] sm:$0xff]
        %v516 = vld [vmem:[%s195 + $0xa9] sm:$0xff]
        %v517 = vld [vmem:[%s195 + $0xb1] sm:$0xff]
        %v518 = vld [vmem:[%s195 + $0xc1] sm:$0xff]
        %v519 = vld [vmem:[%s195 + $0xc9] sm:$0xff]
        %v520 = vld [vmem:[%s195 + $0xd9] sm:$0xff]
        %v521 = vld [vmem:[%s195 + $0xe1] sm:$0xff]
        %v522 = vld [vmem:[%s195 + $0xf1] sm:$0xff]
        %v523 = vld [vmem:[%s195 + $0xf9] sm:$0xff]
        %v524 = vld [vmem:[%s195 + $0x109] sm:$0xff]
        %v525 = vld [vmem:[%s195 + $0x111] sm:$0xff]
        %v526 = vld [vmem:[%s195 + $0x121] sm:$0xff]
        %v527 = vld [vmem:[%s195 + $0x129] sm:$0xff]
        %v528 = vld [vmem:[%s195 + $0x139] sm:$0xff]
        %v529 = vld [vmem:[%s195 + $0x141] sm:$0xff]
        %v530 = vld [vmem:[%s195 + $0x151] sm:$0xff]
        %v531 = vld [vmem:[%s195 + $0x159] sm:$0xff]
        %v532 = vld [vmem:[%s195 + $0x169] sm:$0xff]
        %v533 = vld [vmem:[%s195 + $0x171] sm:$0xff]
        %s534 = scalar_lea.vmem %s1, 128
        %v535 = vld [vmem:[%s534] sm:$0xff]
        %v536 = vld [vmem:[%s534 + $0x8] sm:$0xff]
        %v537 = vld [vmem:[%s534 + $0x10] sm:$0xff]
        %v538 = vld [vmem:[%s534 + $0x18] sm:$0xff]
        %v539 = vld [vmem:[%s534 + $0x20] sm:$0xff]
        %v540 = vld [vmem:[%s534 + $0x28] sm:$0xff]
        %v541 = vld [vmem:[%s534 + $0x30] sm:$0xff]
        %v542 = vld [vmem:[%s534 + $0x38] sm:$0xff]
        %v543 = vld [vmem:[%s534 + $0x40] sm:$0xff]
        %v544 = vld [vmem:[%s534 + $0x48] sm:$0xff]
        %v545 = vld [vmem:[%s534 + $0x50] sm:$0xff]
        %v546 = vld [vmem:[%s534 + $0x58] sm:$0xff]
        %v547 = vld [vmem:[%s534 + $0x60] sm:$0xff]
        %v548 = vld [vmem:[%s534 + $0x68] sm:$0xff]
        %v549 = vld [vmem:[%s534 + $0x70] sm:$0xff]
        %v550 = vld [vmem:[%s534 + $0x78] sm:$0xff]
        %551 = vmatprep.subr.mxu0 0.0
        %552 = vmatpush1.msra.mxu0 %v550
        %553 = vmatprep.subr.mxu0 0.0
        %554 = vmatpush1.msra.mxu0 %v549
        %555 = vmatprep.subr.mxu0 0.0
        %556 = vmatpush1.msra.mxu0 %v548
        %557 = vmatprep.subr.mxu0 0.0
        %558 = vmatpush1.msra.mxu0 %v547
        %559 = vmatprep.subr.mxu0 0.0
        %560 = vmatpush1.msra.mxu0 %v546
        %561 = vmatprep.subr.mxu0 0.0
        %562 = vmatpush1.msra.mxu0 %v545
        %563 = vmatprep.subr.mxu0 0.0
        %564 = vmatpush1.msra.mxu0 %v544
        %565 = vmatprep.subr.mxu0 0.0
        %566 = vmatpush1.msra.mxu0 %v543
        %567 = vmatprep.subr.mxu0 0.0
        %568 = vmatpush1.msra.mxu0 %v542
        %569 = vmatprep.subr.mxu0 0.0
        %570 = vmatpush1.msra.mxu0 %v541
        %571 = vmatprep.subr.mxu0 0.0
        %572 = vmatpush1.msra.mxu0 %v540
        %573 = vmatprep.subr.mxu0 0.0
        %574 = vmatpush1.msra.mxu0 %v539
        %575 = vmatprep.subr.mxu0 0.0
        %576 = vmatpush1.msra.mxu0 %v538
        %577 = vmatprep.subr.mxu0 0.0
        %578 = vmatpush1.msra.mxu0 %v537
        %579 = vmatprep.subr.mxu0 0.0
        %580 = vmatpush1.msra.mxu0 %v536
        %581 = vmatprep.subr.mxu0 0.0
        %582 = vmatpush1.msra.mxu0 %v535
        %583 = vmatprep.subr.mxu0 0.0
        %584 = vmatpush2.msra.mxu0 0.0
        %585 = vmatprep.subr.mxu0 0.0
        %586 = vmatpush2.msra.mxu0 0.0
        %587 = vmatprep.subr.mxu0 0.0
        %588 = vmatpush2.msra.mxu0 0.0
        %589 = vmatprep.subr.mxu0 0.0
        %590 = vmatpush2.msra.mxu0 0.0
        %591 = vmatprep.subr.mxu0 0.0
        %592 = vmatpush2.msra.mxu0 0.0
        %593 = vmatprep.subr.mxu0 0.0
        %594 = vmatpush2.msra.mxu0 0.0
        %595 = vmatprep.subr.mxu0 0.0
        %596 = vmatpush2.msra.mxu0 0.0
        %597 = vmatprep.subr.mxu0 0.0
        %598 = vmatpush2.msra.mxu0 0.0
        %599 = vmatprep.subr.mxu0 0.0
        %600 = vmatpush2.msra.mxu0 0.0
        %601 = vmatprep.subr.mxu0 0.0
        %602 = vmatpush2.msra.mxu0 0.0
        %603 = vmatprep.subr.mxu0 0.0
        %604 = vmatpush2.msra.mxu0 0.0
        %605 = vmatprep.subr.mxu0 0.0
        %606 = vmatpush2.msra.mxu0 0.0
        %607 = vmatprep.subr.mxu0 0.0
        %608 = vmatpush2.msra.mxu0 0.0
        %609 = vmatprep.subr.mxu0 0.0
        %610 = vmatpush2.msra.mxu0 0.0
        %611 = vmatprep.subr.mxu0 0.0
        %612 = vmatpush2.msra.mxu0 0.0
        %613 = vmatprep.subr.mxu0 0.0
        %614 = vmatpush2.msra.mxu0 0.0
        %615 = vmatprep.mubr.f32.mxu0 0.0
        %616 = vmatmul.mubr.f32.gmra.mxu0 %v502
        %v617 = vpop.f32.mrf.mxu0
        %v618 = vadd.f32 0.0, %v617
        %v619 = vpop.f32.mrf.mxu0
        %620 = vmatprep.mubr.f32.mxu0 0.0
        %621 = vmatmul.mubr.f32.gmra.mxu0 %v503
        %v622 = vpop.f32.mrf.mxu0
        %v623 = vadd.f32 0.0, %v622
        %v624 = vpop.f32.mrf.mxu0
        %625 = vmatprep.mubr.f32.mxu0 0.0
        %626 = vmatmul.mubr.f32.gmra.mxu0 %v504
        %v627 = vpop.f32.mrf.mxu0
        %v628 = vadd.f32 0.0, %v627
        %v629 = vpop.f32.mrf.mxu0
        %630 = vmatprep.mubr.f32.mxu0 0.0
        %631 = vmatmul.mubr.f32.gmra.mxu0 %v505
        %v632 = vpop.f32.mrf.mxu0
        %v633 = vadd.f32 0.0, %v632
        %v634 = vpop.f32.mrf.mxu0
        %635 = vmatprep.mubr.f32.mxu0 0.0
        %636 = vmatmul.mubr.f32.gmra.mxu0 %v506
        %v637 = vpop.f32.mrf.mxu0
        %v638 = vadd.f32 0.0, %v637
        %v639 = vpop.f32.mrf.mxu0
        %640 = vmatprep.mubr.f32.mxu0 0.0
        %641 = vmatmul.mubr.f32.gmra.mxu0 %v507
        %v642 = vpop.f32.mrf.mxu0
        %v643 = vadd.f32 0.0, %v642
        %v644 = vpop.f32.mrf.mxu0
        %645 = vmatprep.mubr.f32.mxu0 0.0
        %646 = vmatmul.mubr.f32.gmra.mxu0 %v508
        %v647 = vpop.f32.mrf.mxu0
        %v648 = vadd.f32 0.0, %v647
        %v649 = vpop.f32.mrf.mxu0
        %650 = vmatprep.mubr.f32.mxu0 0.0
        %651 = vmatmul.mubr.f32.gmra.mxu0 %v509
        %v652 = vpop.f32.mrf.mxu0
        %v653 = vadd.f32 0.0, %v652
        %v654 = vpop.f32.mrf.mxu0
        %655 = vmatprep.mubr.f32.mxu0 0.0
        %656 = vmatmul.mubr.f32.gmra.mxu0 %v510
        %v657 = vpop.f32.mrf.mxu0
        %v658 = vadd.f32 0.0, %v657
        %v659 = vpop.f32.mrf.mxu0
        %660 = vmatprep.mubr.f32.mxu0 0.0
        %661 = vmatmul.mubr.f32.gmra.mxu0 %v511
        %v662 = vpop.f32.mrf.mxu0
        %v663 = vadd.f32 0.0, %v662
        %v664 = vpop.f32.mrf.mxu0
        %665 = vmatprep.mubr.f32.mxu0 0.0
        %666 = vmatmul.mubr.f32.gmra.mxu0 %v512
        %v667 = vpop.f32.mrf.mxu0
        %v668 = vadd.f32 0.0, %v667
        %v669 = vpop.f32.mrf.mxu0
        %670 = vmatprep.mubr.f32.mxu0 0.0
        %671 = vmatmul.mubr.f32.gmra.mxu0 %v513
        %v672 = vpop.f32.mrf.mxu0
        %v673 = vadd.f32 0.0, %v672
        %v674 = vpop.f32.mrf.mxu0
        %675 = vmatprep.mubr.f32.mxu0 0.0
        %676 = vmatmul.mubr.f32.gmra.mxu0 %v514
        %v677 = vpop.f32.mrf.mxu0
        %v678 = vadd.f32 0.0, %v677
        %v679 = vpop.f32.mrf.mxu0
        %680 = vmatprep.mubr.f32.mxu0 0.0
        %681 = vmatmul.mubr.f32.gmra.mxu0 %v515
        %v682 = vpop.f32.mrf.mxu0
        %v683 = vadd.f32 0.0, %v682
        %v684 = vpop.f32.mrf.mxu0
        %685 = vmatprep.mubr.f32.mxu0 0.0
        %686 = vmatmul.mubr.f32.gmra.mxu0 %v516
        %v687 = vpop.f32.mrf.mxu0
        %v688 = vadd.f32 0.0, %v687
        %v689 = vpop.f32.mrf.mxu0
        %690 = vmatprep.mubr.f32.mxu0 0.0
        %691 = vmatmul.mubr.f32.gmra.mxu0 %v517
        %v692 = vpop.f32.mrf.mxu0
        %v693 = vadd.f32 0.0, %v692
        %v694 = vpop.f32.mrf.mxu0
        %695 = vmatprep.mubr.f32.mxu0 0.0
        %696 = vmatmul.mubr.f32.gmra.mxu0 %v518
        %v697 = vpop.f32.mrf.mxu0
        %v698 = vadd.f32 0.0, %v697
        %v699 = vpop.f32.mrf.mxu0
        %700 = vmatprep.mubr.f32.mxu0 0.0
        %701 = vmatmul.mubr.f32.gmra.mxu0 %v519
        %v702 = vpop.f32.mrf.mxu0
        %v703 = vadd.f32 0.0, %v702
        %v704 = vpop.f32.mrf.mxu0
        %705 = vmatprep.mubr.f32.mxu0 0.0
        %706 = vmatmul.mubr.f32.gmra.mxu0 %v520
        %v707 = vpop.f32.mrf.mxu0
        %v708 = vadd.f32 0.0, %v707
        %v709 = vpop.f32.mrf.mxu0
        %710 = vmatprep.mubr.f32.mxu0 0.0
        %711 = vmatmul.mubr.f32.gmra.mxu0 %v521
        %v712 = vpop.f32.mrf.mxu0
        %v713 = vadd.f32 0.0, %v712
        %v714 = vpop.f32.mrf.mxu0
        %715 = vmatprep.mubr.f32.mxu0 0.0
        %716 = vmatmul.mubr.f32.gmra.mxu0 %v522
        %v717 = vpop.f32.mrf.mxu0
        %v718 = vadd.f32 0.0, %v717
        %v719 = vpop.f32.mrf.mxu0
        %720 = vmatprep.mubr.f32.mxu0 0.0
        %721 = vmatmul.mubr.f32.gmra.mxu0 %v523
        %v722 = vpop.f32.mrf.mxu0
        %v723 = vadd.f32 0.0, %v722
        %v724 = vpop.f32.mrf.mxu0
        %725 = vmatprep.mubr.f32.mxu0 0.0
        %726 = vmatmul.mubr.f32.gmra.mxu0 %v524
        %v727 = vpop.f32.mrf.mxu0
        %v728 = vadd.f32 0.0, %v727
        %v729 = vpop.f32.mrf.mxu0
        %730 = vmatprep.mubr.f32.mxu0 0.0
        %731 = vmatmul.mubr.f32.gmra.mxu0 %v525
        %v732 = vpop.f32.mrf.mxu0
        %v733 = vadd.f32 0.0, %v732
        %v734 = vpop.f32.mrf.mxu0
        %735 = vmatprep.mubr.f32.mxu0 0.0
        %736 = vmatmul.mubr.f32.gmra.mxu0 %v526
        %v737 = vpop.f32.mrf.mxu0
        %v738 = vadd.f32 0.0, %v737
        %v739 = vpop.f32.mrf.mxu0
        %740 = vmatprep.mubr.f32.mxu0 0.0
        %741 = vmatmul.mubr.f32.gmra.mxu0 %v527
        %v742 = vpop.f32.mrf.mxu0
        %v743 = vadd.f32 0.0, %v742
        %v744 = vpop.f32.mrf.mxu0
        %745 = vmatprep.mubr.f32.mxu0 0.0
        %746 = vmatmul.mubr.f32.gmra.mxu0 %v528
        %v747 = vpop.f32.mrf.mxu0
        %v748 = vadd.f32 0.0, %v747
        %v749 = vpop.f32.mrf.mxu0
        %750 = vmatprep.mubr.f32.mxu0 0.0
        %751 = vmatmul.mubr.f32.gmra.mxu0 %v529
        %v752 = vpop.f32.mrf.mxu0
        %v753 = vadd.f32 0.0, %v752
        %v754 = vpop.f32.mrf.mxu0
        %755 = vmatprep.mubr.f32.mxu0 0.0
        %756 = vmatmul.mubr.f32.gmra.mxu0 %v530
        %v757 = vpop.f32.mrf.mxu0
        %v758 = vadd.f32 0.0, %v757
        %v759 = vpop.f32.mrf.mxu0
        %760 = vmatprep.mubr.f32.mxu0 0.0
        %761 = vmatmul.mubr.f32.gmra.mxu0 %v531
        %v762 = vpop.f32.mrf.mxu0
        %v763 = vadd.f32 0.0, %v762
        %v764 = vpop.f32.mrf.mxu0
        %765 = vmatprep.mubr.f32.mxu0 0.0
        %766 = vmatmul.mubr.f32.gmra.mxu0 %v532
        %v767 = vpop.f32.mrf.mxu0
        %v768 = vadd.f32 0.0, %v767
        %v769 = vpop.f32.mrf.mxu0
        %770 = vmatprep.mubr.f32.mxu0 0.0
        %771 = vmatmul.mubr.f32.gmra.mxu0 %v533
        %v772 = vpop.f32.mrf.mxu0
        %v773 = vadd.f32 0.0, %v772
        %v774 = vpop.f32.mrf.mxu0
        %775 = vdwg.mxu0
        %v776 = vld [vmem:[%s190] sm:$0xff]
        %v777 = vld [vmem:[%s190 + $0x8] sm:$0xff]
        %v778 = vld [vmem:[%s190 + $0x10] sm:$0xff]
        %v779 = vld [vmem:[%s190 + $0x18] sm:$0xff]
        %v780 = vld [vmem:[%s190 + $0x20] sm:$0xff]
        %v781 = vld [vmem:[%s190 + $0x28] sm:$0xff]
        %v782 = vld [vmem:[%s190 + $0x30] sm:$0xff]
        %v783 = vld [vmem:[%s190 + $0x38] sm:$0xff]
        %v784 = vld [vmem:[%s190 + $0x40] sm:$0xff]
        %v785 = vld [vmem:[%s190 + $0x48] sm:$0xff]
        %v786 = vld [vmem:[%s190 + $0x50] sm:$0xff]
        %v787 = vld [vmem:[%s190 + $0x58] sm:$0xff]
        %v788 = vld [vmem:[%s190 + $0x60] sm:$0xff]
        %v789 = vld [vmem:[%s190 + $0x68] sm:$0xff]
        %v790 = vld [vmem:[%s190 + $0x70] sm:$0xff]
        %v791 = vld [vmem:[%s190 + $0x78] sm:$0xff]
        %v792 = vld [vmem:[%s190 + $0x80] sm:$0xff]
        %v793 = vld [vmem:[%s190 + $0x88] sm:$0xff]
        %v794 = vld [vmem:[%s190 + $0x90] sm:$0xff]
        %v795 = vld [vmem:[%s190 + $0x98] sm:$0xff]
        %v796 = vld [vmem:[%s190 + $0xa0] sm:$0xff]
        %v797 = vld [vmem:[%s190 + $0xa8] sm:$0xff]
        %v798 = vld [vmem:[%s190 + $0xb0] sm:$0xff]
        %v799 = vld [vmem:[%s190 + $0xb8] sm:$0xff]
        %v800 = vld [vmem:[%s190 + $0xc0] sm:$0xff]
        %v801 = vld [vmem:[%s190 + $0xc8] sm:$0xff]
        %v802 = vld [vmem:[%s190 + $0xd0] sm:$0xff]
        %v803 = vld [vmem:[%s190 + $0xd8] sm:$0xff]
        %v804 = vld [vmem:[%s190 + $0xe0] sm:$0xff]
        %v805 = vld [vmem:[%s190 + $0xe8] sm:$0xff]
        %v806 = vld [vmem:[%s190 + $0xf0] sm:$0xff]
        %v807 = vld [vmem:[%s190 + $0xf8] sm:$0xff]
        %v808 = vadd.f32 %v776, %v618
        %v809 = vadd.f32 %v777, %v623
        %v810 = vadd.f32 %v778, %v628
        %v811 = vadd.f32 %v779, %v633
        %v812 = vadd.f32 %v780, %v638
        %v813 = vadd.f32 %v781, %v643
        %v814 = vadd.f32 %v782, %v648
        %v815 = vadd.f32 %v783, %v653
        %v816 = vadd.f32 %v784, %v658
        %v817 = vadd.f32 %v785, %v663
        %v818 = vadd.f32 %v786, %v668
        %v819 = vadd.f32 %v787, %v673
        %v820 = vadd.f32 %v788, %v678
        %v821 = vadd.f32 %v789, %v683
        %v822 = vadd.f32 %v790, %v688
        %v823 = vadd.f32 %v791, %v693
        %v824 = vadd.f32 %v792, %v698
        %v825 = vadd.f32 %v793, %v703
        %v826 = vadd.f32 %v794, %v708
        %v827 = vadd.f32 %v795, %v713
        %v828 = vadd.f32 %v796, %v718
        %v829 = vadd.f32 %v797, %v723
        %v830 = vadd.f32 %v798, %v728
        %v831 = vadd.f32 %v799, %v733
        %v832 = vadd.f32 %v800, %v738
        %v833 = vadd.f32 %v801, %v743
        %v834 = vadd.f32 %v802, %v748
        %v835 = vadd.f32 %v803, %v753
        %v836 = vadd.f32 %v804, %v758
        %v837 = vadd.f32 %v805, %v763
        %v838 = vadd.f32 %v806, %v768
        %v839 = vadd.f32 %v807, %v773
        %840 = vst [vmem:[%s190] sm:$0xff] %v808
        %841 = vst [vmem:[%s190 + $0x8] sm:$0xff] %v809
        %842 = vst [vmem:[%s190 + $0x10] sm:$0xff] %v810
        %843 = vst [vmem:[%s190 + $0x18] sm:$0xff] %v811
        %844 = vst [vmem:[%s190 + $0x20] sm:$0xff] %v812
        %845 = vst [vmem:[%s190 + $0x28] sm:$0xff] %v813
        %846 = vst [vmem:[%s190 + $0x30] sm:$0xff] %v814
        %847 = vst [vmem:[%s190 + $0x38] sm:$0xff] %v815
        %848 = vst [vmem:[%s190 + $0x40] sm:$0xff] %v816
        %849 = vst [vmem:[%s190 + $0x48] sm:$0xff] %v817
        %850 = vst [vmem:[%s190 + $0x50] sm:$0xff] %v818
        %851 = vst [vmem:[%s190 + $0x58] sm:$0xff] %v819
        %852 = vst [vmem:[%s190 + $0x60] sm:$0xff] %v820
        %853 = vst [vmem:[%s190 + $0x68] sm:$0xff] %v821
        %854 = vst [vmem:[%s190 + $0x70] sm:$0xff] %v822
        %855 = vst [vmem:[%s190 + $0x78] sm:$0xff] %v823
        %856 = vst [vmem:[%s190 + $0x80] sm:$0xff] %v824
        %857 = vst [vmem:[%s190 + $0x88] sm:$0xff] %v825
        %858 = vst [vmem:[%s190 + $0x90] sm:$0xff] %v826
        %859 = vst [vmem:[%s190 + $0x98] sm:$0xff] %v827
        %860 = vst [vmem:[%s190 + $0xa0] sm:$0xff] %v828
        %861 = vst [vmem:[%s190 + $0xa8] sm:$0xff] %v829
        %862 = vst [vmem:[%s190 + $0xb0] sm:$0xff] %v830
        %863 = vst [vmem:[%s190 + $0xb8] sm:$0xff] %v831
        %864 = vst [vmem:[%s190 + $0xc0] sm:$0xff] %v832
        %865 = vst [vmem:[%s190 + $0xc8] sm:$0xff] %v833
        %866 = vst [vmem:[%s190 + $0xd0] sm:$0xff] %v834
        %867 = vst [vmem:[%s190 + $0xd8] sm:$0xff] %v835
        %868 = vst [vmem:[%s190 + $0xe0] sm:$0xff] %v836
        %869 = vst [vmem:[%s190 + $0xe8] sm:$0xff] %v837
        %870 = vst [vmem:[%s190 + $0xf0] sm:$0xff] %v838
        %871 = vst [vmem:[%s190 + $0xf8] sm:$0xff] %v839
        %v872 = vld [vmem:[%s195 + $0x2] sm:$0xff]
        %v873 = vld [vmem:[%s195 + $0xa] sm:$0xff]
        %v874 = vld [vmem:[%s195 + $0x1a] sm:$0xff]
        %v875 = vld [vmem:[%s195 + $0x22] sm:$0xff]
        %v876 = vld [vmem:[%s195 + $0x32] sm:$0xff]
        %v877 = vld [vmem:[%s195 + $0x3a] sm:$0xff]
        %v878 = vld [vmem:[%s195 + $0x4a] sm:$0xff]
        %v879 = vld [vmem:[%s195 + $0x52] sm:$0xff]
        %v880 = vld [vmem:[%s195 + $0x62] sm:$0xff]
        %v881 = vld [vmem:[%s195 + $0x6a] sm:$0xff]
        %v882 = vld [vmem:[%s195 + $0x7a] sm:$0xff]
        %v883 = vld [vmem:[%s195 + $0x82] sm:$0xff]
        %v884 = vld [vmem:[%s195 + $0x92] sm:$0xff]
        %v885 = vld [vmem:[%s195 + $0x9a] sm:$0xff]
        %v886 = vld [vmem:[%s195 + $0xaa] sm:$0xff]
        %v887 = vld [vmem:[%s195 + $0xb2] sm:$0xff]
        %v888 = vld [vmem:[%s195 + $0xc2] sm:$0xff]
        %v889 = vld [vmem:[%s195 + $0xca] sm:$0xff]
        %v890 = vld [vmem:[%s195 + $0xda] sm:$0xff]
        %v891 = vld [vmem:[%s195 + $0xe2] sm:$0xff]
        %v892 = vld [vmem:[%s195 + $0xf2] sm:$0xff]
        %v893 = vld [vmem:[%s195 + $0xfa] sm:$0xff]
        %v894 = vld [vmem:[%s195 + $0x10a] sm:$0xff]
        %v895 = vld [vmem:[%s195 + $0x112] sm:$0xff]
        %v896 = vld [vmem:[%s195 + $0x122] sm:$0xff]
        %v897 = vld [vmem:[%s195 + $0x12a] sm:$0xff]
        %v898 = vld [vmem:[%s195 + $0x13a] sm:$0xff]
        %v899 = vld [vmem:[%s195 + $0x142] sm:$0xff]
        %v900 = vld [vmem:[%s195 + $0x152] sm:$0xff]
        %v901 = vld [vmem:[%s195 + $0x15a] sm:$0xff]
        %v902 = vld [vmem:[%s195 + $0x16a] sm:$0xff]
        %v903 = vld [vmem:[%s195 + $0x172] sm:$0xff]
        %s904 = scalar_lea.vmem %s1, 256
        %v905 = vld [vmem:[%s904] sm:$0xff]
        %v906 = vld [vmem:[%s904 + $0x8] sm:$0xff]
        %v907 = vld [vmem:[%s904 + $0x10] sm:$0xff]
        %v908 = vld [vmem:[%s904 + $0x18] sm:$0xff]
        %v909 = vld [vmem:[%s904 + $0x20] sm:$0xff]
        %v910 = vld [vmem:[%s904 + $0x28] sm:$0xff]
        %v911 = vld [vmem:[%s904 + $0x30] sm:$0xff]
        %v912 = vld [vmem:[%s904 + $0x38] sm:$0xff]
        %v913 = vld [vmem:[%s904 + $0x40] sm:$0xff]
        %v914 = vld [vmem:[%s904 + $0x48] sm:$0xff]
        %v915 = vld [vmem:[%s904 + $0x50] sm:$0xff]
        %v916 = vld [vmem:[%s904 + $0x58] sm:$0xff]
        %v917 = vld [vmem:[%s904 + $0x60] sm:$0xff]
        %v918 = vld [vmem:[%s904 + $0x68] sm:$0xff]
        %v919 = vld [vmem:[%s904 + $0x70] sm:$0xff]
        %v920 = vld [vmem:[%s904 + $0x78] sm:$0xff]
        %921 = vmatprep.subr.mxu0 0.0
        %922 = vmatpush1.msra.mxu0 %v920
        %923 = vmatprep.subr.mxu0 0.0
        %924 = vmatpush1.msra.mxu0 %v919
        %925 = vmatprep.subr.mxu0 0.0
        %926 = vmatpush1.msra.mxu0 %v918
        %927 = vmatprep.subr.mxu0 0.0
        %928 = vmatpush1.msra.mxu0 %v917
        %929 = vmatprep.subr.mxu0 0.0
        %930 = vmatpush1.msra.mxu0 %v916
        %931 = vmatprep.subr.mxu0 0.0
        %932 = vmatpush1.msra.mxu0 %v915
        %933 = vmatprep.subr.mxu0 0.0
        %934 = vmatpush1.msra.mxu0 %v914
        %935 = vmatprep.subr.mxu0 0.0
        %936 = vmatpush1.msra.mxu0 %v913
        %937 = vmatprep.subr.mxu0 0.0
        %938 = vmatpush1.msra.mxu0 %v912
        %939 = vmatprep.subr.mxu0 0.0
        %940 = vmatpush1.msra.mxu0 %v911
        %941 = vmatprep.subr.mxu0 0.0
        %942 = vmatpush1.msra.mxu0 %v910
        %943 = vmatprep.subr.mxu0 0.0
        %944 = vmatpush1.msra.mxu0 %v909
        %945 = vmatprep.subr.mxu0 0.0
        %946 = vmatpush1.msra.mxu0 %v908
        %947 = vmatprep.subr.mxu0 0.0
        %948 = vmatpush1.msra.mxu0 %v907
        %949 = vmatprep.subr.mxu0 0.0
        %950 = vmatpush1.msra.mxu0 %v906
        %951 = vmatprep.subr.mxu0 0.0
        %952 = vmatpush1.msra.mxu0 %v905
        %953 = vmatprep.subr.mxu0 0.0
        %954 = vmatpush2.msra.mxu0 0.0
        %955 = vmatprep.subr.mxu0 0.0
        %956 = vmatpush2.msra.mxu0 0.0
        %957 = vmatprep.subr.mxu0 0.0
        %958 = vmatpush2.msra.mxu0 0.0
        %959 = vmatprep.subr.mxu0 0.0
        %960 = vmatpush2.msra.mxu0 0.0
        %961 = vmatprep.subr.mxu0 0.0
        %962 = vmatpush2.msra.mxu0 0.0
        %963 = vmatprep.subr.mxu0 0.0
        %964 = vmatpush2.msra.mxu0 0.0
        %965 = vmatprep.subr.mxu0 0.0
        %966 = vmatpush2.msra.mxu0 0.0
        %967 = vmatprep.subr.mxu0 0.0
        %968 = vmatpush2.msra.mxu0 0.0
        %969 = vmatprep.subr.mxu0 0.0
        %970 = vmatpush2.msra.mxu0 0.0
        %971 = vmatprep.subr.mxu0 0.0
        %972 = vmatpush2.msra.mxu0 0.0
        %973 = vmatprep.subr.mxu0 0.0
        %974 = vmatpush2.msra.mxu0 0.0
        %975 = vmatprep.subr.mxu0 0.0
        %976 = vmatpush2.msra.mxu0 0.0
        %977 = vmatprep.subr.mxu0 0.0
        %978 = vmatpush2.msra.mxu0 0.0
        %979 = vmatprep.subr.mxu0 0.0
        %980 = vmatpush2.msra.mxu0 0.0
        %981 = vmatprep.subr.mxu0 0.0
        %982 = vmatpush2.msra.mxu0 0.0
        %983 = vmatprep.subr.mxu0 0.0
        %984 = vmatpush2.msra.mxu0 0.0
        %985 = vmatprep.mubr.f32.mxu0 0.0
        %986 = vmatmul.mubr.f32.gmra.mxu0 %v872
        %v987 = vpop.f32.mrf.mxu0
        %v988 = vadd.f32 0.0, %v987
        %v989 = vpop.f32.mrf.mxu0
        %990 = vmatprep.mubr.f32.mxu0 0.0
        %991 = vmatmul.mubr.f32.gmra.mxu0 %v873
        %v992 = vpop.f32.mrf.mxu0
        %v993 = vadd.f32 0.0, %v992
        %v994 = vpop.f32.mrf.mxu0
        %995 = vmatprep.mubr.f32.mxu0 0.0
        %996 = vmatmul.mubr.f32.gmra.mxu0 %v874
        %v997 = vpop.f32.mrf.mxu0
        %v998 = vadd.f32 0.0, %v997
        %v999 = vpop.f32.mrf.mxu0
        %1000 = vmatprep.mubr.f32.mxu0 0.0
        %1001 = vmatmul.mubr.f32.gmra.mxu0 %v875
        %v1002 = vpop.f32.mrf.mxu0
        %v1003 = vadd.f32 0.0, %v1002
        %v1004 = vpop.f32.mrf.mxu0
        %1005 = vmatprep.mubr.f32.mxu0 0.0
        %1006 = vmatmul.mubr.f32.gmra.mxu0 %v876
        %v1007 = vpop.f32.mrf.mxu0
        %v1008 = vadd.f32 0.0, %v1007
        %v1009 = vpop.f32.mrf.mxu0
        %1010 = vmatprep.mubr.f32.mxu0 0.0
        %1011 = vmatmul.mubr.f32.gmra.mxu0 %v877
        %v1012 = vpop.f32.mrf.mxu0
        %v1013 = vadd.f32 0.0, %v1012
        %v1014 = vpop.f32.mrf.mxu0
        %1015 = vmatprep.mubr.f32.mxu0 0.0
        %1016 = vmatmul.mubr.f32.gmra.mxu0 %v878
        %v1017 = vpop.f32.mrf.mxu0
        %v1018 = vadd.f32 0.0, %v1017
        %v1019 = vpop.f32.mrf.mxu0
        %1020 = vmatprep.mubr.f32.mxu0 0.0
        %1021 = vmatmul.mubr.f32.gmra.mxu0 %v879
        %v1022 = vpop.f32.mrf.mxu0
        %v1023 = vadd.f32 0.0, %v1022
        %v1024 = vpop.f32.mrf.mxu0
        %1025 = vmatprep.mubr.f32.mxu0 0.0
        %1026 = vmatmul.mubr.f32.gmra.mxu0 %v880
        %v1027 = vpop.f32.mrf.mxu0
        %v1028 = vadd.f32 0.0, %v1027
        %v1029 = vpop.f32.mrf.mxu0
        %1030 = vmatprep.mubr.f32.mxu0 0.0
        %1031 = vmatmul.mubr.f32.gmra.mxu0 %v881
        %v1032 = vpop.f32.mrf.mxu0
        %v1033 = vadd.f32 0.0, %v1032
        %v1034 = vpop.f32.mrf.mxu0
        %1035 = vmatprep.mubr.f32.mxu0 0.0
        %1036 = vmatmul.mubr.f32.gmra.mxu0 %v882
        %v1037 = vpop.f32.mrf.mxu0
        %v1038 = vadd.f32 0.0, %v1037
        %v1039 = vpop.f32.mrf.mxu0
        %1040 = vmatprep.mubr.f32.mxu0 0.0
        %1041 = vmatmul.mubr.f32.gmra.mxu0 %v883
        %v1042 = vpop.f32.mrf.mxu0
        %v1043 = vadd.f32 0.0, %v1042
        %v1044 = vpop.f32.mrf.mxu0
        %1045 = vmatprep.mubr.f32.mxu0 0.0
        %1046 = vmatmul.mubr.f32.gmra.mxu0 %v884
        %v1047 = vpop.f32.mrf.mxu0
        %v1048 = vadd.f32 0.0, %v1047
        %v1049 = vpop.f32.mrf.mxu0
        %1050 = vmatprep.mubr.f32.mxu0 0.0
        %1051 = vmatmul.mubr.f32.gmra.mxu0 %v885
        %v1052 = vpop.f32.mrf.mxu0
        %v1053 = vadd.f32 0.0, %v1052
        %v1054 = vpop.f32.mrf.mxu0
        %1055 = vmatprep.mubr.f32.mxu0 0.0
        %1056 = vmatmul.mubr.f32.gmra.mxu0 %v886
        %v1057 = vpop.f32.mrf.mxu0
        %v1058 = vadd.f32 0.0, %v1057
        %v1059 = vpop.f32.mrf.mxu0
        %1060 = vmatprep.mubr.f32.mxu0 0.0
        %1061 = vmatmul.mubr.f32.gmra.mxu0 %v887
        %v1062 = vpop.f32.mrf.mxu0
        %v1063 = vadd.f32 0.0, %v1062
        %v1064 = vpop.f32.mrf.mxu0
        %1065 = vmatprep.mubr.f32.mxu0 0.0
        %1066 = vmatmul.mubr.f32.gmra.mxu0 %v888
        %v1067 = vpop.f32.mrf.mxu0
        %v1068 = vadd.f32 0.0, %v1067
        %v1069 = vpop.f32.mrf.mxu0
        %1070 = vmatprep.mubr.f32.mxu0 0.0
        %1071 = vmatmul.mubr.f32.gmra.mxu0 %v889
        %v1072 = vpop.f32.mrf.mxu0
        %v1073 = vadd.f32 0.0, %v1072
        %v1074 = vpop.f32.mrf.mxu0
        %1075 = vmatprep.mubr.f32.mxu0 0.0
        %1076 = vmatmul.mubr.f32.gmra.mxu0 %v890
        %v1077 = vpop.f32.mrf.mxu0
        %v1078 = vadd.f32 0.0, %v1077
        %v1079 = vpop.f32.mrf.mxu0
        %1080 = vmatprep.mubr.f32.mxu0 0.0
        %1081 = vmatmul.mubr.f32.gmra.mxu0 %v891
        %v1082 = vpop.f32.mrf.mxu0
        %v1083 = vadd.f32 0.0, %v1082
        %v1084 = vpop.f32.mrf.mxu0
        %1085 = vmatprep.mubr.f32.mxu0 0.0
        %1086 = vmatmul.mubr.f32.gmra.mxu0 %v892
        %v1087 = vpop.f32.mrf.mxu0
        %v1088 = vadd.f32 0.0, %v1087
        %v1089 = vpop.f32.mrf.mxu0
        %1090 = vmatprep.mubr.f32.mxu0 0.0
        %1091 = vmatmul.mubr.f32.gmra.mxu0 %v893
        %v1092 = vpop.f32.mrf.mxu0
        %v1093 = vadd.f32 0.0, %v1092
        %v1094 = vpop.f32.mrf.mxu0
        %1095 = vmatprep.mubr.f32.mxu0 0.0
        %1096 = vmatmul.mubr.f32.gmra.mxu0 %v894
        %v1097 = vpop.f32.mrf.mxu0
        %v1098 = vadd.f32 0.0, %v1097
        %v1099 = vpop.f32.mrf.mxu0
        %1100 = vmatprep.mubr.f32.mxu0 0.0
        %1101 = vmatmul.mubr.f32.gmra.mxu0 %v895
        %v1102 = vpop.f32.mrf.mxu0
        %v1103 = vadd.f32 0.0, %v1102
        %v1104 = vpop.f32.mrf.mxu0
        %1105 = vmatprep.mubr.f32.mxu0 0.0
        %1106 = vmatmul.mubr.f32.gmra.mxu0 %v896
        %v1107 = vpop.f32.mrf.mxu0
        %v1108 = vadd.f32 0.0, %v1107
        %v1109 = vpop.f32.mrf.mxu0
        %1110 = vmatprep.mubr.f32.mxu0 0.0
        %1111 = vmatmul.mubr.f32.gmra.mxu0 %v897
        %v1112 = vpop.f32.mrf.mxu0
        %v1113 = vadd.f32 0.0, %v1112
        %v1114 = vpop.f32.mrf.mxu0
        %1115 = vmatprep.mubr.f32.mxu0 0.0
        %1116 = vmatmul.mubr.f32.gmra.mxu0 %v898
        %v1117 = vpop.f32.mrf.mxu0
        %v1118 = vadd.f32 0.0, %v1117
        %v1119 = vpop.f32.mrf.mxu0
        %1120 = vmatprep.mubr.f32.mxu0 0.0
        %1121 = vmatmul.mubr.f32.gmra.mxu0 %v899
        %v1122 = vpop.f32.mrf.mxu0
        %v1123 = vadd.f32 0.0, %v1122
        %v1124 = vpop.f32.mrf.mxu0
        %1125 = vmatprep.mubr.f32.mxu0 0.0
        %1126 = vmatmul.mubr.f32.gmra.mxu0 %v900
        %v1127 = vpop.f32.mrf.mxu0
        %v1128 = vadd.f32 0.0, %v1127
        %v1129 = vpop.f32.mrf.mxu0
        %1130 = vmatprep.mubr.f32.mxu0 0.0
        %1131 = vmatmul.mubr.f32.gmra.mxu0 %v901
        %v1132 = vpop.f32.mrf.mxu0
        %v1133 = vadd.f32 0.0, %v1132
        %v1134 = vpop.f32.mrf.mxu0
        %1135 = vmatprep.mubr.f32.mxu0 0.0
        %1136 = vmatmul.mubr.f32.gmra.mxu0 %v902
        %v1137 = vpop.f32.mrf.mxu0
        %v1138 = vadd.f32 0.0, %v1137
        %v1139 = vpop.f32.mrf.mxu0
        %1140 = vmatprep.mubr.f32.mxu0 0.0
        %1141 = vmatmul.mubr.f32.gmra.mxu0 %v903
        %v1142 = vpop.f32.mrf.mxu0
        %v1143 = vadd.f32 0.0, %v1142
        %v1144 = vpop.f32.mrf.mxu0
        %1145 = vdwg.mxu0
        %v1146 = vld [vmem:[%s190] sm:$0xff]
        %v1147 = vld [vmem:[%s190 + $0x8] sm:$0xff]
        %v1148 = vld [vmem:[%s190 + $0x10] sm:$0xff]
        %v1149 = vld [vmem:[%s190 + $0x18] sm:$0xff]
        %v1150 = vld [vmem:[%s190 + $0x20] sm:$0xff]
        %v1151 = vld [vmem:[%s190 + $0x28] sm:$0xff]
        %v1152 = vld [vmem:[%s190 + $0x30] sm:$0xff]
        %v1153 = vld [vmem:[%s190 + $0x38] sm:$0xff]
        %v1154 = vld [vmem:[%s190 + $0x40] sm:$0xff]
        %v1155 = vld [vmem:[%s190 + $0x48] sm:$0xff]
        %v1156 = vld [vmem:[%s190 + $0x50] sm:$0xff]
        %v1157 = vld [vmem:[%s190 + $0x58] sm:$0xff]
        %v1158 = vld [vmem:[%s190 + $0x60] sm:$0xff]
        %v1159 = vld [vmem:[%s190 + $0x68] sm:$0xff]
        %v1160 = vld [vmem:[%s190 + $0x70] sm:$0xff]
        %v1161 = vld [vmem:[%s190 + $0x78] sm:$0xff]
        %v1162 = vld [vmem:[%s190 + $0x80] sm:$0xff]
        %v1163 = vld [vmem:[%s190 + $0x88] sm:$0xff]
        %v1164 = vld [vmem:[%s190 + $0x90] sm:$0xff]
        %v1165 = vld [vmem:[%s190 + $0x98] sm:$0xff]
        %v1166 = vld [vmem:[%s190 + $0xa0] sm:$0xff]
        %v1167 = vld [vmem:[%s190 + $0xa8] sm:$0xff]
        %v1168 = vld [vmem:[%s190 + $0xb0] sm:$0xff]
        %v1169 = vld [vmem:[%s190 + $0xb8] sm:$0xff]
        %v1170 = vld [vmem:[%s190 + $0xc0] sm:$0xff]
        %v1171 = vld [vmem:[%s190 + $0xc8] sm:$0xff]
        %v1172 = vld [vmem:[%s190 + $0xd0] sm:$0xff]
        %v1173 = vld [vmem:[%s190 + $0xd8] sm:$0xff]
        %v1174 = vld [vmem:[%s190 + $0xe0] sm:$0xff]
        %v1175 = vld [vmem:[%s190 + $0xe8] sm:$0xff]
        %v1176 = vld [vmem:[%s190 + $0xf0] sm:$0xff]
        %v1177 = vld [vmem:[%s190 + $0xf8] sm:$0xff]
        %v1178 = vadd.f32 %v1146, %v988
        %v1179 = vadd.f32 %v1147, %v993
        %v1180 = vadd.f32 %v1148, %v998
        %v1181 = vadd.f32 %v1149, %v1003
        %v1182 = vadd.f32 %v1150, %v1008
        %v1183 = vadd.f32 %v1151, %v1013
        %v1184 = vadd.f32 %v1152, %v1018
        %v1185 = vadd.f32 %v1153, %v1023
        %v1186 = vadd.f32 %v1154, %v1028
        %v1187 = vadd.f32 %v1155, %v1033
        %v1188 = vadd.f32 %v1156, %v1038
        %v1189 = vadd.f32 %v1157, %v1043
        %v1190 = vadd.f32 %v1158, %v1048
        %v1191 = vadd.f32 %v1159, %v1053
        %v1192 = vadd.f32 %v1160, %v1058
        %v1193 = vadd.f32 %v1161, %v1063
        %v1194 = vadd.f32 %v1162, %v1068
        %v1195 = vadd.f32 %v1163, %v1073
        %v1196 = vadd.f32 %v1164, %v1078
        %v1197 = vadd.f32 %v1165, %v1083
        %v1198 = vadd.f32 %v1166, %v1088
        %v1199 = vadd.f32 %v1167, %v1093
        %v1200 = vadd.f32 %v1168, %v1098
        %v1201 = vadd.f32 %v1169, %v1103
        %v1202 = vadd.f32 %v1170, %v1108
        %v1203 = vadd.f32 %v1171, %v1113
        %v1204 = vadd.f32 %v1172, %v1118
        %v1205 = vadd.f32 %v1173, %v1123
        %v1206 = vadd.f32 %v1174, %v1128
        %v1207 = vadd.f32 %v1175, %v1133
        %v1208 = vadd.f32 %v1176, %v1138
        %v1209 = vadd.f32 %v1177, %v1143
        %1210 = vst [vmem:[%s190] sm:$0xff] %v1178
        %1211 = vst [vmem:[%s190 + $0x8] sm:$0xff] %v1179
        %1212 = vst [vmem:[%s190 + $0x10] sm:$0xff] %v1180
        %1213 = vst [vmem:[%s190 + $0x18] sm:$0xff] %v1181
        %1214 = vst [vmem:[%s190 + $0x20] sm:$0xff] %v1182
        %1215 = vst [vmem:[%s190 + $0x28] sm:$0xff] %v1183
        %1216 = vst [vmem:[%s190 + $0x30] sm:$0xff] %v1184
        %1217 = vst [vmem:[%s190 + $0x38] sm:$0xff] %v1185
        %1218 = vst [vmem:[%s190 + $0x40] sm:$0xff] %v1186
        %1219 = vst [vmem:[%s190 + $0x48] sm:$0xff] %v1187
        %1220 = vst [vmem:[%s190 + $0x50] sm:$0xff] %v1188
        %1221 = vst [vmem:[%s190 + $0x58] sm:$0xff] %v1189
        %1222 = vst [vmem:[%s190 + $0x60] sm:$0xff] %v1190
        %1223 = vst [vmem:[%s190 + $0x68] sm:$0xff] %v1191
        %1224 = vst [vmem:[%s190 + $0x70] sm:$0xff] %v1192
        %1225 = vst [vmem:[%s190 + $0x78] sm:$0xff] %v1193
        %1226 = vst [vmem:[%s190 + $0x80] sm:$0xff] %v1194
        %1227 = vst [vmem:[%s190 + $0x88] sm:$0xff] %v1195
        %1228 = vst [vmem:[%s190 + $0x90] sm:$0xff] %v1196
        %1229 = vst [vmem:[%s190 + $0x98] sm:$0xff] %v1197
        %1230 = vst [vmem:[%s190 + $0xa0] sm:$0xff] %v1198
        %1231 = vst [vmem:[%s190 + $0xa8] sm:$0xff] %v1199
        %1232 = vst [vmem:[%s190 + $0xb0] sm:$0xff] %v1200
        %1233 = vst [vmem:[%s190 + $0xb8] sm:$0xff] %v1201
        %1234 = vst [vmem:[%s190 + $0xc0] sm:$0xff] %v1202
        %1235 = vst [vmem:[%s190 + $0xc8] sm:$0xff] %v1203
        %1236 = vst [vmem:[%s190 + $0xd0] sm:$0xff] %v1204
        %1237 = vst [vmem:[%s190 + $0xd8] sm:$0xff] %v1205
        %1238 = vst [vmem:[%s190 + $0xe0] sm:$0xff] %v1206
        %1239 = vst [vmem:[%s190 + $0xe8] sm:$0xff] %v1207
        %1240 = vst [vmem:[%s190 + $0xf0] sm:$0xff] %v1208
        %1241 = vst [vmem:[%s190 + $0xf8] sm:$0xff] %v1209
        %s1242 = scalar_lea.vmem %s195, 24
        %v1243 = vld [vmem:[%s1242] sm:$0xff]
        %v1244 = vld [vmem:[%s1242 + $0x8] sm:$0xff]
        %v1245 = vld [vmem:[%s1242 + $0x18] sm:$0xff]
        %v1246 = vld [vmem:[%s1242 + $0x20] sm:$0xff]
        %v1247 = vld [vmem:[%s1242 + $0x30] sm:$0xff]
        %v1248 = vld [vmem:[%s1242 + $0x38] sm:$0xff]
        %v1249 = vld [vmem:[%s1242 + $0x48] sm:$0xff]
        %v1250 = vld [vmem:[%s1242 + $0x50] sm:$0xff]
        %v1251 = vld [vmem:[%s1242 + $0x60] sm:$0xff]
        %v1252 = vld [vmem:[%s1242 + $0x68] sm:$0xff]
        %v1253 = vld [vmem:[%s1242 + $0x78] sm:$0xff]
        %v1254 = vld [vmem:[%s1242 + $0x80] sm:$0xff]
        %v1255 = vld [vmem:[%s1242 + $0x90] sm:$0xff]
        %v1256 = vld [vmem:[%s1242 + $0x98] sm:$0xff]
        %v1257 = vld [vmem:[%s1242 + $0xa8] sm:$0xff]
        %v1258 = vld [vmem:[%s1242 + $0xb0] sm:$0xff]
        %v1259 = vld [vmem:[%s1242 + $0xc0] sm:$0xff]
        %v1260 = vld [vmem:[%s1242 + $0xc8] sm:$0xff]
        %v1261 = vld [vmem:[%s1242 + $0xd8] sm:$0xff]
        %v1262 = vld [vmem:[%s1242 + $0xe0] sm:$0xff]
        %v1263 = vld [vmem:[%s1242 + $0xf0] sm:$0xff]
        %v1264 = vld [vmem:[%s1242 + $0xf8] sm:$0xff]
        %v1265 = vld [vmem:[%s1242 + $0x108] sm:$0xff]
        %v1266 = vld [vmem:[%s1242 + $0x110] sm:$0xff]
        %v1267 = vld [vmem:[%s1242 + $0x120] sm:$0xff]
        %v1268 = vld [vmem:[%s1242 + $0x128] sm:$0xff]
        %v1269 = vld [vmem:[%s1242 + $0x138] sm:$0xff]
        %v1270 = vld [vmem:[%s1242 + $0x140] sm:$0xff]
        %v1271 = vld [vmem:[%s1242 + $0x150] sm:$0xff]
        %v1272 = vld [vmem:[%s1242 + $0x158] sm:$0xff]
        %v1273 = vld [vmem:[%s1242 + $0x168] sm:$0xff]
        %v1274 = vld [vmem:[%s1242 + $0x170] sm:$0xff]
        %s1275 = scalar_lea.vmem %s1, 384
        %v1276 = vld [vmem:[%s1275] sm:$0xff]
        %v1277 = vld [vmem:[%s1275 + $0x8] sm:$0xff]
        %v1278 = vld [vmem:[%s1275 + $0x10] sm:$0xff]
        %v1279 = vld [vmem:[%s1275 + $0x18] sm:$0xff]
        %v1280 = vld [vmem:[%s1275 + $0x20] sm:$0xff]
        %v1281 = vld [vmem:[%s1275 + $0x28] sm:$0xff]
        %v1282 = vld [vmem:[%s1275 + $0x30] sm:$0xff]
        %v1283 = vld [vmem:[%s1275 + $0x38] sm:$0xff]
        %v1284 = vld [vmem:[%s1275 + $0x40] sm:$0xff]
        %v1285 = vld [vmem:[%s1275 + $0x48] sm:$0xff]
        %v1286 = vld [vmem:[%s1275 + $0x50] sm:$0xff]
        %v1287 = vld [vmem:[%s1275 + $0x58] sm:$0xff]
        %v1288 = vld [vmem:[%s1275 + $0x60] sm:$0xff]
        %v1289 = vld [vmem:[%s1275 + $0x68] sm:$0xff]
        %v1290 = vld [vmem:[%s1275 + $0x70] sm:$0xff]
        %v1291 = vld [vmem:[%s1275 + $0x78] sm:$0xff]
        %1292 = vmatprep.subr.mxu0 0.0
        %1293 = vmatpush1.msra.mxu0 %v1291
        %1294 = vmatprep.subr.mxu0 0.0
        %1295 = vmatpush1.msra.mxu0 %v1290
        %1296 = vmatprep.subr.mxu0 0.0
        %1297 = vmatpush1.msra.mxu0 %v1289
        %1298 = vmatprep.subr.mxu0 0.0
        %1299 = vmatpush1.msra.mxu0 %v1288
        %1300 = vmatprep.subr.mxu0 0.0
        %1301 = vmatpush1.msra.mxu0 %v1287
        %1302 = vmatprep.subr.mxu0 0.0
        %1303 = vmatpush1.msra.mxu0 %v1286
        %1304 = vmatprep.subr.mxu0 0.0
        %1305 = vmatpush1.msra.mxu0 %v1285
        %1306 = vmatprep.subr.mxu0 0.0
        %1307 = vmatpush1.msra.mxu0 %v1284
        %1308 = vmatprep.subr.mxu0 0.0
        %1309 = vmatpush1.msra.mxu0 %v1283
        %1310 = vmatprep.subr.mxu0 0.0
        %1311 = vmatpush1.msra.mxu0 %v1282
        %1312 = vmatprep.subr.mxu0 0.0
        %1313 = vmatpush1.msra.mxu0 %v1281
        %1314 = vmatprep.subr.mxu0 0.0
        %1315 = vmatpush1.msra.mxu0 %v1280
        %1316 = vmatprep.subr.mxu0 0.0
        %1317 = vmatpush1.msra.mxu0 %v1279
        %1318 = vmatprep.subr.mxu0 0.0
        %1319 = vmatpush1.msra.mxu0 %v1278
        %1320 = vmatprep.subr.mxu0 0.0
        %1321 = vmatpush1.msra.mxu0 %v1277
        %1322 = vmatprep.subr.mxu0 0.0
        %1323 = vmatpush1.msra.mxu0 %v1276
        %1324 = vmatprep.subr.mxu0 0.0
        %1325 = vmatpush2.msra.mxu0 0.0
        %1326 = vmatprep.subr.mxu0 0.0
        %1327 = vmatpush2.msra.mxu0 0.0
        %1328 = vmatprep.subr.mxu0 0.0
        %1329 = vmatpush2.msra.mxu0 0.0
        %1330 = vmatprep.subr.mxu0 0.0
        %1331 = vmatpush2.msra.mxu0 0.0
        %1332 = vmatprep.subr.mxu0 0.0
        %1333 = vmatpush2.msra.mxu0 0.0
        %1334 = vmatprep.subr.mxu0 0.0
        %1335 = vmatpush2.msra.mxu0 0.0
        %1336 = vmatprep.subr.mxu0 0.0
        %1337 = vmatpush2.msra.mxu0 0.0
        %1338 = vmatprep.subr.mxu0 0.0
        %1339 = vmatpush2.msra.mxu0 0.0
        %1340 = vmatprep.subr.mxu0 0.0
        %1341 = vmatpush2.msra.mxu0 0.0
        %1342 = vmatprep.subr.mxu0 0.0
        %1343 = vmatpush2.msra.mxu0 0.0
        %1344 = vmatprep.subr.mxu0 0.0
        %1345 = vmatpush2.msra.mxu0 0.0
        %1346 = vmatprep.subr.mxu0 0.0
        %1347 = vmatpush2.msra.mxu0 0.0
        %1348 = vmatprep.subr.mxu0 0.0
        %1349 = vmatpush2.msra.mxu0 0.0
        %1350 = vmatprep.subr.mxu0 0.0
        %1351 = vmatpush2.msra.mxu0 0.0
        %1352 = vmatprep.subr.mxu0 0.0
        %1353 = vmatpush2.msra.mxu0 0.0
        %1354 = vmatprep.subr.mxu0 0.0
        %1355 = vmatpush2.msra.mxu0 0.0
        %1356 = vmatprep.mubr.f32.mxu0 0.0
        %1357 = vmatmul.mubr.f32.gmra.mxu0 %v1243
        %v1358 = vpop.f32.mrf.mxu0
        %v1359 = vadd.f32 0.0, %v1358
        %v1360 = vpop.f32.mrf.mxu0
        %1361 = vmatprep.mubr.f32.mxu0 0.0
        %1362 = vmatmul.mubr.f32.gmra.mxu0 %v1244
        %v1363 = vpop.f32.mrf.mxu0
        %v1364 = vadd.f32 0.0, %v1363
        %v1365 = vpop.f32.mrf.mxu0
        %1366 = vmatprep.mubr.f32.mxu0 0.0
        %1367 = vmatmul.mubr.f32.gmra.mxu0 %v1245
        %v1368 = vpop.f32.mrf.mxu0
        %v1369 = vadd.f32 0.0, %v1368
        %v1370 = vpop.f32.mrf.mxu0
        %1371 = vmatprep.mubr.f32.mxu0 0.0
        %1372 = vmatmul.mubr.f32.gmra.mxu0 %v1246
        %v1373 = vpop.f32.mrf.mxu0
        %v1374 = vadd.f32 0.0, %v1373
        %v1375 = vpop.f32.mrf.mxu0
        %1376 = vmatprep.mubr.f32.mxu0 0.0
        %1377 = vmatmul.mubr.f32.gmra.mxu0 %v1247
        %v1378 = vpop.f32.mrf.mxu0
        %v1379 = vadd.f32 0.0, %v1378
        %v1380 = vpop.f32.mrf.mxu0
        %1381 = vmatprep.mubr.f32.mxu0 0.0
        %1382 = vmatmul.mubr.f32.gmra.mxu0 %v1248
        %v1383 = vpop.f32.mrf.mxu0
        %v1384 = vadd.f32 0.0, %v1383
        %v1385 = vpop.f32.mrf.mxu0
        %1386 = vmatprep.mubr.f32.mxu0 0.0
        %1387 = vmatmul.mubr.f32.gmra.mxu0 %v1249
        %v1388 = vpop.f32.mrf.mxu0
        %v1389 = vadd.f32 0.0, %v1388
        %v1390 = vpop.f32.mrf.mxu0
        %1391 = vmatprep.mubr.f32.mxu0 0.0
        %1392 = vmatmul.mubr.f32.gmra.mxu0 %v1250
        %v1393 = vpop.f32.mrf.mxu0
        %v1394 = vadd.f32 0.0, %v1393
        %v1395 = vpop.f32.mrf.mxu0
        %1396 = vmatprep.mubr.f32.mxu0 0.0
        %1397 = vmatmul.mubr.f32.gmra.mxu0 %v1251
        %v1398 = vpop.f32.mrf.mxu0
        %v1399 = vadd.f32 0.0, %v1398
        %v1400 = vpop.f32.mrf.mxu0
        %1401 = vmatprep.mubr.f32.mxu0 0.0
        %1402 = vmatmul.mubr.f32.gmra.mxu0 %v1252
        %v1403 = vpop.f32.mrf.mxu0
        %v1404 = vadd.f32 0.0, %v1403
        %v1405 = vpop.f32.mrf.mxu0
        %1406 = vmatprep.mubr.f32.mxu0 0.0
        %1407 = vmatmul.mubr.f32.gmra.mxu0 %v1253
        %v1408 = vpop.f32.mrf.mxu0
        %v1409 = vadd.f32 0.0, %v1408
        %v1410 = vpop.f32.mrf.mxu0
        %1411 = vmatprep.mubr.f32.mxu0 0.0
        %1412 = vmatmul.mubr.f32.gmra.mxu0 %v1254
        %v1413 = vpop.f32.mrf.mxu0
        %v1414 = vadd.f32 0.0, %v1413
        %v1415 = vpop.f32.mrf.mxu0
        %1416 = vmatprep.mubr.f32.mxu0 0.0
        %1417 = vmatmul.mubr.f32.gmra.mxu0 %v1255
        %v1418 = vpop.f32.mrf.mxu0
        %v1419 = vadd.f32 0.0, %v1418
        %v1420 = vpop.f32.mrf.mxu0
        %1421 = vmatprep.mubr.f32.mxu0 0.0
        %1422 = vmatmul.mubr.f32.gmra.mxu0 %v1256
        %v1423 = vpop.f32.mrf.mxu0
        %v1424 = vadd.f32 0.0, %v1423
        %v1425 = vpop.f32.mrf.mxu0
        %1426 = vmatprep.mubr.f32.mxu0 0.0
        %1427 = vmatmul.mubr.f32.gmra.mxu0 %v1257
        %v1428 = vpop.f32.mrf.mxu0
        %v1429 = vadd.f32 0.0, %v1428
        %v1430 = vpop.f32.mrf.mxu0
        %1431 = vmatprep.mubr.f32.mxu0 0.0
        %1432 = vmatmul.mubr.f32.gmra.mxu0 %v1258
        %v1433 = vpop.f32.mrf.mxu0
        %v1434 = vadd.f32 0.0, %v1433
        %v1435 = vpop.f32.mrf.mxu0
        %1436 = vmatprep.mubr.f32.mxu0 0.0
        %1437 = vmatmul.mubr.f32.gmra.mxu0 %v1259
        %v1438 = vpop.f32.mrf.mxu0
        %v1439 = vadd.f32 0.0, %v1438
        %v1440 = vpop.f32.mrf.mxu0
        %1441 = vmatprep.mubr.f32.mxu0 0.0
        %1442 = vmatmul.mubr.f32.gmra.mxu0 %v1260
        %v1443 = vpop.f32.mrf.mxu0
        %v1444 = vadd.f32 0.0, %v1443
        %v1445 = vpop.f32.mrf.mxu0
        %1446 = vmatprep.mubr.f32.mxu0 0.0
        %1447 = vmatmul.mubr.f32.gmra.mxu0 %v1261
        %v1448 = vpop.f32.mrf.mxu0
        %v1449 = vadd.f32 0.0, %v1448
        %v1450 = vpop.f32.mrf.mxu0
        %1451 = vmatprep.mubr.f32.mxu0 0.0
        %1452 = vmatmul.mubr.f32.gmra.mxu0 %v1262
        %v1453 = vpop.f32.mrf.mxu0
        %v1454 = vadd.f32 0.0, %v1453
        %v1455 = vpop.f32.mrf.mxu0
        %1456 = vmatprep.mubr.f32.mxu0 0.0
        %1457 = vmatmul.mubr.f32.gmra.mxu0 %v1263
        %v1458 = vpop.f32.mrf.mxu0
        %v1459 = vadd.f32 0.0, %v1458
        %v1460 = vpop.f32.mrf.mxu0
        %1461 = vmatprep.mubr.f32.mxu0 0.0
        %1462 = vmatmul.mubr.f32.gmra.mxu0 %v1264
        %v1463 = vpop.f32.mrf.mxu0
        %v1464 = vadd.f32 0.0, %v1463
        %v1465 = vpop.f32.mrf.mxu0
        %1466 = vmatprep.mubr.f32.mxu0 0.0
        %1467 = vmatmul.mubr.f32.gmra.mxu0 %v1265
        %v1468 = vpop.f32.mrf.mxu0
        %v1469 = vadd.f32 0.0, %v1468
        %v1470 = vpop.f32.mrf.mxu0
        %1471 = vmatprep.mubr.f32.mxu0 0.0
        %1472 = vmatmul.mubr.f32.gmra.mxu0 %v1266
        %v1473 = vpop.f32.mrf.mxu0
        %v1474 = vadd.f32 0.0, %v1473
        %v1475 = vpop.f32.mrf.mxu0
        %1476 = vmatprep.mubr.f32.mxu0 0.0
        %1477 = vmatmul.mubr.f32.gmra.mxu0 %v1267
        %v1478 = vpop.f32.mrf.mxu0
        %v1479 = vadd.f32 0.0, %v1478
        %v1480 = vpop.f32.mrf.mxu0
        %1481 = vmatprep.mubr.f32.mxu0 0.0
        %1482 = vmatmul.mubr.f32.gmra.mxu0 %v1268
        %v1483 = vpop.f32.mrf.mxu0
        %v1484 = vadd.f32 0.0, %v1483
        %v1485 = vpop.f32.mrf.mxu0
        %1486 = vmatprep.mubr.f32.mxu0 0.0
        %1487 = vmatmul.mubr.f32.gmra.mxu0 %v1269
        %v1488 = vpop.f32.mrf.mxu0
        %v1489 = vadd.f32 0.0, %v1488
        %v1490 = vpop.f32.mrf.mxu0
        %1491 = vmatprep.mubr.f32.mxu0 0.0
        %1492 = vmatmul.mubr.f32.gmra.mxu0 %v1270
        %v1493 = vpop.f32.mrf.mxu0
        %v1494 = vadd.f32 0.0, %v1493
        %v1495 = vpop.f32.mrf.mxu0
        %1496 = vmatprep.mubr.f32.mxu0 0.0
        %1497 = vmatmul.mubr.f32.gmra.mxu0 %v1271
        %v1498 = vpop.f32.mrf.mxu0
        %v1499 = vadd.f32 0.0, %v1498
        %v1500 = vpop.f32.mrf.mxu0
        %1501 = vmatprep.mubr.f32.mxu0 0.0
        %1502 = vmatmul.mubr.f32.gmra.mxu0 %v1272
        %v1503 = vpop.f32.mrf.mxu0
        %v1504 = vadd.f32 0.0, %v1503
        %v1505 = vpop.f32.mrf.mxu0
        %1506 = vmatprep.mubr.f32.mxu0 0.0
        %1507 = vmatmul.mubr.f32.gmra.mxu0 %v1273
        %v1508 = vpop.f32.mrf.mxu0
        %v1509 = vadd.f32 0.0, %v1508
        %v1510 = vpop.f32.mrf.mxu0
        %1511 = vmatprep.mubr.f32.mxu0 0.0
        %1512 = vmatmul.mubr.f32.gmra.mxu0 %v1274
        %v1513 = vpop.f32.mrf.mxu0
        %v1514 = vadd.f32 0.0, %v1513
        %v1515 = vpop.f32.mrf.mxu0
        %1516 = vdwg.mxu0
        %v1517 = vld [vmem:[%s190] sm:$0xff]
        %v1518 = vld [vmem:[%s190 + $0x8] sm:$0xff]
        %v1519 = vld [vmem:[%s190 + $0x10] sm:$0xff]
        %v1520 = vld [vmem:[%s190 + $0x18] sm:$0xff]
        %v1521 = vld [vmem:[%s190 + $0x20] sm:$0xff]
        %v1522 = vld [vmem:[%s190 + $0x28] sm:$0xff]
        %v1523 = vld [vmem:[%s190 + $0x30] sm:$0xff]
        %v1524 = vld [vmem:[%s190 + $0x38] sm:$0xff]
        %v1525 = vld [vmem:[%s190 + $0x40] sm:$0xff]
        %v1526 = vld [vmem:[%s190 + $0x48] sm:$0xff]
        %v1527 = vld [vmem:[%s190 + $0x50] sm:$0xff]
        %v1528 = vld [vmem:[%s190 + $0x58] sm:$0xff]
        %v1529 = vld [vmem:[%s190 + $0x60] sm:$0xff]
        %v1530 = vld [vmem:[%s190 + $0x68] sm:$0xff]
        %v1531 = vld [vmem:[%s190 + $0x70] sm:$0xff]
        %v1532 = vld [vmem:[%s190 + $0x78] sm:$0xff]
        %v1533 = vld [vmem:[%s190 + $0x80] sm:$0xff]
        %v1534 = vld [vmem:[%s190 + $0x88] sm:$0xff]
        %v1535 = vld [vmem:[%s190 + $0x90] sm:$0xff]
        %v1536 = vld [vmem:[%s190 + $0x98] sm:$0xff]
        %v1537 = vld [vmem:[%s190 + $0xa0] sm:$0xff]
        %v1538 = vld [vmem:[%s190 + $0xa8] sm:$0xff]
        %v1539 = vld [vmem:[%s190 + $0xb0] sm:$0xff]
        %v1540 = vld [vmem:[%s190 + $0xb8] sm:$0xff]
        %v1541 = vld [vmem:[%s190 + $0xc0] sm:$0xff]
        %v1542 = vld [vmem:[%s190 + $0xc8] sm:$0xff]
        %v1543 = vld [vmem:[%s190 + $0xd0] sm:$0xff]
        %v1544 = vld [vmem:[%s190 + $0xd8] sm:$0xff]
        %v1545 = vld [vmem:[%s190 + $0xe0] sm:$0xff]
        %v1546 = vld [vmem:[%s190 + $0xe8] sm:$0xff]
        %v1547 = vld [vmem:[%s190 + $0xf0] sm:$0xff]
        %v1548 = vld [vmem:[%s190 + $0xf8] sm:$0xff]
        %v1549 = vadd.f32 %v1517, %v1359
        %v1550 = vadd.f32 %v1518, %v1364
        %v1551 = vadd.f32 %v1519, %v1369
        %v1552 = vadd.f32 %v1520, %v1374
        %v1553 = vadd.f32 %v1521, %v1379
        %v1554 = vadd.f32 %v1522, %v1384
        %v1555 = vadd.f32 %v1523, %v1389
        %v1556 = vadd.f32 %v1524, %v1394
        %v1557 = vadd.f32 %v1525, %v1399
        %v1558 = vadd.f32 %v1526, %v1404
        %v1559 = vadd.f32 %v1527, %v1409
        %v1560 = vadd.f32 %v1528, %v1414
        %v1561 = vadd.f32 %v1529, %v1419
        %v1562 = vadd.f32 %v1530, %v1424
        %v1563 = vadd.f32 %v1531, %v1429
        %v1564 = vadd.f32 %v1532, %v1434
        %v1565 = vadd.f32 %v1533, %v1439
        %v1566 = vadd.f32 %v1534, %v1444
        %v1567 = vadd.f32 %v1535, %v1449
        %v1568 = vadd.f32 %v1536, %v1454
        %v1569 = vadd.f32 %v1537, %v1459
        %v1570 = vadd.f32 %v1538, %v1464
        %v1571 = vadd.f32 %v1539, %v1469
        %v1572 = vadd.f32 %v1540, %v1474
        %v1573 = vadd.f32 %v1541, %v1479
        %v1574 = vadd.f32 %v1542, %v1484
        %v1575 = vadd.f32 %v1543, %v1489
        %v1576 = vadd.f32 %v1544, %v1494
        %v1577 = vadd.f32 %v1545, %v1499
        %v1578 = vadd.f32 %v1546, %v1504
        %v1579 = vadd.f32 %v1547, %v1509
        %v1580 = vadd.f32 %v1548, %v1514
        %1581 = vst [vmem:[%s190] sm:$0xff] %v1549
        %1582 = vst [vmem:[%s190 + $0x8] sm:$0xff] %v1550
        %1583 = vst [vmem:[%s190 + $0x10] sm:$0xff] %v1551
        %1584 = vst [vmem:[%s190 + $0x18] sm:$0xff] %v1552
        %1585 = vst [vmem:[%s190 + $0x20] sm:$0xff] %v1553
        %1586 = vst [vmem:[%s190 + $0x28] sm:$0xff] %v1554
        %1587 = vst [vmem:[%s190 + $0x30] sm:$0xff] %v1555
        %1588 = vst [vmem:[%s190 + $0x38] sm:$0xff] %v1556
        %1589 = vst [vmem:[%s190 + $0x40] sm:$0xff] %v1557
        %1590 = vst [vmem:[%s190 + $0x48] sm:$0xff] %v1558
        %1591 = vst [vmem:[%s190 + $0x50] sm:$0xff] %v1559
        %1592 = vst [vmem:[%s190 + $0x58] sm:$0xff] %v1560
        %1593 = vst [vmem:[%s190 + $0x60] sm:$0xff] %v1561
        %1594 = vst [vmem:[%s190 + $0x68] sm:$0xff] %v1562
        %1595 = vst [vmem:[%s190 + $0x70] sm:$0xff] %v1563
        %1596 = vst [vmem:[%s190 + $0x78] sm:$0xff] %v1564
        %1597 = vst [vmem:[%s190 + $0x80] sm:$0xff] %v1565
        %1598 = vst [vmem:[%s190 + $0x88] sm:$0xff] %v1566
        %1599 = vst [vmem:[%s190 + $0x90] sm:$0xff] %v1567
        %1600 = vst [vmem:[%s190 + $0x98] sm:$0xff] %v1568
        %1601 = vst [vmem:[%s190 + $0xa0] sm:$0xff] %v1569
        %1602 = vst [vmem:[%s190 + $0xa8] sm:$0xff] %v1570
        %1603 = vst [vmem:[%s190 + $0xb0] sm:$0xff] %v1571
        %1604 = vst [vmem:[%s190 + $0xb8] sm:$0xff] %v1572
        %1605 = vst [vmem:[%s190 + $0xc0] sm:$0xff] %v1573
        %1606 = vst [vmem:[%s190 + $0xc8] sm:$0xff] %v1574
        %1607 = vst [vmem:[%s190 + $0xd0] sm:$0xff] %v1575
        %1608 = vst [vmem:[%s190 + $0xd8] sm:$0xff] %v1576
        %1609 = vst [vmem:[%s190 + $0xe0] sm:$0xff] %v1577
        %1610 = vst [vmem:[%s190 + $0xe8] sm:$0xff] %v1578
        %1611 = vst [vmem:[%s190 + $0xf0] sm:$0xff] %v1579
        %1612 = vst [vmem:[%s190 + $0xf8] sm:$0xff] %v1580
        %v1613 = vld [vmem:[%s1242 + $0x1] sm:$0xff]
        %v1614 = vld [vmem:[%s1242 + $0x9] sm:$0xff]
        %v1615 = vld [vmem:[%s1242 + $0x19] sm:$0xff]
        %v1616 = vld [vmem:[%s1242 + $0x21] sm:$0xff]
        %v1617 = vld [vmem:[%s1242 + $0x31] sm:$0xff]
        %v1618 = vld [vmem:[%s1242 + $0x39] sm:$0xff]
        %v1619 = vld [vmem:[%s1242 + $0x49] sm:$0xff]
        %v1620 = vld [vmem:[%s1242 + $0x51] sm:$0xff]
        %v1621 = vld [vmem:[%s1242 + $0x61] sm:$0xff]
        %v1622 = vld [vmem:[%s1242 + $0x69] sm:$0xff]
        %v1623 = vld [vmem:[%s1242 + $0x79] sm:$0xff]
        %v1624 = vld [vmem:[%s1242 + $0x81] sm:$0xff]
        %v1625 = vld [vmem:[%s1242 + $0x91] sm:$0xff]
        %v1626 = vld [vmem:[%s1242 + $0x99] sm:$0xff]
        %v1627 = vld [vmem:[%s1242 + $0xa9] sm:$0xff]
        %v1628 = vld [vmem:[%s1242 + $0xb1] sm:$0xff]
        %v1629 = vld [vmem:[%s1242 + $0xc1] sm:$0xff]
        %v1630 = vld [vmem:[%s1242 + $0xc9] sm:$0xff]
        %v1631 = vld [vmem:[%s1242 + $0xd9] sm:$0xff]
        %v1632 = vld [vmem:[%s1242 + $0xe1] sm:$0xff]
        %v1633 = vld [vmem:[%s1242 + $0xf1] sm:$0xff]
        %v1634 = vld [vmem:[%s1242 + $0xf9] sm:$0xff]
        %v1635 = vld [vmem:[%s1242 + $0x109] sm:$0xff]
        %v1636 = vld [vmem:[%s1242 + $0x111] sm:$0xff]
        %v1637 = vld [vmem:[%s1242 + $0x121] sm:$0xff]
        %v1638 = vld [vmem:[%s1242 + $0x129] sm:$0xff]
        %v1639 = vld [vmem:[%s1242 + $0x139] sm:$0xff]
        %v1640 = vld [vmem:[%s1242 + $0x141] sm:$0xff]
        %v1641 = vld [vmem:[%s1242 + $0x151] sm:$0xff]
        %v1642 = vld [vmem:[%s1242 + $0x159] sm:$0xff]
        %v1643 = vld [vmem:[%s1242 + $0x169] sm:$0xff]
        %v1644 = vld [vmem:[%s1242 + $0x171] sm:$0xff]
        %s1645 = scalar_lea.vmem %s1, 512
        %v1646 = vld [vmem:[%s1645] sm:$0xff]
        %v1647 = vld [vmem:[%s1645 + $0x8] sm:$0xff]
        %v1648 = vld [vmem:[%s1645 + $0x10] sm:$0xff]
        %v1649 = vld [vmem:[%s1645 + $0x18] sm:$0xff]
        %v1650 = vld [vmem:[%s1645 + $0x20] sm:$0xff]
        %v1651 = vld [vmem:[%s1645 + $0x28] sm:$0xff]
        %v1652 = vld [vmem:[%s1645 + $0x30] sm:$0xff]
        %v1653 = vld [vmem:[%s1645 + $0x38] sm:$0xff]
        %v1654 = vld [vmem:[%s1645 + $0x40] sm:$0xff]
        %v1655 = vld [vmem:[%s1645 + $0x48] sm:$0xff]
        %v1656 = vld [vmem:[%s1645 + $0x50] sm:$0xff]
        %v1657 = vld [vmem:[%s1645 + $0x58] sm:$0xff]
        %v1658 = vld [vmem:[%s1645 + $0x60] sm:$0xff]
        %v1659 = vld [vmem:[%s1645 + $0x68] sm:$0xff]
        %v1660 = vld [vmem:[%s1645 + $0x70] sm:$0xff]
        %v1661 = vld [vmem:[%s1645 + $0x78] sm:$0xff]
        %1662 = vmatprep.subr.mxu0 0.0
        %1663 = vmatpush1.msra.mxu0 %v1661
        %1664 = vmatprep.subr.mxu0 0.0
        %1665 = vmatpush1.msra.mxu0 %v1660
        %1666 = vmatprep.subr.mxu0 0.0
        %1667 = vmatpush1.msra.mxu0 %v1659
        %1668 = vmatprep.subr.mxu0 0.0
        %1669 = vmatpush1.msra.mxu0 %v1658
        %1670 = vmatprep.subr.mxu0 0.0
        %1671 = vmatpush1.msra.mxu0 %v1657
        %1672 = vmatprep.subr.mxu0 0.0
        %1673 = vmatpush1.msra.mxu0 %v1656
        %1674 = vmatprep.subr.mxu0 0.0
        %1675 = vmatpush1.msra.mxu0 %v1655
        %1676 = vmatprep.subr.mxu0 0.0
        %1677 = vmatpush1.msra.mxu0 %v1654
        %1678 = vmatprep.subr.mxu0 0.0
        %1679 = vmatpush1.msra.mxu0 %v1653
        %1680 = vmatprep.subr.mxu0 0.0
        %1681 = vmatpush1.msra.mxu0 %v1652
        %1682 = vmatprep.subr.mxu0 0.0
        %1683 = vmatpush1.msra.mxu0 %v1651
        %1684 = vmatprep.subr.mxu0 0.0
        %1685 = vmatpush1.msra.mxu0 %v1650
        %1686 = vmatprep.subr.mxu0 0.0
        %1687 = vmatpush1.msra.mxu0 %v1649
        %1688 = vmatprep.subr.mxu0 0.0
        %1689 = vmatpush1.msra.mxu0 %v1648
        %1690 = vmatprep.subr.mxu0 0.0
        %1691 = vmatpush1.msra.mxu0 %v1647
        %1692 = vmatprep.subr.mxu0 0.0
        %1693 = vmatpush1.msra.mxu0 %v1646
        %1694 = vmatprep.subr.mxu0 0.0
        %1695 = vmatpush2.msra.mxu0 0.0
        %1696 = vmatprep.subr.mxu0 0.0
        %1697 = vmatpush2.msra.mxu0 0.0
        %1698 = vmatprep.subr.mxu0 0.0
        %1699 = vmatpush2.msra.mxu0 0.0
        %1700 = vmatprep.subr.mxu0 0.0
        %1701 = vmatpush2.msra.mxu0 0.0
        %1702 = vmatprep.subr.mxu0 0.0
        %1703 = vmatpush2.msra.mxu0 0.0
        %1704 = vmatprep.subr.mxu0 0.0
        %1705 = vmatpush2.msra.mxu0 0.0
        %1706 = vmatprep.subr.mxu0 0.0
        %1707 = vmatpush2.msra.mxu0 0.0
        %1708 = vmatprep.subr.mxu0 0.0
        %1709 = vmatpush2.msra.mxu0 0.0
        %1710 = vmatprep.subr.mxu0 0.0
        %1711 = vmatpush2.msra.mxu0 0.0
        %1712 = vmatprep.subr.mxu0 0.0
        %1713 = vmatpush2.msra.mxu0 0.0
        %1714 = vmatprep.subr.mxu0 0.0
        %1715 = vmatpush2.msra.mxu0 0.0
        %1716 = vmatprep.subr.mxu0 0.0
        %1717 = vmatpush2.msra.mxu0 0.0
        %1718 = vmatprep.subr.mxu0 0.0
        %1719 = vmatpush2.msra.mxu0 0.0
        %1720 = vmatprep.subr.mxu0 0.0
        %1721 = vmatpush2.msra.mxu0 0.0
        %1722 = vmatprep.subr.mxu0 0.0
        %1723 = vmatpush2.msra.mxu0 0.0
        %1724 = vmatprep.subr.mxu0 0.0
        %1725 = vmatpush2.msra.mxu0 0.0
        %1726 = vmatprep.mubr.f32.mxu0 0.0
        %1727 = vmatmul.mubr.f32.gmra.mxu0 %v1613
        %v1728 = vpop.f32.mrf.mxu0
        %v1729 = vadd.f32 0.0, %v1728
        %v1730 = vpop.f32.mrf.mxu0
        %1731 = vmatprep.mubr.f32.mxu0 0.0
        %1732 = vmatmul.mubr.f32.gmra.mxu0 %v1614
        %v1733 = vpop.f32.mrf.mxu0
        %v1734 = vadd.f32 0.0, %v1733
        %v1735 = vpop.f32.mrf.mxu0
        %1736 = vmatprep.mubr.f32.mxu0 0.0
        %1737 = vmatmul.mubr.f32.gmra.mxu0 %v1615
        %v1738 = vpop.f32.mrf.mxu0
        %v1739 = vadd.f32 0.0, %v1738
        %v1740 = vpop.f32.mrf.mxu0
        %1741 = vmatprep.mubr.f32.mxu0 0.0
        %1742 = vmatmul.mubr.f32.gmra.mxu0 %v1616
        %v1743 = vpop.f32.mrf.mxu0
        %v1744 = vadd.f32 0.0, %v1743
        %v1745 = vpop.f32.mrf.mxu0
        %1746 = vmatprep.mubr.f32.mxu0 0.0
        %1747 = vmatmul.mubr.f32.gmra.mxu0 %v1617
        %v1748 = vpop.f32.mrf.mxu0
        %v1749 = vadd.f32 0.0, %v1748
        %v1750 = vpop.f32.mrf.mxu0
        %1751 = vmatprep.mubr.f32.mxu0 0.0
        %1752 = vmatmul.mubr.f32.gmra.mxu0 %v1618
        %v1753 = vpop.f32.mrf.mxu0
        %v1754 = vadd.f32 0.0, %v1753
        %v1755 = vpop.f32.mrf.mxu0
        %1756 = vmatprep.mubr.f32.mxu0 0.0
        %1757 = vmatmul.mubr.f32.gmra.mxu0 %v1619
        %v1758 = vpop.f32.mrf.mxu0
        %v1759 = vadd.f32 0.0, %v1758
        %v1760 = vpop.f32.mrf.mxu0
        %1761 = vmatprep.mubr.f32.mxu0 0.0
        %1762 = vmatmul.mubr.f32.gmra.mxu0 %v1620
        %v1763 = vpop.f32.mrf.mxu0
        %v1764 = vadd.f32 0.0, %v1763
        %v1765 = vpop.f32.mrf.mxu0
        %1766 = vmatprep.mubr.f32.mxu0 0.0
        %1767 = vmatmul.mubr.f32.gmra.mxu0 %v1621
        %v1768 = vpop.f32.mrf.mxu0
        %v1769 = vadd.f32 0.0, %v1768
        %v1770 = vpop.f32.mrf.mxu0
        %1771 = vmatprep.mubr.f32.mxu0 0.0
        %1772 = vmatmul.mubr.f32.gmra.mxu0 %v1622
        %v1773 = vpop.f32.mrf.mxu0
        %v1774 = vadd.f32 0.0, %v1773
        %v1775 = vpop.f32.mrf.mxu0
        %1776 = vmatprep.mubr.f32.mxu0 0.0
        %1777 = vmatmul.mubr.f32.gmra.mxu0 %v1623
        %v1778 = vpop.f32.mrf.mxu0
        %v1779 = vadd.f32 0.0, %v1778
        %v1780 = vpop.f32.mrf.mxu0
        %1781 = vmatprep.mubr.f32.mxu0 0.0
        %1782 = vmatmul.mubr.f32.gmra.mxu0 %v1624
        %v1783 = vpop.f32.mrf.mxu0
        %v1784 = vadd.f32 0.0, %v1783
        %v1785 = vpop.f32.mrf.mxu0
        %1786 = vmatprep.mubr.f32.mxu0 0.0
        %1787 = vmatmul.mubr.f32.gmra.mxu0 %v1625
        %v1788 = vpop.f32.mrf.mxu0
        %v1789 = vadd.f32 0.0, %v1788
        %v1790 = vpop.f32.mrf.mxu0
        %1791 = vmatprep.mubr.f32.mxu0 0.0
        %1792 = vmatmul.mubr.f32.gmra.mxu0 %v1626
        %v1793 = vpop.f32.mrf.mxu0
        %v1794 = vadd.f32 0.0, %v1793
        %v1795 = vpop.f32.mrf.mxu0
        %1796 = vmatprep.mubr.f32.mxu0 0.0
        %1797 = vmatmul.mubr.f32.gmra.mxu0 %v1627
        %v1798 = vpop.f32.mrf.mxu0
        %v1799 = vadd.f32 0.0, %v1798
        %v1800 = vpop.f32.mrf.mxu0
        %1801 = vmatprep.mubr.f32.mxu0 0.0
        %1802 = vmatmul.mubr.f32.gmra.mxu0 %v1628
        %v1803 = vpop.f32.mrf.mxu0
        %v1804 = vadd.f32 0.0, %v1803
        %v1805 = vpop.f32.mrf.mxu0
        %1806 = vmatprep.mubr.f32.mxu0 0.0
        %1807 = vmatmul.mubr.f32.gmra.mxu0 %v1629
        %v1808 = vpop.f32.mrf.mxu0
        %v1809 = vadd.f32 0.0, %v1808
        %v1810 = vpop.f32.mrf.mxu0
        %1811 = vmatprep.mubr.f32.mxu0 0.0
        %1812 = vmatmul.mubr.f32.gmra.mxu0 %v1630
        %v1813 = vpop.f32.mrf.mxu0
        %v1814 = vadd.f32 0.0, %v1813
        %v1815 = vpop.f32.mrf.mxu0
        %1816 = vmatprep.mubr.f32.mxu0 0.0
        %1817 = vmatmul.mubr.f32.gmra.mxu0 %v1631
        %v1818 = vpop.f32.mrf.mxu0
        %v1819 = vadd.f32 0.0, %v1818
        %v1820 = vpop.f32.mrf.mxu0
        %1821 = vmatprep.mubr.f32.mxu0 0.0
        %1822 = vmatmul.mubr.f32.gmra.mxu0 %v1632
        %v1823 = vpop.f32.mrf.mxu0
        %v1824 = vadd.f32 0.0, %v1823
        %v1825 = vpop.f32.mrf.mxu0
        %1826 = vmatprep.mubr.f32.mxu0 0.0
        %1827 = vmatmul.mubr.f32.gmra.mxu0 %v1633
        %v1828 = vpop.f32.mrf.mxu0
        %v1829 = vadd.f32 0.0, %v1828
        %v1830 = vpop.f32.mrf.mxu0
        %1831 = vmatprep.mubr.f32.mxu0 0.0
        %1832 = vmatmul.mubr.f32.gmra.mxu0 %v1634
        %v1833 = vpop.f32.mrf.mxu0
        %v1834 = vadd.f32 0.0, %v1833
        %v1835 = vpop.f32.mrf.mxu0
        %1836 = vmatprep.mubr.f32.mxu0 0.0
        %1837 = vmatmul.mubr.f32.gmra.mxu0 %v1635
        %v1838 = vpop.f32.mrf.mxu0
        %v1839 = vadd.f32 0.0, %v1838
        %v1840 = vpop.f32.mrf.mxu0
        %1841 = vmatprep.mubr.f32.mxu0 0.0
        %1842 = vmatmul.mubr.f32.gmra.mxu0 %v1636
        %v1843 = vpop.f32.mrf.mxu0
        %v1844 = vadd.f32 0.0, %v1843
        %v1845 = vpop.f32.mrf.mxu0
        %1846 = vmatprep.mubr.f32.mxu0 0.0
        %1847 = vmatmul.mubr.f32.gmra.mxu0 %v1637
        %v1848 = vpop.f32.mrf.mxu0
        %v1849 = vadd.f32 0.0, %v1848
        %v1850 = vpop.f32.mrf.mxu0
        %1851 = vmatprep.mubr.f32.mxu0 0.0
        %1852 = vmatmul.mubr.f32.gmra.mxu0 %v1638
        %v1853 = vpop.f32.mrf.mxu0
        %v1854 = vadd.f32 0.0, %v1853
        %v1855 = vpop.f32.mrf.mxu0
        %1856 = vmatprep.mubr.f32.mxu0 0.0
        %1857 = vmatmul.mubr.f32.gmra.mxu0 %v1639
        %v1858 = vpop.f32.mrf.mxu0
        %v1859 = vadd.f32 0.0, %v1858
        %v1860 = vpop.f32.mrf.mxu0
        %1861 = vmatprep.mubr.f32.mxu0 0.0
        %1862 = vmatmul.mubr.f32.gmra.mxu0 %v1640
        %v1863 = vpop.f32.mrf.mxu0
        %v1864 = vadd.f32 0.0, %v1863
        %v1865 = vpop.f32.mrf.mxu0
        %1866 = vmatprep.mubr.f32.mxu0 0.0
        %1867 = vmatmul.mubr.f32.gmra.mxu0 %v1641
        %v1868 = vpop.f32.mrf.mxu0
        %v1869 = vadd.f32 0.0, %v1868
        %v1870 = vpop.f32.mrf.mxu0
        %1871 = vmatprep.mubr.f32.mxu0 0.0
        %1872 = vmatmul.mubr.f32.gmra.mxu0 %v1642
        %v1873 = vpop.f32.mrf.mxu0
        %v1874 = vadd.f32 0.0, %v1873
        %v1875 = vpop.f32.mrf.mxu0
        %1876 = vmatprep.mubr.f32.mxu0 0.0
        %1877 = vmatmul.mubr.f32.gmra.mxu0 %v1643
        %v1878 = vpop.f32.mrf.mxu0
        %v1879 = vadd.f32 0.0, %v1878
        %v1880 = vpop.f32.mrf.mxu0
        %1881 = vmatprep.mubr.f32.mxu0 0.0
        %1882 = vmatmul.mubr.f32.gmra.mxu0 %v1644
        %v1883 = vpop.f32.mrf.mxu0
        %v1884 = vadd.f32 0.0, %v1883
        %v1885 = vpop.f32.mrf.mxu0
        %1886 = vdwg.mxu0
        %v1887 = vld [vmem:[%s190] sm:$0xff]
        %v1888 = vld [vmem:[%s190 + $0x8] sm:$0xff]
        %v1889 = vld [vmem:[%s190 + $0x10] sm:$0xff]
        %v1890 = vld [vmem:[%s190 + $0x18] sm:$0xff]
        %v1891 = vld [vmem:[%s190 + $0x20] sm:$0xff]
        %v1892 = vld [vmem:[%s190 + $0x28] sm:$0xff]
        %v1893 = vld [vmem:[%s190 + $0x30] sm:$0xff]
        %v1894 = vld [vmem:[%s190 + $0x38] sm:$0xff]
        %v1895 = vld [vmem:[%s190 + $0x40] sm:$0xff]
        %v1896 = vld [vmem:[%s190 + $0x48] sm:$0xff]
        %v1897 = vld [vmem:[%s190 + $0x50] sm:$0xff]
        %v1898 = vld [vmem:[%s190 + $0x58] sm:$0xff]
        %v1899 = vld [vmem:[%s190 + $0x60] sm:$0xff]
        %v1900 = vld [vmem:[%s190 + $0x68] sm:$0xff]
        %v1901 = vld [vmem:[%s190 + $0x70] sm:$0xff]
        %v1902 = vld [vmem:[%s190 + $0x78] sm:$0xff]
        %v1903 = vld [vmem:[%s190 + $0x80] sm:$0xff]
        %v1904 = vld [vmem:[%s190 + $0x88] sm:$0xff]
        %v1905 = vld [vmem:[%s190 + $0x90] sm:$0xff]
        %v1906 = vld [vmem:[%s190 + $0x98] sm:$0xff]
        %v1907 = vld [vmem:[%s190 + $0xa0] sm:$0xff]
        %v1908 = vld [vmem:[%s190 + $0xa8] sm:$0xff]
        %v1909 = vld [vmem:[%s190 + $0xb0] sm:$0xff]
        %v1910 = vld [vmem:[%s190 + $0xb8] sm:$0xff]
        %v1911 = vld [vmem:[%s190 + $0xc0] sm:$0xff]
        %v1912 = vld [vmem:[%s190 + $0xc8] sm:$0xff]
        %v1913 = vld [vmem:[%s190 + $0xd0] sm:$0xff]
        %v1914 = vld [vmem:[%s190 + $0xd8] sm:$0xff]
        %v1915 = vld [vmem:[%s190 + $0xe0] sm:$0xff]
        %v1916 = vld [vmem:[%s190 + $0xe8] sm:$0xff]
        %v1917 = vld [vmem:[%s190 + $0xf0] sm:$0xff]
        %v1918 = vld [vmem:[%s190 + $0xf8] sm:$0xff]
        %v1919 = vadd.f32 %v1887, %v1729
        %v1920 = vadd.f32 %v1888, %v1734
        %v1921 = vadd.f32 %v1889, %v1739
        %v1922 = vadd.f32 %v1890, %v1744
        %v1923 = vadd.f32 %v1891, %v1749
        %v1924 = vadd.f32 %v1892, %v1754
        %v1925 = vadd.f32 %v1893, %v1759
        %v1926 = vadd.f32 %v1894, %v1764
        %v1927 = vadd.f32 %v1895, %v1769
        %v1928 = vadd.f32 %v1896, %v1774
        %v1929 = vadd.f32 %v1897, %v1779
        %v1930 = vadd.f32 %v1898, %v1784
        %v1931 = vadd.f32 %v1899, %v1789
        %v1932 = vadd.f32 %v1900, %v1794
        %v1933 = vadd.f32 %v1901, %v1799
        %v1934 = vadd.f32 %v1902, %v1804
        %v1935 = vadd.f32 %v1903, %v1809
        %v1936 = vadd.f32 %v1904, %v1814
        %v1937 = vadd.f32 %v1905, %v1819
        %v1938 = vadd.f32 %v1906, %v1824
        %v1939 = vadd.f32 %v1907, %v1829
        %v1940 = vadd.f32 %v1908, %v1834
        %v1941 = vadd.f32 %v1909, %v1839
        %v1942 = vadd.f32 %v1910, %v1844
        %v1943 = vadd.f32 %v1911, %v1849
        %v1944 = vadd.f32 %v1912, %v1854
        %v1945 = vadd.f32 %v1913, %v1859
        %v1946 = vadd.f32 %v1914, %v1864
        %v1947 = vadd.f32 %v1915, %v1869
        %v1948 = vadd.f32 %v1916, %v1874
        %v1949 = vadd.f32 %v1917, %v1879
        %v1950 = vadd.f32 %v1918, %v1884
        %1951 = vst [vmem:[%s190] sm:$0xff] %v1919
        %1952 = vst [vmem:[%s190 + $0x8] sm:$0xff] %v1920
        %1953 = vst [vmem:[%s190 + $0x10] sm:$0xff] %v1921
        %1954 = vst [vmem:[%s190 + $0x18] sm:$0xff] %v1922
        %1955 = vst [vmem:[%s190 + $0x20] sm:$0xff] %v1923
        %1956 = vst [vmem:[%s190 + $0x28] sm:$0xff] %v1924
        %1957 = vst [vmem:[%s190 + $0x30] sm:$0xff] %v1925
        %1958 = vst [vmem:[%s190 + $0x38] sm:$0xff] %v1926
        %1959 = vst [vmem:[%s190 + $0x40] sm:$0xff] %v1927
        %1960 = vst [vmem:[%s190 + $0x48] sm:$0xff] %v1928
        %1961 = vst [vmem:[%s190 + $0x50] sm:$0xff] %v1929
        %1962 = vst [vmem:[%s190 + $0x58] sm:$0xff] %v1930
        %1963 = vst [vmem:[%s190 + $0x60] sm:$0xff] %v1931
        %1964 = vst [vmem:[%s190 + $0x68] sm:$0xff] %v1932
        %1965 = vst [vmem:[%s190 + $0x70] sm:$0xff] %v1933
        %1966 = vst [vmem:[%s190 + $0x78] sm:$0xff] %v1934
        %1967 = vst [vmem:[%s190 + $0x80] sm:$0xff] %v1935
        %1968 = vst [vmem:[%s190 + $0x88] sm:$0xff] %v1936
        %1969 = vst [vmem:[%s190 + $0x90] sm:$0xff] %v1937
        %1970 = vst [vmem:[%s190 + $0x98] sm:$0xff] %v1938
        %1971 = vst [vmem:[%s190 + $0xa0] sm:$0xff] %v1939
        %1972 = vst [vmem:[%s190 + $0xa8] sm:$0xff] %v1940
        %1973 = vst [vmem:[%s190 + $0xb0] sm:$0xff] %v1941
        %1974 = vst [vmem:[%s190 + $0xb8] sm:$0xff] %v1942
        %1975 = vst [vmem:[%s190 + $0xc0] sm:$0xff] %v1943
        %1976 = vst [vmem:[%s190 + $0xc8] sm:$0xff] %v1944
        %1977 = vst [vmem:[%s190 + $0xd0] sm:$0xff] %v1945
        %1978 = vst [vmem:[%s190 + $0xd8] sm:$0xff] %v1946
        %1979 = vst [vmem:[%s190 + $0xe0] sm:$0xff] %v1947
        %1980 = vst [vmem:[%s190 + $0xe8] sm:$0xff] %v1948
        %1981 = vst [vmem:[%s190 + $0xf0] sm:$0xff] %v1949
        %1982 = vst [vmem:[%s190 + $0xf8] sm:$0xff] %v1950
        %v1983 = vld [vmem:[%s1242 + $0x2] sm:$0xff]
        %v1984 = vld [vmem:[%s1242 + $0xa] sm:$0xff]
        %v1985 = vld [vmem:[%s1242 + $0x1a] sm:$0xff]
        %v1986 = vld [vmem:[%s1242 + $0x22] sm:$0xff]
        %v1987 = vld [vmem:[%s1242 + $0x32] sm:$0xff]
        %v1988 = vld [vmem:[%s1242 + $0x3a] sm:$0xff]
        %v1989 = vld [vmem:[%s1242 + $0x4a] sm:$0xff]
        %v1990 = vld [vmem:[%s1242 + $0x52] sm:$0xff]
        %v1991 = vld [vmem:[%s1242 + $0x62] sm:$0xff]
        %v1992 = vld [vmem:[%s1242 + $0x6a] sm:$0xff]
        %v1993 = vld [vmem:[%s1242 + $0x7a] sm:$0xff]
        %v1994 = vld [vmem:[%s1242 + $0x82] sm:$0xff]
        %v1995 = vld [vmem:[%s1242 + $0x92] sm:$0xff]
        %v1996 = vld [vmem:[%s1242 + $0x9a] sm:$0xff]
        %v1997 = vld [vmem:[%s1242 + $0xaa] sm:$0xff]
        %v1998 = vld [vmem:[%s1242 + $0xb2] sm:$0xff]
        %v1999 = vld [vmem:[%s1242 + $0xc2] sm:$0xff]
        %v2000 = vld [vmem:[%s1242 + $0xca] sm:$0xff]
        %v2001 = vld [vmem:[%s1242 + $0xda] sm:$0xff]
        %v2002 = vld [vmem:[%s1242 + $0xe2] sm:$0xff]
        %v2003 = vld [vmem:[%s1242 + $0xf2] sm:$0xff]
        %v2004 = vld [vmem:[%s1242 + $0xfa] sm:$0xff]
        %v2005 = vld [vmem:[%s1242 + $0x10a] sm:$0xff]
        %v2006 = vld [vmem:[%s1242 + $0x112] sm:$0xff]
        %v2007 = vld [vmem:[%s1242 + $0x122] sm:$0xff]
        %v2008 = vld [vmem:[%s1242 + $0x12a] sm:$0xff]
        %v2009 = vld [vmem:[%s1242 + $0x13a] sm:$0xff]
        %v2010 = vld [vmem:[%s1242 + $0x142] sm:$0xff]
        %v2011 = vld [vmem:[%s1242 + $0x152] sm:$0xff]
        %v2012 = vld [vmem:[%s1242 + $0x15a] sm:$0xff]
        %v2013 = vld [vmem:[%s1242 + $0x16a] sm:$0xff]
        %v2014 = vld [vmem:[%s1242 + $0x172] sm:$0xff]
        %s2015 = scalar_lea.vmem %s1, 640
        %v2016 = vld [vmem:[%s2015] sm:$0xff]
        %v2017 = vld [vmem:[%s2015 + $0x8] sm:$0xff]
        %v2018 = vld [vmem:[%s2015 + $0x10] sm:$0xff]
        %v2019 = vld [vmem:[%s2015 + $0x18] sm:$0xff]
        %v2020 = vld [vmem:[%s2015 + $0x20] sm:$0xff]
        %v2021 = vld [vmem:[%s2015 + $0x28] sm:$0xff]
        %v2022 = vld [vmem:[%s2015 + $0x30] sm:$0xff]
        %v2023 = vld [vmem:[%s2015 + $0x38] sm:$0xff]
        %v2024 = vld [vmem:[%s2015 + $0x40] sm:$0xff]
        %v2025 = vld [vmem:[%s2015 + $0x48] sm:$0xff]
        %v2026 = vld [vmem:[%s2015 + $0x50] sm:$0xff]
        %v2027 = vld [vmem:[%s2015 + $0x58] sm:$0xff]
        %v2028 = vld [vmem:[%s2015 + $0x60] sm:$0xff]
        %v2029 = vld [vmem:[%s2015 + $0x68] sm:$0xff]
        %v2030 = vld [vmem:[%s2015 + $0x70] sm:$0xff]
        %v2031 = vld [vmem:[%s2015 + $0x78] sm:$0xff]
        %2032 = vmatprep.subr.mxu0 0.0
        %2033 = vmatpush1.msra.mxu0 %v2031
        %2034 = vmatprep.subr.mxu0 0.0
        %2035 = vmatpush1.msra.mxu0 %v2030
        %2036 = vmatprep.subr.mxu0 0.0
        %2037 = vmatpush1.msra.mxu0 %v2029
        %2038 = vmatprep.subr.mxu0 0.0
        %2039 = vmatpush1.msra.mxu0 %v2028
        %2040 = vmatprep.subr.mxu0 0.0
        %2041 = vmatpush1.msra.mxu0 %v2027
        %2042 = vmatprep.subr.mxu0 0.0
        %2043 = vmatpush1.msra.mxu0 %v2026
        %2044 = vmatprep.subr.mxu0 0.0
        %2045 = vmatpush1.msra.mxu0 %v2025
        %2046 = vmatprep.subr.mxu0 0.0
        %2047 = vmatpush1.msra.mxu0 %v2024
        %2048 = vmatprep.subr.mxu0 0.0
        %2049 = vmatpush1.msra.mxu0 %v2023
        %2050 = vmatprep.subr.mxu0 0.0
        %2051 = vmatpush1.msra.mxu0 %v2022
        %2052 = vmatprep.subr.mxu0 0.0
        %2053 = vmatpush1.msra.mxu0 %v2021
        %2054 = vmatprep.subr.mxu0 0.0
        %2055 = vmatpush1.msra.mxu0 %v2020
        %2056 = vmatprep.subr.mxu0 0.0
        %2057 = vmatpush1.msra.mxu0 %v2019
        %2058 = vmatprep.subr.mxu0 0.0
        %2059 = vmatpush1.msra.mxu0 %v2018
        %2060 = vmatprep.subr.mxu0 0.0
        %2061 = vmatpush1.msra.mxu0 %v2017
        %2062 = vmatprep.subr.mxu0 0.0
        %2063 = vmatpush1.msra.mxu0 %v2016
        %2064 = vmatprep.subr.mxu0 0.0
        %2065 = vmatpush2.msra.mxu0 0.0
        %2066 = vmatprep.subr.mxu0 0.0
        %2067 = vmatpush2.msra.mxu0 0.0
        %2068 = vmatprep.subr.mxu0 0.0
        %2069 = vmatpush2.msra.mxu0 0.0
        %2070 = vmatprep.subr.mxu0 0.0
        %2071 = vmatpush2.msra.mxu0 0.0
        %2072 = vmatprep.subr.mxu0 0.0
        %2073 = vmatpush2.msra.mxu0 0.0
        %2074 = vmatprep.subr.mxu0 0.0
        %2075 = vmatpush2.msra.mxu0 0.0
        %2076 = vmatprep.subr.mxu0 0.0
        %2077 = vmatpush2.msra.mxu0 0.0
        %2078 = vmatprep.subr.mxu0 0.0
        %2079 = vmatpush2.msra.mxu0 0.0
        %2080 = vmatprep.subr.mxu0 0.0
        %2081 = vmatpush2.msra.mxu0 0.0
        %2082 = vmatprep.subr.mxu0 0.0
        %2083 = vmatpush2.msra.mxu0 0.0
        %2084 = vmatprep.subr.mxu0 0.0
        %2085 = vmatpush2.msra.mxu0 0.0
        %2086 = vmatprep.subr.mxu0 0.0
        %2087 = vmatpush2.msra.mxu0 0.0
        %2088 = vmatprep.subr.mxu0 0.0
        %2089 = vmatpush2.msra.mxu0 0.0
        %2090 = vmatprep.subr.mxu0 0.0
        %2091 = vmatpush2.msra.mxu0 0.0
        %2092 = vmatprep.subr.mxu0 0.0
        %2093 = vmatpush2.msra.mxu0 0.0
        %2094 = vmatprep.subr.mxu0 0.0
        %2095 = vmatpush2.msra.mxu0 0.0
        %2096 = vmatprep.mubr.f32.mxu0 0.0
        %2097 = vmatmul.mubr.f32.gmra.mxu0 %v1983
        %v2098 = vpop.f32.mrf.mxu0
        %v2099 = vadd.f32 0.0, %v2098
        %v2100 = vpop.f32.mrf.mxu0
        %2101 = vmatprep.mubr.f32.mxu0 0.0
        %2102 = vmatmul.mubr.f32.gmra.mxu0 %v1984
        %v2103 = vpop.f32.mrf.mxu0
        %v2104 = vadd.f32 0.0, %v2103
        %v2105 = vpop.f32.mrf.mxu0
        %2106 = vmatprep.mubr.f32.mxu0 0.0
        %2107 = vmatmul.mubr.f32.gmra.mxu0 %v1985
        %v2108 = vpop.f32.mrf.mxu0
        %v2109 = vadd.f32 0.0, %v2108
        %v2110 = vpop.f32.mrf.mxu0
        %2111 = vmatprep.mubr.f32.mxu0 0.0
        %2112 = vmatmul.mubr.f32.gmra.mxu0 %v1986
        %v2113 = vpop.f32.mrf.mxu0
        %v2114 = vadd.f32 0.0, %v2113
        %v2115 = vpop.f32.mrf.mxu0
        %2116 = vmatprep.mubr.f32.mxu0 0.0
        %2117 = vmatmul.mubr.f32.gmra.mxu0 %v1987
        %v2118 = vpop.f32.mrf.mxu0
        %v2119 = vadd.f32 0.0, %v2118
        %v2120 = vpop.f32.mrf.mxu0
        %2121 = vmatprep.mubr.f32.mxu0 0.0
        %2122 = vmatmul.mubr.f32.gmra.mxu0 %v1988
        %v2123 = vpop.f32.mrf.mxu0
        %v2124 = vadd.f32 0.0, %v2123
        %v2125 = vpop.f32.mrf.mxu0
        %2126 = vmatprep.mubr.f32.mxu0 0.0
        %2127 = vmatmul.mubr.f32.gmra.mxu0 %v1989
        %v2128 = vpop.f32.mrf.mxu0
        %v2129 = vadd.f32 0.0, %v2128
        %v2130 = vpop.f32.mrf.mxu0
        %2131 = vmatprep.mubr.f32.mxu0 0.0
        %2132 = vmatmul.mubr.f32.gmra.mxu0 %v1990
        %v2133 = vpop.f32.mrf.mxu0
        %v2134 = vadd.f32 0.0, %v2133
        %v2135 = vpop.f32.mrf.mxu0
        %2136 = vmatprep.mubr.f32.mxu0 0.0
        %2137 = vmatmul.mubr.f32.gmra.mxu0 %v1991
        %v2138 = vpop.f32.mrf.mxu0
        %v2139 = vadd.f32 0.0, %v2138
        %v2140 = vpop.f32.mrf.mxu0
        %2141 = vmatprep.mubr.f32.mxu0 0.0
        %2142 = vmatmul.mubr.f32.gmra.mxu0 %v1992
        %v2143 = vpop.f32.mrf.mxu0
        %v2144 = vadd.f32 0.0, %v2143
        %v2145 = vpop.f32.mrf.mxu0
        %2146 = vmatprep.mubr.f32.mxu0 0.0
        %2147 = vmatmul.mubr.f32.gmra.mxu0 %v1993
        %v2148 = vpop.f32.mrf.mxu0
        %v2149 = vadd.f32 0.0, %v2148
        %v2150 = vpop.f32.mrf.mxu0
        %2151 = vmatprep.mubr.f32.mxu0 0.0
        %2152 = vmatmul.mubr.f32.gmra.mxu0 %v1994
        %v2153 = vpop.f32.mrf.mxu0
        %v2154 = vadd.f32 0.0, %v2153
        %v2155 = vpop.f32.mrf.mxu0
        %2156 = vmatprep.mubr.f32.mxu0 0.0
        %2157 = vmatmul.mubr.f32.gmra.mxu0 %v1995
        %v2158 = vpop.f32.mrf.mxu0
        %v2159 = vadd.f32 0.0, %v2158
        %v2160 = vpop.f32.mrf.mxu0
        %2161 = vmatprep.mubr.f32.mxu0 0.0
        %2162 = vmatmul.mubr.f32.gmra.mxu0 %v1996
        %v2163 = vpop.f32.mrf.mxu0
        %v2164 = vadd.f32 0.0, %v2163
        %v2165 = vpop.f32.mrf.mxu0
        %2166 = vmatprep.mubr.f32.mxu0 0.0
        %2167 = vmatmul.mubr.f32.gmra.mxu0 %v1997
        %v2168 = vpop.f32.mrf.mxu0
        %v2169 = vadd.f32 0.0, %v2168
        %v2170 = vpop.f32.mrf.mxu0
        %2171 = vmatprep.mubr.f32.mxu0 0.0
        %2172 = vmatmul.mubr.f32.gmra.mxu0 %v1998
        %v2173 = vpop.f32.mrf.mxu0
        %v2174 = vadd.f32 0.0, %v2173
        %v2175 = vpop.f32.mrf.mxu0
        %2176 = vmatprep.mubr.f32.mxu0 0.0
        %2177 = vmatmul.mubr.f32.gmra.mxu0 %v1999
        %v2178 = vpop.f32.mrf.mxu0
        %v2179 = vadd.f32 0.0, %v2178
        %v2180 = vpop.f32.mrf.mxu0
        %2181 = vmatprep.mubr.f32.mxu0 0.0
        %2182 = vmatmul.mubr.f32.gmra.mxu0 %v2000
        %v2183 = vpop.f32.mrf.mxu0
        %v2184 = vadd.f32 0.0, %v2183
        %v2185 = vpop.f32.mrf.mxu0
        %2186 = vmatprep.mubr.f32.mxu0 0.0
        %2187 = vmatmul.mubr.f32.gmra.mxu0 %v2001
        %v2188 = vpop.f32.mrf.mxu0
        %v2189 = vadd.f32 0.0, %v2188
        %v2190 = vpop.f32.mrf.mxu0
        %2191 = vmatprep.mubr.f32.mxu0 0.0
        %2192 = vmatmul.mubr.f32.gmra.mxu0 %v2002
        %v2193 = vpop.f32.mrf.mxu0
        %v2194 = vadd.f32 0.0, %v2193
        %v2195 = vpop.f32.mrf.mxu0
        %2196 = vmatprep.mubr.f32.mxu0 0.0
        %2197 = vmatmul.mubr.f32.gmra.mxu0 %v2003
        %v2198 = vpop.f32.mrf.mxu0
        %v2199 = vadd.f32 0.0, %v2198
        %v2200 = vpop.f32.mrf.mxu0
        %2201 = vmatprep.mubr.f32.mxu0 0.0
        %2202 = vmatmul.mubr.f32.gmra.mxu0 %v2004
        %v2203 = vpop.f32.mrf.mxu0
        %v2204 = vadd.f32 0.0, %v2203
        %v2205 = vpop.f32.mrf.mxu0
        %2206 = vmatprep.mubr.f32.mxu0 0.0
        %2207 = vmatmul.mubr.f32.gmra.mxu0 %v2005
        %v2208 = vpop.f32.mrf.mxu0
        %v2209 = vadd.f32 0.0, %v2208
        %v2210 = vpop.f32.mrf.mxu0
        %2211 = vmatprep.mubr.f32.mxu0 0.0
        %2212 = vmatmul.mubr.f32.gmra.mxu0 %v2006
        %v2213 = vpop.f32.mrf.mxu0
        %v2214 = vadd.f32 0.0, %v2213
        %v2215 = vpop.f32.mrf.mxu0
        %2216 = vmatprep.mubr.f32.mxu0 0.0
        %2217 = vmatmul.mubr.f32.gmra.mxu0 %v2007
        %v2218 = vpop.f32.mrf.mxu0
        %v2219 = vadd.f32 0.0, %v2218
        %v2220 = vpop.f32.mrf.mxu0
        %2221 = vmatprep.mubr.f32.mxu0 0.0
        %2222 = vmatmul.mubr.f32.gmra.mxu0 %v2008
        %v2223 = vpop.f32.mrf.mxu0
        %v2224 = vadd.f32 0.0, %v2223
        %v2225 = vpop.f32.mrf.mxu0
        %2226 = vmatprep.mubr.f32.mxu0 0.0
        %2227 = vmatmul.mubr.f32.gmra.mxu0 %v2009
        %v2228 = vpop.f32.mrf.mxu0
        %v2229 = vadd.f32 0.0, %v2228
        %v2230 = vpop.f32.mrf.mxu0
        %2231 = vmatprep.mubr.f32.mxu0 0.0
        %2232 = vmatmul.mubr.f32.gmra.mxu0 %v2010
        %v2233 = vpop.f32.mrf.mxu0
        %v2234 = vadd.f32 0.0, %v2233
        %v2235 = vpop.f32.mrf.mxu0
        %2236 = vmatprep.mubr.f32.mxu0 0.0
        %2237 = vmatmul.mubr.f32.gmra.mxu0 %v2011
        %v2238 = vpop.f32.mrf.mxu0
        %v2239 = vadd.f32 0.0, %v2238
        %v2240 = vpop.f32.mrf.mxu0
        %2241 = vmatprep.mubr.f32.mxu0 0.0
        %2242 = vmatmul.mubr.f32.gmra.mxu0 %v2012
        %v2243 = vpop.f32.mrf.mxu0
        %v2244 = vadd.f32 0.0, %v2243
        %v2245 = vpop.f32.mrf.mxu0
        %2246 = vmatprep.mubr.f32.mxu0 0.0
        %2247 = vmatmul.mubr.f32.gmra.mxu0 %v2013
        %v2248 = vpop.f32.mrf.mxu0
        %v2249 = vadd.f32 0.0, %v2248
        %v2250 = vpop.f32.mrf.mxu0
        %2251 = vmatprep.mubr.f32.mxu0 0.0
        %2252 = vmatmul.mubr.f32.gmra.mxu0 %v2014
        %v2253 = vpop.f32.mrf.mxu0
        %v2254 = vadd.f32 0.0, %v2253
        %v2255 = vpop.f32.mrf.mxu0
        %2256 = vdwg.mxu0
        %v2257 = vld [vmem:[%s190] sm:$0xff]
        %v2258 = vld [vmem:[%s190 + $0x8] sm:$0xff]
        %v2259 = vld [vmem:[%s190 + $0x10] sm:$0xff]
        %v2260 = vld [vmem:[%s190 + $0x18] sm:$0xff]
        %v2261 = vld [vmem:[%s190 + $0x20] sm:$0xff]
        %v2262 = vld [vmem:[%s190 + $0x28] sm:$0xff]
        %v2263 = vld [vmem:[%s190 + $0x30] sm:$0xff]
        %v2264 = vld [vmem:[%s190 + $0x38] sm:$0xff]
        %v2265 = vld [vmem:[%s190 + $0x40] sm:$0xff]
        %v2266 = vld [vmem:[%s190 + $0x48] sm:$0xff]
        %v2267 = vld [vmem:[%s190 + $0x50] sm:$0xff]
        %v2268 = vld [vmem:[%s190 + $0x58] sm:$0xff]
        %v2269 = vld [vmem:[%s190 + $0x60] sm:$0xff]
        %v2270 = vld [vmem:[%s190 + $0x68] sm:$0xff]
        %v2271 = vld [vmem:[%s190 + $0x70] sm:$0xff]
        %v2272 = vld [vmem:[%s190 + $0x78] sm:$0xff]
        %v2273 = vld [vmem:[%s190 + $0x80] sm:$0xff]
        %v2274 = vld [vmem:[%s190 + $0x88] sm:$0xff]
        %v2275 = vld [vmem:[%s190 + $0x90] sm:$0xff]
        %v2276 = vld [vmem:[%s190 + $0x98] sm:$0xff]
        %v2277 = vld [vmem:[%s190 + $0xa0] sm:$0xff]
        %v2278 = vld [vmem:[%s190 + $0xa8] sm:$0xff]
        %v2279 = vld [vmem:[%s190 + $0xb0] sm:$0xff]
        %v2280 = vld [vmem:[%s190 + $0xb8] sm:$0xff]
        %v2281 = vld [vmem:[%s190 + $0xc0] sm:$0xff]
        %v2282 = vld [vmem:[%s190 + $0xc8] sm:$0xff]
        %v2283 = vld [vmem:[%s190 + $0xd0] sm:$0xff]
        %v2284 = vld [vmem:[%s190 + $0xd8] sm:$0xff]
        %v2285 = vld [vmem:[%s190 + $0xe0] sm:$0xff]
        %v2286 = vld [vmem:[%s190 + $0xe8] sm:$0xff]
        %v2287 = vld [vmem:[%s190 + $0xf0] sm:$0xff]
        %v2288 = vld [vmem:[%s190 + $0xf8] sm:$0xff]
        %v2289 = vadd.f32 %v2257, %v2099
        %v2290 = vadd.f32 %v2258, %v2104
        %v2291 = vadd.f32 %v2259, %v2109
        %v2292 = vadd.f32 %v2260, %v2114
        %v2293 = vadd.f32 %v2261, %v2119
        %v2294 = vadd.f32 %v2262, %v2124
        %v2295 = vadd.f32 %v2263, %v2129
        %v2296 = vadd.f32 %v2264, %v2134
        %v2297 = vadd.f32 %v2265, %v2139
        %v2298 = vadd.f32 %v2266, %v2144
        %v2299 = vadd.f32 %v2267, %v2149
        %v2300 = vadd.f32 %v2268, %v2154
        %v2301 = vadd.f32 %v2269, %v2159
        %v2302 = vadd.f32 %v2270, %v2164
        %v2303 = vadd.f32 %v2271, %v2169
        %v2304 = vadd.f32 %v2272, %v2174
        %v2305 = vadd.f32 %v2273, %v2179
        %v2306 = vadd.f32 %v2274, %v2184
        %v2307 = vadd.f32 %v2275, %v2189
        %v2308 = vadd.f32 %v2276, %v2194
        %v2309 = vadd.f32 %v2277, %v2199
        %v2310 = vadd.f32 %v2278, %v2204
        %v2311 = vadd.f32 %v2279, %v2209
        %v2312 = vadd.f32 %v2280, %v2214
        %v2313 = vadd.f32 %v2281, %v2219
        %v2314 = vadd.f32 %v2282, %v2224
        %v2315 = vadd.f32 %v2283, %v2229
        %v2316 = vadd.f32 %v2284, %v2234
        %v2317 = vadd.f32 %v2285, %v2239
        %v2318 = vadd.f32 %v2286, %v2244
        %v2319 = vadd.f32 %v2287, %v2249
        %v2320 = vadd.f32 %v2288, %v2254
        %2321 = vst [vmem:[%s190] sm:$0xff] %v2289
        %2322 = vst [vmem:[%s190 + $0x8] sm:$0xff] %v2290
        %2323 = vst [vmem:[%s190 + $0x10] sm:$0xff] %v2291
        %2324 = vst [vmem:[%s190 + $0x18] sm:$0xff] %v2292
        %2325 = vst [vmem:[%s190 + $0x20] sm:$0xff] %v2293
        %2326 = vst [vmem:[%s190 + $0x28] sm:$0xff] %v2294
        %2327 = vst [vmem:[%s190 + $0x30] sm:$0xff] %v2295
        %2328 = vst [vmem:[%s190 + $0x38] sm:$0xff] %v2296
        %2329 = vst [vmem:[%s190 + $0x40] sm:$0xff] %v2297
        %2330 = vst [vmem:[%s190 + $0x48] sm:$0xff] %v2298
        %2331 = vst [vmem:[%s190 + $0x50] sm:$0xff] %v2299
        %2332 = vst [vmem:[%s190 + $0x58] sm:$0xff] %v2300
        %2333 = vst [vmem:[%s190 + $0x60] sm:$0xff] %v2301
        %2334 = vst [vmem:[%s190 + $0x68] sm:$0xff] %v2302
        %2335 = vst [vmem:[%s190 + $0x70] sm:$0xff] %v2303
        %2336 = vst [vmem:[%s190 + $0x78] sm:$0xff] %v2304
        %2337 = vst [vmem:[%s190 + $0x80] sm:$0xff] %v2305
        %2338 = vst [vmem:[%s190 + $0x88] sm:$0xff] %v2306
        %2339 = vst [vmem:[%s190 + $0x90] sm:$0xff] %v2307
        %2340 = vst [vmem:[%s190 + $0x98] sm:$0xff] %v2308
        %2341 = vst [vmem:[%s190 + $0xa0] sm:$0xff] %v2309
        %2342 = vst [vmem:[%s190 + $0xa8] sm:$0xff] %v2310
        %2343 = vst [vmem:[%s190 + $0xb0] sm:$0xff] %v2311
        %2344 = vst [vmem:[%s190 + $0xb8] sm:$0xff] %v2312
        %2345 = vst [vmem:[%s190 + $0xc0] sm:$0xff] %v2313
        %2346 = vst [vmem:[%s190 + $0xc8] sm:$0xff] %v2314
        %2347 = vst [vmem:[%s190 + $0xd0] sm:$0xff] %v2315
        %2348 = vst [vmem:[%s190 + $0xd8] sm:$0xff] %v2316
        %2349 = vst [vmem:[%s190 + $0xe0] sm:$0xff] %v2317
        %2350 = vst [vmem:[%s190 + $0xe8] sm:$0xff] %v2318
        %2351 = vst [vmem:[%s190 + $0xf0] sm:$0xff] %v2319
        %2352 = vst [vmem:[%s190 + $0xf8] sm:$0xff] %v2320
        %s2353 = scalar_lea.vmem %s195, 48
        %v2354 = vld [vmem:[%s2353] sm:$0xff]
        %v2355 = vld [vmem:[%s2353 + $0x8] sm:$0xff]
        %v2356 = vld [vmem:[%s2353 + $0x18] sm:$0xff]
        %v2357 = vld [vmem:[%s2353 + $0x20] sm:$0xff]
        %v2358 = vld [vmem:[%s2353 + $0x30] sm:$0xff]
        %v2359 = vld [vmem:[%s2353 + $0x38] sm:$0xff]
        %v2360 = vld [vmem:[%s2353 + $0x48] sm:$0xff]
        %v2361 = vld [vmem:[%s2353 + $0x50] sm:$0xff]
        %v2362 = vld [vmem:[%s2353 + $0x60] sm:$0xff]
        %v2363 = vld [vmem:[%s2353 + $0x68] sm:$0xff]
        %v2364 = vld [vmem:[%s2353 + $0x78] sm:$0xff]
        %v2365 = vld [vmem:[%s2353 + $0x80] sm:$0xff]
        %v2366 = vld [vmem:[%s2353 + $0x90] sm:$0xff]
        %v2367 = vld [vmem:[%s2353 + $0x98] sm:$0xff]
        %v2368 = vld [vmem:[%s2353 + $0xa8] sm:$0xff]
        %v2369 = vld [vmem:[%s2353 + $0xb0] sm:$0xff]
        %v2370 = vld [vmem:[%s2353 + $0xc0] sm:$0xff]
        %v2371 = vld [vmem:[%s2353 + $0xc8] sm:$0xff]
        %v2372 = vld [vmem:[%s2353 + $0xd8] sm:$0xff]
        %v2373 = vld [vmem:[%s2353 + $0xe0] sm:$0xff]
        %v2374 = vld [vmem:[%s2353 + $0xf0] sm:$0xff]
        %v2375 = vld [vmem:[%s2353 + $0xf8] sm:$0xff]
        %v2376 = vld [vmem:[%s2353 + $0x108] sm:$0xff]
        %v2377 = vld [vmem:[%s2353 + $0x110] sm:$0xff]
        %v2378 = vld [vmem:[%s2353 + $0x120] sm:$0xff]
        %v2379 = vld [vmem:[%s2353 + $0x128] sm:$0xff]
        %v2380 = vld [vmem:[%s2353 + $0x138] sm:$0xff]
        %v2381 = vld [vmem:[%s2353 + $0x140] sm:$0xff]
        %v2382 = vld [vmem:[%s2353 + $0x150] sm:$0xff]
        %v2383 = vld [vmem:[%s2353 + $0x158] sm:$0xff]
        %v2384 = vld [vmem:[%s2353 + $0x168] sm:$0xff]
        %v2385 = vld [vmem:[%s2353 + $0x170] sm:$0xff]
        %s2386 = scalar_lea.vmem %s1, 768
        %v2387 = vld [vmem:[%s2386] sm:$0xff]
        %v2388 = vld [vmem:[%s2386 + $0x8] sm:$0xff]
        %v2389 = vld [vmem:[%s2386 + $0x10] sm:$0xff]
        %v2390 = vld [vmem:[%s2386 + $0x18] sm:$0xff]
        %v2391 = vld [vmem:[%s2386 + $0x20] sm:$0xff]
        %v2392 = vld [vmem:[%s2386 + $0x28] sm:$0xff]
        %v2393 = vld [vmem:[%s2386 + $0x30] sm:$0xff]
        %v2394 = vld [vmem:[%s2386 + $0x38] sm:$0xff]
        %v2395 = vld [vmem:[%s2386 + $0x40] sm:$0xff]
        %v2396 = vld [vmem:[%s2386 + $0x48] sm:$0xff]
        %v2397 = vld [vmem:[%s2386 + $0x50] sm:$0xff]
        %v2398 = vld [vmem:[%s2386 + $0x58] sm:$0xff]
        %v2399 = vld [vmem:[%s2386 + $0x60] sm:$0xff]
        %v2400 = vld [vmem:[%s2386 + $0x68] sm:$0xff]
        %v2401 = vld [vmem:[%s2386 + $0x70] sm:$0xff]
        %v2402 = vld [vmem:[%s2386 + $0x78] sm:$0xff]
        %2403 = vmatprep.subr.mxu0 0.0
        %2404 = vmatpush1.msra.mxu0 %v2402
        %2405 = vmatprep.subr.mxu0 0.0
        %2406 = vmatpush1.msra.mxu0 %v2401
        %2407 = vmatprep.subr.mxu0 0.0
        %2408 = vmatpush1.msra.mxu0 %v2400
        %2409 = vmatprep.subr.mxu0 0.0
        %2410 = vmatpush1.msra.mxu0 %v2399
        %2411 = vmatprep.subr.mxu0 0.0
        %2412 = vmatpush1.msra.mxu0 %v2398
        %2413 = vmatprep.subr.mxu0 0.0
        %2414 = vmatpush1.msra.mxu0 %v2397
        %2415 = vmatprep.subr.mxu0 0.0
        %2416 = vmatpush1.msra.mxu0 %v2396
        %2417 = vmatprep.subr.mxu0 0.0
        %2418 = vmatpush1.msra.mxu0 %v2395
        %2419 = vmatprep.subr.mxu0 0.0
        %2420 = vmatpush1.msra.mxu0 %v2394
        %2421 = vmatprep.subr.mxu0 0.0
        %2422 = vmatpush1.msra.mxu0 %v2393
        %2423 = vmatprep.subr.mxu0 0.0
        %2424 = vmatpush1.msra.mxu0 %v2392
        %2425 = vmatprep.subr.mxu0 0.0
        %2426 = vmatpush1.msra.mxu0 %v2391
        %2427 = vmatprep.subr.mxu0 0.0
        %2428 = vmatpush1.msra.mxu0 %v2390
        %2429 = vmatprep.subr.mxu0 0.0
        %2430 = vmatpush1.msra.mxu0 %v2389
        %2431 = vmatprep.subr.mxu0 0.0
        %2432 = vmatpush1.msra.mxu0 %v2388
        %2433 = vmatprep.subr.mxu0 0.0
        %2434 = vmatpush1.msra.mxu0 %v2387
        %2435 = vmatprep.subr.mxu0 0.0
        %2436 = vmatpush2.msra.mxu0 0.0
        %2437 = vmatprep.subr.mxu0 0.0
        %2438 = vmatpush2.msra.mxu0 0.0
        %2439 = vmatprep.subr.mxu0 0.0
        %2440 = vmatpush2.msra.mxu0 0.0
        %2441 = vmatprep.subr.mxu0 0.0
        %2442 = vmatpush2.msra.mxu0 0.0
        %2443 = vmatprep.subr.mxu0 0.0
        %2444 = vmatpush2.msra.mxu0 0.0
        %2445 = vmatprep.subr.mxu0 0.0
        %2446 = vmatpush2.msra.mxu0 0.0
        %2447 = vmatprep.subr.mxu0 0.0
        %2448 = vmatpush2.msra.mxu0 0.0
        %2449 = vmatprep.subr.mxu0 0.0
        %2450 = vmatpush2.msra.mxu0 0.0
        %2451 = vmatprep.subr.mxu0 0.0
        %2452 = vmatpush2.msra.mxu0 0.0
        %2453 = vmatprep.subr.mxu0 0.0
        %2454 = vmatpush2.msra.mxu0 0.0
        %2455 = vmatprep.subr.mxu0 0.0
        %2456 = vmatpush2.msra.mxu0 0.0
        %2457 = vmatprep.subr.mxu0 0.0
        %2458 = vmatpush2.msra.mxu0 0.0
        %2459 = vmatprep.subr.mxu0 0.0
        %2460 = vmatpush2.msra.mxu0 0.0
        %2461 = vmatprep.subr.mxu0 0.0
        %2462 = vmatpush2.msra.mxu0 0.0
        %2463 = vmatprep.subr.mxu0 0.0
        %2464 = vmatpush2.msra.mxu0 0.0
        %2465 = vmatprep.subr.mxu0 0.0
        %2466 = vmatpush2.msra.mxu0 0.0
        %2467 = vmatprep.mubr.f32.mxu0 0.0
        %2468 = vmatmul.mubr.f32.gmra.mxu0 %v2354
        %v2469 = vpop.f32.mrf.mxu0
        %v2470 = vadd.f32 0.0, %v2469
        %v2471 = vpop.f32.mrf.mxu0
        %2472 = vmatprep.mubr.f32.mxu0 0.0
        %2473 = vmatmul.mubr.f32.gmra.mxu0 %v2355
        %v2474 = vpop.f32.mrf.mxu0
        %v2475 = vadd.f32 0.0, %v2474
        %v2476 = vpop.f32.mrf.mxu0
        %2477 = vmatprep.mubr.f32.mxu0 0.0
        %2478 = vmatmul.mubr.f32.gmra.mxu0 %v2356
        %v2479 = vpop.f32.mrf.mxu0
        %v2480 = vadd.f32 0.0, %v2479
        %v2481 = vpop.f32.mrf.mxu0
        %2482 = vmatprep.mubr.f32.mxu0 0.0
        %2483 = vmatmul.mubr.f32.gmra.mxu0 %v2357
        %v2484 = vpop.f32.mrf.mxu0
        %v2485 = vadd.f32 0.0, %v2484
        %v2486 = vpop.f32.mrf.mxu0
        %2487 = vmatprep.mubr.f32.mxu0 0.0
        %2488 = vmatmul.mubr.f32.gmra.mxu0 %v2358
        %v2489 = vpop.f32.mrf.mxu0
        %v2490 = vadd.f32 0.0, %v2489
        %v2491 = vpop.f32.mrf.mxu0
        %2492 = vmatprep.mubr.f32.mxu0 0.0
        %2493 = vmatmul.mubr.f32.gmra.mxu0 %v2359
        %v2494 = vpop.f32.mrf.mxu0
        %v2495 = vadd.f32 0.0, %v2494
        %v2496 = vpop.f32.mrf.mxu0
        %2497 = vmatprep.mubr.f32.mxu0 0.0
        %2498 = vmatmul.mubr.f32.gmra.mxu0 %v2360
        %v2499 = vpop.f32.mrf.mxu0
        %v2500 = vadd.f32 0.0, %v2499
        %v2501 = vpop.f32.mrf.mxu0
        %2502 = vmatprep.mubr.f32.mxu0 0.0
        %2503 = vmatmul.mubr.f32.gmra.mxu0 %v2361
        %v2504 = vpop.f32.mrf.mxu0
        %v2505 = vadd.f32 0.0, %v2504
        %v2506 = vpop.f32.mrf.mxu0
        %2507 = vmatprep.mubr.f32.mxu0 0.0
        %2508 = vmatmul.mubr.f32.gmra.mxu0 %v2362
        %v2509 = vpop.f32.mrf.mxu0
        %v2510 = vadd.f32 0.0, %v2509
        %v2511 = vpop.f32.mrf.mxu0
        %2512 = vmatprep.mubr.f32.mxu0 0.0
        %2513 = vmatmul.mubr.f32.gmra.mxu0 %v2363
        %v2514 = vpop.f32.mrf.mxu0
        %v2515 = vadd.f32 0.0, %v2514
        %v2516 = vpop.f32.mrf.mxu0
        %2517 = vmatprep.mubr.f32.mxu0 0.0
        %2518 = vmatmul.mubr.f32.gmra.mxu0 %v2364
        %v2519 = vpop.f32.mrf.mxu0
        %v2520 = vadd.f32 0.0, %v2519
        %v2521 = vpop.f32.mrf.mxu0
        %2522 = vmatprep.mubr.f32.mxu0 0.0
        %2523 = vmatmul.mubr.f32.gmra.mxu0 %v2365
        %v2524 = vpop.f32.mrf.mxu0
        %v2525 = vadd.f32 0.0, %v2524
        %v2526 = vpop.f32.mrf.mxu0
        %2527 = vmatprep.mubr.f32.mxu0 0.0
        %2528 = vmatmul.mubr.f32.gmra.mxu0 %v2366
        %v2529 = vpop.f32.mrf.mxu0
        %v2530 = vadd.f32 0.0, %v2529
        %v2531 = vpop.f32.mrf.mxu0
        %2532 = vmatprep.mubr.f32.mxu0 0.0
        %2533 = vmatmul.mubr.f32.gmra.mxu0 %v2367
        %v2534 = vpop.f32.mrf.mxu0
        %v2535 = vadd.f32 0.0, %v2534
        %v2536 = vpop.f32.mrf.mxu0
        %2537 = vmatprep.mubr.f32.mxu0 0.0
        %2538 = vmatmul.mubr.f32.gmra.mxu0 %v2368
        %v2539 = vpop.f32.mrf.mxu0
        %v2540 = vadd.f32 0.0, %v2539
        %v2541 = vpop.f32.mrf.mxu0
        %2542 = vmatprep.mubr.f32.mxu0 0.0
        %2543 = vmatmul.mubr.f32.gmra.mxu0 %v2369
        %v2544 = vpop.f32.mrf.mxu0
        %v2545 = vadd.f32 0.0, %v2544
        %v2546 = vpop.f32.mrf.mxu0
        %2547 = vmatprep.mubr.f32.mxu0 0.0
        %2548 = vmatmul.mubr.f32.gmra.mxu0 %v2370
        %v2549 = vpop.f32.mrf.mxu0
        %v2550 = vadd.f32 0.0, %v2549
        %v2551 = vpop.f32.mrf.mxu0
        %2552 = vmatprep.mubr.f32.mxu0 0.0
        %2553 = vmatmul.mubr.f32.gmra.mxu0 %v2371
        %v2554 = vpop.f32.mrf.mxu0
        %v2555 = vadd.f32 0.0, %v2554
        %v2556 = vpop.f32.mrf.mxu0
        %2557 = vmatprep.mubr.f32.mxu0 0.0
        %2558 = vmatmul.mubr.f32.gmra.mxu0 %v2372
        %v2559 = vpop.f32.mrf.mxu0
        %v2560 = vadd.f32 0.0, %v2559
        %v2561 = vpop.f32.mrf.mxu0
        %2562 = vmatprep.mubr.f32.mxu0 0.0
        %2563 = vmatmul.mubr.f32.gmra.mxu0 %v2373
        %v2564 = vpop.f32.mrf.mxu0
        %v2565 = vadd.f32 0.0, %v2564
        %v2566 = vpop.f32.mrf.mxu0
        %2567 = vmatprep.mubr.f32.mxu0 0.0
        %2568 = vmatmul.mubr.f32.gmra.mxu0 %v2374
        %v2569 = vpop.f32.mrf.mxu0
        %v2570 = vadd.f32 0.0, %v2569
        %v2571 = vpop.f32.mrf.mxu0
        %2572 = vmatprep.mubr.f32.mxu0 0.0
        %2573 = vmatmul.mubr.f32.gmra.mxu0 %v2375
        %v2574 = vpop.f32.mrf.mxu0
        %v2575 = vadd.f32 0.0, %v2574
        %v2576 = vpop.f32.mrf.mxu0
        %2577 = vmatprep.mubr.f32.mxu0 0.0
        %2578 = vmatmul.mubr.f32.gmra.mxu0 %v2376
        %v2579 = vpop.f32.mrf.mxu0
        %v2580 = vadd.f32 0.0, %v2579
        %v2581 = vpop.f32.mrf.mxu0
        %2582 = vmatprep.mubr.f32.mxu0 0.0
        %2583 = vmatmul.mubr.f32.gmra.mxu0 %v2377
        %v2584 = vpop.f32.mrf.mxu0
        %v2585 = vadd.f32 0.0, %v2584
        %v2586 = vpop.f32.mrf.mxu0
        %2587 = vmatprep.mubr.f32.mxu0 0.0
        %2588 = vmatmul.mubr.f32.gmra.mxu0 %v2378
        %v2589 = vpop.f32.mrf.mxu0
        %v2590 = vadd.f32 0.0, %v2589
        %v2591 = vpop.f32.mrf.mxu0
        %2592 = vmatprep.mubr.f32.mxu0 0.0
        %2593 = vmatmul.mubr.f32.gmra.mxu0 %v2379
        %v2594 = vpop.f32.mrf.mxu0
        %v2595 = vadd.f32 0.0, %v2594
        %v2596 = vpop.f32.mrf.mxu0
        %2597 = vmatprep.mubr.f32.mxu0 0.0
        %2598 = vmatmul.mubr.f32.gmra.mxu0 %v2380
        %v2599 = vpop.f32.mrf.mxu0
        %v2600 = vadd.f32 0.0, %v2599
        %v2601 = vpop.f32.mrf.mxu0
        %2602 = vmatprep.mubr.f32.mxu0 0.0
        %2603 = vmatmul.mubr.f32.gmra.mxu0 %v2381
        %v2604 = vpop.f32.mrf.mxu0
        %v2605 = vadd.f32 0.0, %v2604
        %v2606 = vpop.f32.mrf.mxu0
        %2607 = vmatprep.mubr.f32.mxu0 0.0
        %2608 = vmatmul.mubr.f32.gmra.mxu0 %v2382
        %v2609 = vpop.f32.mrf.mxu0
        %v2610 = vadd.f32 0.0, %v2609
        %v2611 = vpop.f32.mrf.mxu0
        %2612 = vmatprep.mubr.f32.mxu0 0.0
        %2613 = vmatmul.mubr.f32.gmra.mxu0 %v2383
        %v2614 = vpop.f32.mrf.mxu0
        %v2615 = vadd.f32 0.0, %v2614
        %v2616 = vpop.f32.mrf.mxu0
        %2617 = vmatprep.mubr.f32.mxu0 0.0
        %2618 = vmatmul.mubr.f32.gmra.mxu0 %v2384
        %v2619 = vpop.f32.mrf.mxu0
        %v2620 = vadd.f32 0.0, %v2619
        %v2621 = vpop.f32.mrf.mxu0
        %2622 = vmatprep.mubr.f32.mxu0 0.0
        %2623 = vmatmul.mubr.f32.gmra.mxu0 %v2385
        %v2624 = vpop.f32.mrf.mxu0
        %v2625 = vadd.f32 0.0, %v2624
        %v2626 = vpop.f32.mrf.mxu0
        %2627 = vdwg.mxu0
        %v2628 = vld [vmem:[%s190] sm:$0xff]
        %v2629 = vld [vmem:[%s190 + $0x8] sm:$0xff]
        %v2630 = vld [vmem:[%s190 + $0x10] sm:$0xff]
        %v2631 = vld [vmem:[%s190 + $0x18] sm:$0xff]
        %v2632 = vld [vmem:[%s190 + $0x20] sm:$0xff]
        %v2633 = vld [vmem:[%s190 + $0x28] sm:$0xff]
        %v2634 = vld [vmem:[%s190 + $0x30] sm:$0xff]
        %v2635 = vld [vmem:[%s190 + $0x38] sm:$0xff]
        %v2636 = vld [vmem:[%s190 + $0x40] sm:$0xff]
        %v2637 = vld [vmem:[%s190 + $0x48] sm:$0xff]
        %v2638 = vld [vmem:[%s190 + $0x50] sm:$0xff]
        %v2639 = vld [vmem:[%s190 + $0x58] sm:$0xff]
        %v2640 = vld [vmem:[%s190 + $0x60] sm:$0xff]
        %v2641 = vld [vmem:[%s190 + $0x68] sm:$0xff]
        %v2642 = vld [vmem:[%s190 + $0x70] sm:$0xff]
        %v2643 = vld [vmem:[%s190 + $0x78] sm:$0xff]
        %v2644 = vld [vmem:[%s190 + $0x80] sm:$0xff]
        %v2645 = vld [vmem:[%s190 + $0x88] sm:$0xff]
        %v2646 = vld [vmem:[%s190 + $0x90] sm:$0xff]
        %v2647 = vld [vmem:[%s190 + $0x98] sm:$0xff]
        %v2648 = vld [vmem:[%s190 + $0xa0] sm:$0xff]
        %v2649 = vld [vmem:[%s190 + $0xa8] sm:$0xff]
        %v2650 = vld [vmem:[%s190 + $0xb0] sm:$0xff]
        %v2651 = vld [vmem:[%s190 + $0xb8] sm:$0xff]
        %v2652 = vld [vmem:[%s190 + $0xc0] sm:$0xff]
        %v2653 = vld [vmem:[%s190 + $0xc8] sm:$0xff]
        %v2654 = vld [vmem:[%s190 + $0xd0] sm:$0xff]
        %v2655 = vld [vmem:[%s190 + $0xd8] sm:$0xff]
        %v2656 = vld [vmem:[%s190 + $0xe0] sm:$0xff]
        %v2657 = vld [vmem:[%s190 + $0xe8] sm:$0xff]
        %v2658 = vld [vmem:[%s190 + $0xf0] sm:$0xff]
        %v2659 = vld [vmem:[%s190 + $0xf8] sm:$0xff]
        %v2660 = vadd.f32 %v2628, %v2470
        %v2661 = vadd.f32 %v2629, %v2475
        %v2662 = vadd.f32 %v2630, %v2480
        %v2663 = vadd.f32 %v2631, %v2485
        %v2664 = vadd.f32 %v2632, %v2490
        %v2665 = vadd.f32 %v2633, %v2495
        %v2666 = vadd.f32 %v2634, %v2500
        %v2667 = vadd.f32 %v2635, %v2505
        %v2668 = vadd.f32 %v2636, %v2510
        %v2669 = vadd.f32 %v2637, %v2515
        %v2670 = vadd.f32 %v2638, %v2520
        %v2671 = vadd.f32 %v2639, %v2525
        %v2672 = vadd.f32 %v2640, %v2530
        %v2673 = vadd.f32 %v2641, %v2535
        %v2674 = vadd.f32 %v2642, %v2540
        %v2675 = vadd.f32 %v2643, %v2545
        %v2676 = vadd.f32 %v2644, %v2550
        %v2677 = vadd.f32 %v2645, %v2555
        %v2678 = vadd.f32 %v2646, %v2560
        %v2679 = vadd.f32 %v2647, %v2565
        %v2680 = vadd.f32 %v2648, %v2570
        %v2681 = vadd.f32 %v2649, %v2575
        %v2682 = vadd.f32 %v2650, %v2580
        %v2683 = vadd.f32 %v2651, %v2585
        %v2684 = vadd.f32 %v2652, %v2590
        %v2685 = vadd.f32 %v2653, %v2595
        %v2686 = vadd.f32 %v2654, %v2600
        %v2687 = vadd.f32 %v2655, %v2605
        %v2688 = vadd.f32 %v2656, %v2610
        %v2689 = vadd.f32 %v2657, %v2615
        %v2690 = vadd.f32 %v2658, %v2620
        %v2691 = vadd.f32 %v2659, %v2625
        %2692 = vst [vmem:[%s190] sm:$0xff] %v2660
        %2693 = vst [vmem:[%s190 + $0x8] sm:$0xff] %v2661
        %2694 = vst [vmem:[%s190 + $0x10] sm:$0xff] %v2662
        %2695 = vst [vmem:[%s190 + $0x18] sm:$0xff] %v2663
        %2696 = vst [vmem:[%s190 + $0x20] sm:$0xff] %v2664
        %2697 = vst [vmem:[%s190 + $0x28] sm:$0xff] %v2665
        %2698 = vst [vmem:[%s190 + $0x30] sm:$0xff] %v2666
        %2699 = vst [vmem:[%s190 + $0x38] sm:$0xff] %v2667
        %2700 = vst [vmem:[%s190 + $0x40] sm:$0xff] %v2668
        %2701 = vst [vmem:[%s190 + $0x48] sm:$0xff] %v2669
        %2702 = vst [vmem:[%s190 + $0x50] sm:$0xff] %v2670
        %2703 = vst [vmem:[%s190 + $0x58] sm:$0xff] %v2671
        %2704 = vst [vmem:[%s190 + $0x60] sm:$0xff] %v2672
        %2705 = vst [vmem:[%s190 + $0x68] sm:$0xff] %v2673
        %2706 = vst [vmem:[%s190 + $0x70] sm:$0xff] %v2674
        %2707 = vst [vmem:[%s190 + $0x78] sm:$0xff] %v2675
        %2708 = vst [vmem:[%s190 + $0x80] sm:$0xff] %v2676
        %2709 = vst [vmem:[%s190 + $0x88] sm:$0xff] %v2677
        %2710 = vst [vmem:[%s190 + $0x90] sm:$0xff] %v2678
        %2711 = vst [vmem:[%s190 + $0x98] sm:$0xff] %v2679
        %2712 = vst [vmem:[%s190 + $0xa0] sm:$0xff] %v2680
        %2713 = vst [vmem:[%s190 + $0xa8] sm:$0xff] %v2681
        %2714 = vst [vmem:[%s190 + $0xb0] sm:$0xff] %v2682
        %2715 = vst [vmem:[%s190 + $0xb8] sm:$0xff] %v2683
        %2716 = vst [vmem:[%s190 + $0xc0] sm:$0xff] %v2684
        %2717 = vst [vmem:[%s190 + $0xc8] sm:$0xff] %v2685
        %2718 = vst [vmem:[%s190 + $0xd0] sm:$0xff] %v2686
        %2719 = vst [vmem:[%s190 + $0xd8] sm:$0xff] %v2687
        %2720 = vst [vmem:[%s190 + $0xe0] sm:$0xff] %v2688
        %2721 = vst [vmem:[%s190 + $0xe8] sm:$0xff] %v2689
        %2722 = vst [vmem:[%s190 + $0xf0] sm:$0xff] %v2690
        %2723 = vst [vmem:[%s190 + $0xf8] sm:$0xff] %v2691
        %v2724 = vld [vmem:[%s2353 + $0x1] sm:$0xff]
        %v2725 = vld [vmem:[%s2353 + $0x9] sm:$0xff]
        %v2726 = vld [vmem:[%s2353 + $0x19] sm:$0xff]
        %v2727 = vld [vmem:[%s2353 + $0x21] sm:$0xff]
        %v2728 = vld [vmem:[%s2353 + $0x31] sm:$0xff]
        %v2729 = vld [vmem:[%s2353 + $0x39] sm:$0xff]
        %v2730 = vld [vmem:[%s2353 + $0x49] sm:$0xff]
        %v2731 = vld [vmem:[%s2353 + $0x51] sm:$0xff]
        %v2732 = vld [vmem:[%s2353 + $0x61] sm:$0xff]
        %v2733 = vld [vmem:[%s2353 + $0x69] sm:$0xff]
        %v2734 = vld [vmem:[%s2353 + $0x79] sm:$0xff]
        %v2735 = vld [vmem:[%s2353 + $0x81] sm:$0xff]
        %v2736 = vld [vmem:[%s2353 + $0x91] sm:$0xff]
        %v2737 = vld [vmem:[%s2353 + $0x99] sm:$0xff]
        %v2738 = vld [vmem:[%s2353 + $0xa9] sm:$0xff]
        %v2739 = vld [vmem:[%s2353 + $0xb1] sm:$0xff]
        %v2740 = vld [vmem:[%s2353 + $0xc1] sm:$0xff]
        %v2741 = vld [vmem:[%s2353 + $0xc9] sm:$0xff]
        %v2742 = vld [vmem:[%s2353 + $0xd9] sm:$0xff]
        %v2743 = vld [vmem:[%s2353 + $0xe1] sm:$0xff]
        %v2744 = vld [vmem:[%s2353 + $0xf1] sm:$0xff]
        %v2745 = vld [vmem:[%s2353 + $0xf9] sm:$0xff]
        %v2746 = vld [vmem:[%s2353 + $0x109] sm:$0xff]
        %v2747 = vld [vmem:[%s2353 + $0x111] sm:$0xff]
        %v2748 = vld [vmem:[%s2353 + $0x121] sm:$0xff]
        %v2749 = vld [vmem:[%s2353 + $0x129] sm:$0xff]
        %v2750 = vld [vmem:[%s2353 + $0x139] sm:$0xff]
        %v2751 = vld [vmem:[%s2353 + $0x141] sm:$0xff]
        %v2752 = vld [vmem:[%s2353 + $0x151] sm:$0xff]
        %v2753 = vld [vmem:[%s2353 + $0x159] sm:$0xff]
        %v2754 = vld [vmem:[%s2353 + $0x169] sm:$0xff]
        %v2755 = vld [vmem:[%s2353 + $0x171] sm:$0xff]
        %s2756 = scalar_lea.vmem %s1, 896
        %v2757 = vld [vmem:[%s2756] sm:$0xff]
        %v2758 = vld [vmem:[%s2756 + $0x8] sm:$0xff]
        %v2759 = vld [vmem:[%s2756 + $0x10] sm:$0xff]
        %v2760 = vld [vmem:[%s2756 + $0x18] sm:$0xff]
        %v2761 = vld [vmem:[%s2756 + $0x20] sm:$0xff]
        %v2762 = vld [vmem:[%s2756 + $0x28] sm:$0xff]
        %v2763 = vld [vmem:[%s2756 + $0x30] sm:$0xff]
        %v2764 = vld [vmem:[%s2756 + $0x38] sm:$0xff]
        %v2765 = vld [vmem:[%s2756 + $0x40] sm:$0xff]
        %v2766 = vld [vmem:[%s2756 + $0x48] sm:$0xff]
        %v2767 = vld [vmem:[%s2756 + $0x50] sm:$0xff]
        %v2768 = vld [vmem:[%s2756 + $0x58] sm:$0xff]
        %v2769 = vld [vmem:[%s2756 + $0x60] sm:$0xff]
        %v2770 = vld [vmem:[%s2756 + $0x68] sm:$0xff]
        %v2771 = vld [vmem:[%s2756 + $0x70] sm:$0xff]
        %v2772 = vld [vmem:[%s2756 + $0x78] sm:$0xff]
        %2773 = vmatprep.subr.mxu0 0.0
        %2774 = vmatpush1.msra.mxu0 %v2772
        %2775 = vmatprep.subr.mxu0 0.0
        %2776 = vmatpush1.msra.mxu0 %v2771
        %2777 = vmatprep.subr.mxu0 0.0
        %2778 = vmatpush1.msra.mxu0 %v2770
        %2779 = vmatprep.subr.mxu0 0.0
        %2780 = vmatpush1.msra.mxu0 %v2769
        %2781 = vmatprep.subr.mxu0 0.0
        %2782 = vmatpush1.msra.mxu0 %v2768
        %2783 = vmatprep.subr.mxu0 0.0
        %2784 = vmatpush1.msra.mxu0 %v2767
        %2785 = vmatprep.subr.mxu0 0.0
        %2786 = vmatpush1.msra.mxu0 %v2766
        %2787 = vmatprep.subr.mxu0 0.0
        %2788 = vmatpush1.msra.mxu0 %v2765
        %2789 = vmatprep.subr.mxu0 0.0
        %2790 = vmatpush1.msra.mxu0 %v2764
        %2791 = vmatprep.subr.mxu0 0.0
        %2792 = vmatpush1.msra.mxu0 %v2763
        %2793 = vmatprep.subr.mxu0 0.0
        %2794 = vmatpush1.msra.mxu0 %v2762
        %2795 = vmatprep.subr.mxu0 0.0
        %2796 = vmatpush1.msra.mxu0 %v2761
        %2797 = vmatprep.subr.mxu0 0.0
        %2798 = vmatpush1.msra.mxu0 %v2760
        %2799 = vmatprep.subr.mxu0 0.0
        %2800 = vmatpush1.msra.mxu0 %v2759
        %2801 = vmatprep.subr.mxu0 0.0
        %2802 = vmatpush1.msra.mxu0 %v2758
        %2803 = vmatprep.subr.mxu0 0.0
        %2804 = vmatpush1.msra.mxu0 %v2757
        %2805 = vmatprep.subr.mxu0 0.0
        %2806 = vmatpush2.msra.mxu0 0.0
        %2807 = vmatprep.subr.mxu0 0.0
        %2808 = vmatpush2.msra.mxu0 0.0
        %2809 = vmatprep.subr.mxu0 0.0
        %2810 = vmatpush2.msra.mxu0 0.0
        %2811 = vmatprep.subr.mxu0 0.0
        %2812 = vmatpush2.msra.mxu0 0.0
        %2813 = vmatprep.subr.mxu0 0.0
        %2814 = vmatpush2.msra.mxu0 0.0
        %2815 = vmatprep.subr.mxu0 0.0
        %2816 = vmatpush2.msra.mxu0 0.0
        %2817 = vmatprep.subr.mxu0 0.0
        %2818 = vmatpush2.msra.mxu0 0.0
        %2819 = vmatprep.subr.mxu0 0.0
        %2820 = vmatpush2.msra.mxu0 0.0
        %2821 = vmatprep.subr.mxu0 0.0
        %2822 = vmatpush2.msra.mxu0 0.0
        %2823 = vmatprep.subr.mxu0 0.0
        %2824 = vmatpush2.msra.mxu0 0.0
        %2825 = vmatprep.subr.mxu0 0.0
        %2826 = vmatpush2.msra.mxu0 0.0
        %2827 = vmatprep.subr.mxu0 0.0
        %2828 = vmatpush2.msra.mxu0 0.0
        %2829 = vmatprep.subr.mxu0 0.0
        %2830 = vmatpush2.msra.mxu0 0.0
        %2831 = vmatprep.subr.mxu0 0.0
        %2832 = vmatpush2.msra.mxu0 0.0
        %2833 = vmatprep.subr.mxu0 0.0
        %2834 = vmatpush2.msra.mxu0 0.0
        %2835 = vmatprep.subr.mxu0 0.0
        %2836 = vmatpush2.msra.mxu0 0.0
        %2837 = vmatprep.mubr.f32.mxu0 0.0
        %2838 = vmatmul.mubr.f32.gmra.mxu0 %v2724
        %v2839 = vpop.f32.mrf.mxu0
        %v2840 = vadd.f32 0.0, %v2839
        %v2841 = vpop.f32.mrf.mxu0
        %2842 = vmatprep.mubr.f32.mxu0 0.0
        %2843 = vmatmul.mubr.f32.gmra.mxu0 %v2725
        %v2844 = vpop.f32.mrf.mxu0
        %v2845 = vadd.f32 0.0, %v2844
        %v2846 = vpop.f32.mrf.mxu0
        %2847 = vmatprep.mubr.f32.mxu0 0.0
        %2848 = vmatmul.mubr.f32.gmra.mxu0 %v2726
        %v2849 = vpop.f32.mrf.mxu0
        %v2850 = vadd.f32 0.0, %v2849
        %v2851 = vpop.f32.mrf.mxu0
        %2852 = vmatprep.mubr.f32.mxu0 0.0
        %2853 = vmatmul.mubr.f32.gmra.mxu0 %v2727
        %v2854 = vpop.f32.mrf.mxu0
        %v2855 = vadd.f32 0.0, %v2854
        %v2856 = vpop.f32.mrf.mxu0
        %2857 = vmatprep.mubr.f32.mxu0 0.0
        %2858 = vmatmul.mubr.f32.gmra.mxu0 %v2728
        %v2859 = vpop.f32.mrf.mxu0
        %v2860 = vadd.f32 0.0, %v2859
        %v2861 = vpop.f32.mrf.mxu0
        %2862 = vmatprep.mubr.f32.mxu0 0.0
        %2863 = vmatmul.mubr.f32.gmra.mxu0 %v2729
        %v2864 = vpop.f32.mrf.mxu0
        %v2865 = vadd.f32 0.0, %v2864
        %v2866 = vpop.f32.mrf.mxu0
        %2867 = vmatprep.mubr.f32.mxu0 0.0
        %2868 = vmatmul.mubr.f32.gmra.mxu0 %v2730
        %v2869 = vpop.f32.mrf.mxu0
        %v2870 = vadd.f32 0.0, %v2869
        %v2871 = vpop.f32.mrf.mxu0
        %2872 = vmatprep.mubr.f32.mxu0 0.0
        %2873 = vmatmul.mubr.f32.gmra.mxu0 %v2731
        %v2874 = vpop.f32.mrf.mxu0
        %v2875 = vadd.f32 0.0, %v2874
        %v2876 = vpop.f32.mrf.mxu0
        %2877 = vmatprep.mubr.f32.mxu0 0.0
        %2878 = vmatmul.mubr.f32.gmra.mxu0 %v2732
        %v2879 = vpop.f32.mrf.mxu0
        %v2880 = vadd.f32 0.0, %v2879
        %v2881 = vpop.f32.mrf.mxu0
        %2882 = vmatprep.mubr.f32.mxu0 0.0
        %2883 = vmatmul.mubr.f32.gmra.mxu0 %v2733
        %v2884 = vpop.f32.mrf.mxu0
        %v2885 = vadd.f32 0.0, %v2884
        %v2886 = vpop.f32.mrf.mxu0
        %2887 = vmatprep.mubr.f32.mxu0 0.0
        %2888 = vmatmul.mubr.f32.gmra.mxu0 %v2734
        %v2889 = vpop.f32.mrf.mxu0
        %v2890 = vadd.f32 0.0, %v2889
        %v2891 = vpop.f32.mrf.mxu0
        %2892 = vmatprep.mubr.f32.mxu0 0.0
        %2893 = vmatmul.mubr.f32.gmra.mxu0 %v2735
        %v2894 = vpop.f32.mrf.mxu0
        %v2895 = vadd.f32 0.0, %v2894
        %v2896 = vpop.f32.mrf.mxu0
        %2897 = vmatprep.mubr.f32.mxu0 0.0
        %2898 = vmatmul.mubr.f32.gmra.mxu0 %v2736
        %v2899 = vpop.f32.mrf.mxu0
        %v2900 = vadd.f32 0.0, %v2899
        %v2901 = vpop.f32.mrf.mxu0
        %2902 = vmatprep.mubr.f32.mxu0 0.0
        %2903 = vmatmul.mubr.f32.gmra.mxu0 %v2737
        %v2904 = vpop.f32.mrf.mxu0
        %v2905 = vadd.f32 0.0, %v2904
        %v2906 = vpop.f32.mrf.mxu0
        %2907 = vmatprep.mubr.f32.mxu0 0.0
        %2908 = vmatmul.mubr.f32.gmra.mxu0 %v2738
        %v2909 = vpop.f32.mrf.mxu0
        %v2910 = vadd.f32 0.0, %v2909
        %v2911 = vpop.f32.mrf.mxu0
        %2912 = vmatprep.mubr.f32.mxu0 0.0
        %2913 = vmatmul.mubr.f32.gmra.mxu0 %v2739
        %v2914 = vpop.f32.mrf.mxu0
        %v2915 = vadd.f32 0.0, %v2914
        %v2916 = vpop.f32.mrf.mxu0
        %2917 = vmatprep.mubr.f32.mxu0 0.0
        %2918 = vmatmul.mubr.f32.gmra.mxu0 %v2740
        %v2919 = vpop.f32.mrf.mxu0
        %v2920 = vadd.f32 0.0, %v2919
        %v2921 = vpop.f32.mrf.mxu0
        %2922 = vmatprep.mubr.f32.mxu0 0.0
        %2923 = vmatmul.mubr.f32.gmra.mxu0 %v2741
        %v2924 = vpop.f32.mrf.mxu0
        %v2925 = vadd.f32 0.0, %v2924
        %v2926 = vpop.f32.mrf.mxu0
        %2927 = vmatprep.mubr.f32.mxu0 0.0
        %2928 = vmatmul.mubr.f32.gmra.mxu0 %v2742
        %v2929 = vpop.f32.mrf.mxu0
        %v2930 = vadd.f32 0.0, %v2929
        %v2931 = vpop.f32.mrf.mxu0
        %2932 = vmatprep.mubr.f32.mxu0 0.0
        %2933 = vmatmul.mubr.f32.gmra.mxu0 %v2743
        %v2934 = vpop.f32.mrf.mxu0
        %v2935 = vadd.f32 0.0, %v2934
        %v2936 = vpop.f32.mrf.mxu0
        %2937 = vmatprep.mubr.f32.mxu0 0.0
        %2938 = vmatmul.mubr.f32.gmra.mxu0 %v2744
        %v2939 = vpop.f32.mrf.mxu0
        %v2940 = vadd.f32 0.0, %v2939
        %v2941 = vpop.f32.mrf.mxu0
        %2942 = vmatprep.mubr.f32.mxu0 0.0
        %2943 = vmatmul.mubr.f32.gmra.mxu0 %v2745
        %v2944 = vpop.f32.mrf.mxu0
        %v2945 = vadd.f32 0.0, %v2944
        %v2946 = vpop.f32.mrf.mxu0
        %2947 = vmatprep.mubr.f32.mxu0 0.0
        %2948 = vmatmul.mubr.f32.gmra.mxu0 %v2746
        %v2949 = vpop.f32.mrf.mxu0
        %v2950 = vadd.f32 0.0, %v2949
        %v2951 = vpop.f32.mrf.mxu0
        %2952 = vmatprep.mubr.f32.mxu0 0.0
        %2953 = vmatmul.mubr.f32.gmra.mxu0 %v2747
        %v2954 = vpop.f32.mrf.mxu0
        %v2955 = vadd.f32 0.0, %v2954
        %v2956 = vpop.f32.mrf.mxu0
        %2957 = vmatprep.mubr.f32.mxu0 0.0
        %2958 = vmatmul.mubr.f32.gmra.mxu0 %v2748
        %v2959 = vpop.f32.mrf.mxu0
        %v2960 = vadd.f32 0.0, %v2959
        %v2961 = vpop.f32.mrf.mxu0
        %2962 = vmatprep.mubr.f32.mxu0 0.0
        %2963 = vmatmul.mubr.f32.gmra.mxu0 %v2749
        %v2964 = vpop.f32.mrf.mxu0
        %v2965 = vadd.f32 0.0, %v2964
        %v2966 = vpop.f32.mrf.mxu0
        %2967 = vmatprep.mubr.f32.mxu0 0.0
        %2968 = vmatmul.mubr.f32.gmra.mxu0 %v2750
        %v2969 = vpop.f32.mrf.mxu0
        %v2970 = vadd.f32 0.0, %v2969
        %v2971 = vpop.f32.mrf.mxu0
        %2972 = vmatprep.mubr.f32.mxu0 0.0
        %2973 = vmatmul.mubr.f32.gmra.mxu0 %v2751
        %v2974 = vpop.f32.mrf.mxu0
        %v2975 = vadd.f32 0.0, %v2974
        %v2976 = vpop.f32.mrf.mxu0
        %2977 = vmatprep.mubr.f32.mxu0 0.0
        %2978 = vmatmul.mubr.f32.gmra.mxu0 %v2752
        %v2979 = vpop.f32.mrf.mxu0
        %v2980 = vadd.f32 0.0, %v2979
        %v2981 = vpop.f32.mrf.mxu0
        %2982 = vmatprep.mubr.f32.mxu0 0.0
        %2983 = vmatmul.mubr.f32.gmra.mxu0 %v2753
        %v2984 = vpop.f32.mrf.mxu0
        %v2985 = vadd.f32 0.0, %v2984
        %v2986 = vpop.f32.mrf.mxu0
        %2987 = vmatprep.mubr.f32.mxu0 0.0
        %2988 = vmatmul.mubr.f32.gmra.mxu0 %v2754
        %v2989 = vpop.f32.mrf.mxu0
        %v2990 = vadd.f32 0.0, %v2989
        %v2991 = vpop.f32.mrf.mxu0
        %2992 = vmatprep.mubr.f32.mxu0 0.0
        %2993 = vmatmul.mubr.f32.gmra.mxu0 %v2755
        %v2994 = vpop.f32.mrf.mxu0
        %v2995 = vadd.f32 0.0, %v2994
        %v2996 = vpop.f32.mrf.mxu0
        %2997 = vdwg.mxu0
        %v2998 = vld [vmem:[%s190] sm:$0xff]
        %v2999 = vld [vmem:[%s190 + $0x8] sm:$0xff]
        %v3000 = vld [vmem:[%s190 + $0x10] sm:$0xff]
        %v3001 = vld [vmem:[%s190 + $0x18] sm:$0xff]
        %v3002 = vld [vmem:[%s190 + $0x20] sm:$0xff]
        %v3003 = vld [vmem:[%s190 + $0x28] sm:$0xff]
        %v3004 = vld [vmem:[%s190 + $0x30] sm:$0xff]
        %v3005 = vld [vmem:[%s190 + $0x38] sm:$0xff]
        %v3006 = vld [vmem:[%s190 + $0x40] sm:$0xff]
        %v3007 = vld [vmem:[%s190 + $0x48] sm:$0xff]
        %v3008 = vld [vmem:[%s190 + $0x50] sm:$0xff]
        %v3009 = vld [vmem:[%s190 + $0x58] sm:$0xff]
        %v3010 = vld [vmem:[%s190 + $0x60] sm:$0xff]
        %v3011 = vld [vmem:[%s190 + $0x68] sm:$0xff]
        %v3012 = vld [vmem:[%s190 + $0x70] sm:$0xff]
        %v3013 = vld [vmem:[%s190 + $0x78] sm:$0xff]
        %v3014 = vld [vmem:[%s190 + $0x80] sm:$0xff]
        %v3015 = vld [vmem:[%s190 + $0x88] sm:$0xff]
        %v3016 = vld [vmem:[%s190 + $0x90] sm:$0xff]
        %v3017 = vld [vmem:[%s190 + $0x98] sm:$0xff]
        %v3018 = vld [vmem:[%s190 + $0xa0] sm:$0xff]
        %v3019 = vld [vmem:[%s190 + $0xa8] sm:$0xff]
        %v3020 = vld [vmem:[%s190 + $0xb0] sm:$0xff]
        %v3021 = vld [vmem:[%s190 + $0xb8] sm:$0xff]
        %v3022 = vld [vmem:[%s190 + $0xc0] sm:$0xff]
        %v3023 = vld [vmem:[%s190 + $0xc8] sm:$0xff]
        %v3024 = vld [vmem:[%s190 + $0xd0] sm:$0xff]
        %v3025 = vld [vmem:[%s190 + $0xd8] sm:$0xff]
        %v3026 = vld [vmem:[%s190 + $0xe0] sm:$0xff]
        %v3027 = vld [vmem:[%s190 + $0xe8] sm:$0xff]
        %v3028 = vld [vmem:[%s190 + $0xf0] sm:$0xff]
        %v3029 = vld [vmem:[%s190 + $0xf8] sm:$0xff]
        %v3030 = vadd.f32 %v2998, %v2840
        %v3031 = vadd.f32 %v2999, %v2845
        %v3032 = vadd.f32 %v3000, %v2850
        %v3033 = vadd.f32 %v3001, %v2855
        %v3034 = vadd.f32 %v3002, %v2860
        %v3035 = vadd.f32 %v3003, %v2865
        %v3036 = vadd.f32 %v3004, %v2870
        %v3037 = vadd.f32 %v3005, %v2875
        %v3038 = vadd.f32 %v3006, %v2880
        %v3039 = vadd.f32 %v3007, %v2885
        %v3040 = vadd.f32 %v3008, %v2890
        %v3041 = vadd.f32 %v3009, %v2895
        %v3042 = vadd.f32 %v3010, %v2900
        %v3043 = vadd.f32 %v3011, %v2905
        %v3044 = vadd.f32 %v3012, %v2910
        %v3045 = vadd.f32 %v3013, %v2915
        %v3046 = vadd.f32 %v3014, %v2920
        %v3047 = vadd.f32 %v3015, %v2925
        %v3048 = vadd.f32 %v3016, %v2930
        %v3049 = vadd.f32 %v3017, %v2935
        %v3050 = vadd.f32 %v3018, %v2940
        %v3051 = vadd.f32 %v3019, %v2945
        %v3052 = vadd.f32 %v3020, %v2950
        %v3053 = vadd.f32 %v3021, %v2955
        %v3054 = vadd.f32 %v3022, %v2960
        %v3055 = vadd.f32 %v3023, %v2965
        %v3056 = vadd.f32 %v3024, %v2970
        %v3057 = vadd.f32 %v3025, %v2975
        %v3058 = vadd.f32 %v3026, %v2980
        %v3059 = vadd.f32 %v3027, %v2985
        %v3060 = vadd.f32 %v3028, %v2990
        %v3061 = vadd.f32 %v3029, %v2995
        %3062 = vst [vmem:[%s190] sm:$0xff] %v3030
        %3063 = vst [vmem:[%s190 + $0x8] sm:$0xff] %v3031
        %3064 = vst [vmem:[%s190 + $0x10] sm:$0xff] %v3032
        %3065 = vst [vmem:[%s190 + $0x18] sm:$0xff] %v3033
        %3066 = vst [vmem:[%s190 + $0x20] sm:$0xff] %v3034
        %3067 = vst [vmem:[%s190 + $0x28] sm:$0xff] %v3035
        %3068 = vst [vmem:[%s190 + $0x30] sm:$0xff] %v3036
        %3069 = vst [vmem:[%s190 + $0x38] sm:$0xff] %v3037
        %3070 = vst [vmem:[%s190 + $0x40] sm:$0xff] %v3038
        %3071 = vst [vmem:[%s190 + $0x48] sm:$0xff] %v3039
        %3072 = vst [vmem:[%s190 + $0x50] sm:$0xff] %v3040
        %3073 = vst [vmem:[%s190 + $0x58] sm:$0xff] %v3041
        %3074 = vst [vmem:[%s190 + $0x60] sm:$0xff] %v3042
        %3075 = vst [vmem:[%s190 + $0x68] sm:$0xff] %v3043
        %3076 = vst [vmem:[%s190 + $0x70] sm:$0xff] %v3044
        %3077 = vst [vmem:[%s190 + $0x78] sm:$0xff] %v3045
        %3078 = vst [vmem:[%s190 + $0x80] sm:$0xff] %v3046
        %3079 = vst [vmem:[%s190 + $0x88] sm:$0xff] %v3047
        %3080 = vst [vmem:[%s190 + $0x90] sm:$0xff] %v3048
        %3081 = vst [vmem:[%s190 + $0x98] sm:$0xff] %v3049
        %3082 = vst [vmem:[%s190 + $0xa0] sm:$0xff] %v3050
        %3083 = vst [vmem:[%s190 + $0xa8] sm:$0xff] %v3051
        %3084 = vst [vmem:[%s190 + $0xb0] sm:$0xff] %v3052
        %3085 = vst [vmem:[%s190 + $0xb8] sm:$0xff] %v3053
        %3086 = vst [vmem:[%s190 + $0xc0] sm:$0xff] %v3054
        %3087 = vst [vmem:[%s190 + $0xc8] sm:$0xff] %v3055
        %3088 = vst [vmem:[%s190 + $0xd0] sm:$0xff] %v3056
        %3089 = vst [vmem:[%s190 + $0xd8] sm:$0xff] %v3057
        %3090 = vst [vmem:[%s190 + $0xe0] sm:$0xff] %v3058
        %3091 = vst [vmem:[%s190 + $0xe8] sm:$0xff] %v3059
        %3092 = vst [vmem:[%s190 + $0xf0] sm:$0xff] %v3060
        %3093 = vst [vmem:[%s190 + $0xf8] sm:$0xff] %v3061
        %v3094 = vld [vmem:[%s2353 + $0x2] sm:$0xff]
        %v3095 = vld [vmem:[%s2353 + $0xa] sm:$0xff]
        %v3096 = vld [vmem:[%s2353 + $0x1a] sm:$0xff]
        %v3097 = vld [vmem:[%s2353 + $0x22] sm:$0xff]
        %v3098 = vld [vmem:[%s2353 + $0x32] sm:$0xff]
        %v3099 = vld [vmem:[%s2353 + $0x3a] sm:$0xff]
        %v3100 = vld [vmem:[%s2353 + $0x4a] sm:$0xff]
        %v3101 = vld [vmem:[%s2353 + $0x52] sm:$0xff]
        %v3102 = vld [vmem:[%s2353 + $0x62] sm:$0xff]
        %v3103 = vld [vmem:[%s2353 + $0x6a] sm:$0xff]
        %v3104 = vld [vmem:[%s2353 + $0x7a] sm:$0xff]
        %v3105 = vld [vmem:[%s2353 + $0x82] sm:$0xff]
        %v3106 = vld [vmem:[%s2353 + $0x92] sm:$0xff]
        %v3107 = vld [vmem:[%s2353 + $0x9a] sm:$0xff]
        %v3108 = vld [vmem:[%s2353 + $0xaa] sm:$0xff]
        %v3109 = vld [vmem:[%s2353 + $0xb2] sm:$0xff]
        %v3110 = vld [vmem:[%s2353 + $0xc2] sm:$0xff]
        %v3111 = vld [vmem:[%s2353 + $0xca] sm:$0xff]
        %v3112 = vld [vmem:[%s2353 + $0xda] sm:$0xff]
        %v3113 = vld [vmem:[%s2353 + $0xe2] sm:$0xff]
        %v3114 = vld [vmem:[%s2353 + $0xf2] sm:$0xff]
        %v3115 = vld [vmem:[%s2353 + $0xfa] sm:$0xff]
        %v3116 = vld [vmem:[%s2353 + $0x10a] sm:$0xff]
        %v3117 = vld [vmem:[%s2353 + $0x112] sm:$0xff]
        %v3118 = vld [vmem:[%s2353 + $0x122] sm:$0xff]
        %v3119 = vld [vmem:[%s2353 + $0x12a] sm:$0xff]
        %v3120 = vld [vmem:[%s2353 + $0x13a] sm:$0xff]
        %v3121 = vld [vmem:[%s2353 + $0x142] sm:$0xff]
        %v3122 = vld [vmem:[%s2353 + $0x152] sm:$0xff]
        %v3123 = vld [vmem:[%s2353 + $0x15a] sm:$0xff]
        %v3124 = vld [vmem:[%s2353 + $0x16a] sm:$0xff]
        %v3125 = vld [vmem:[%s2353 + $0x172] sm:$0xff]
        %s3126 = scalar_lea.vmem %s1, 1024
        %v3127 = vld [vmem:[%s3126] sm:$0xff]
        %v3128 = vld [vmem:[%s3126 + $0x8] sm:$0xff]
        %v3129 = vld [vmem:[%s3126 + $0x10] sm:$0xff]
        %v3130 = vld [vmem:[%s3126 + $0x18] sm:$0xff]
        %v3131 = vld [vmem:[%s3126 + $0x20] sm:$0xff]
        %v3132 = vld [vmem:[%s3126 + $0x28] sm:$0xff]
        %v3133 = vld [vmem:[%s3126 + $0x30] sm:$0xff]
        %v3134 = vld [vmem:[%s3126 + $0x38] sm:$0xff]
        %v3135 = vld [vmem:[%s3126 + $0x40] sm:$0xff]
        %v3136 = vld [vmem:[%s3126 + $0x48] sm:$0xff]
        %v3137 = vld [vmem:[%s3126 + $0x50] sm:$0xff]
        %v3138 = vld [vmem:[%s3126 + $0x58] sm:$0xff]
        %v3139 = vld [vmem:[%s3126 + $0x60] sm:$0xff]
        %v3140 = vld [vmem:[%s3126 + $0x68] sm:$0xff]
        %v3141 = vld [vmem:[%s3126 + $0x70] sm:$0xff]
        %v3142 = vld [vmem:[%s3126 + $0x78] sm:$0xff]
        %3143 = vmatprep.subr.mxu0 0.0
        %3144 = vmatpush1.msra.mxu0 %v3142
        %3145 = vmatprep.subr.mxu0 0.0
        %3146 = vmatpush1.msra.mxu0 %v3141
        %3147 = vmatprep.subr.mxu0 0.0
        %3148 = vmatpush1.msra.mxu0 %v3140
        %3149 = vmatprep.subr.mxu0 0.0
        %3150 = vmatpush1.msra.mxu0 %v3139
        %3151 = vmatprep.subr.mxu0 0.0
        %3152 = vmatpush1.msra.mxu0 %v3138
        %3153 = vmatprep.subr.mxu0 0.0
        %3154 = vmatpush1.msra.mxu0 %v3137
        %3155 = vmatprep.subr.mxu0 0.0
        %3156 = vmatpush1.msra.mxu0 %v3136
        %3157 = vmatprep.subr.mxu0 0.0
        %3158 = vmatpush1.msra.mxu0 %v3135
        %3159 = vmatprep.subr.mxu0 0.0
        %3160 = vmatpush1.msra.mxu0 %v3134
        %3161 = vmatprep.subr.mxu0 0.0
        %3162 = vmatpush1.msra.mxu0 %v3133
        %3163 = vmatprep.subr.mxu0 0.0
        %3164 = vmatpush1.msra.mxu0 %v3132
        %3165 = vmatprep.subr.mxu0 0.0
        %3166 = vmatpush1.msra.mxu0 %v3131
        %3167 = vmatprep.subr.mxu0 0.0
        %3168 = vmatpush1.msra.mxu0 %v3130
        %3169 = vmatprep.subr.mxu0 0.0
        %3170 = vmatpush1.msra.mxu0 %v3129
        %3171 = vmatprep.subr.mxu0 0.0
        %3172 = vmatpush1.msra.mxu0 %v3128
        %3173 = vmatprep.subr.mxu0 0.0
        %3174 = vmatpush1.msra.mxu0 %v3127
        %3175 = vmatprep.subr.mxu0 0.0
        %3176 = vmatpush2.msra.mxu0 0.0
        %3177 = vmatprep.subr.mxu0 0.0
        %3178 = vmatpush2.msra.mxu0 0.0
        %3179 = vmatprep.subr.mxu0 0.0
        %3180 = vmatpush2.msra.mxu0 0.0
        %3181 = vmatprep.subr.mxu0 0.0
        %3182 = vmatpush2.msra.mxu0 0.0
        %3183 = vmatprep.subr.mxu0 0.0
        %3184 = vmatpush2.msra.mxu0 0.0
        %3185 = vmatprep.subr.mxu0 0.0
        %3186 = vmatpush2.msra.mxu0 0.0
        %3187 = vmatprep.subr.mxu0 0.0
        %3188 = vmatpush2.msra.mxu0 0.0
        %3189 = vmatprep.subr.mxu0 0.0
        %3190 = vmatpush2.msra.mxu0 0.0
        %3191 = vmatprep.subr.mxu0 0.0
        %3192 = vmatpush2.msra.mxu0 0.0
        %3193 = vmatprep.subr.mxu0 0.0
        %3194 = vmatpush2.msra.mxu0 0.0
        %3195 = vmatprep.subr.mxu0 0.0
        %3196 = vmatpush2.msra.mxu0 0.0
        %3197 = vmatprep.subr.mxu0 0.0
        %3198 = vmatpush2.msra.mxu0 0.0
        %3199 = vmatprep.subr.mxu0 0.0
        %3200 = vmatpush2.msra.mxu0 0.0
        %3201 = vmatprep.subr.mxu0 0.0
        %3202 = vmatpush2.msra.mxu0 0.0
        %3203 = vmatprep.subr.mxu0 0.0
        %3204 = vmatpush2.msra.mxu0 0.0
        %3205 = vmatprep.subr.mxu0 0.0
        %3206 = vmatpush2.msra.mxu0 0.0
        %3207 = vmatprep.mubr.f32.mxu0 0.0
        %3208 = vmatmul.mubr.f32.gmra.mxu0 %v3094
        %v3209 = vpop.f32.mrf.mxu0
        %v3210 = vadd.f32 0.0, %v3209
        %v3211 = vpop.f32.mrf.mxu0
        %3212 = vmatprep.mubr.f32.mxu0 0.0
        %3213 = vmatmul.mubr.f32.gmra.mxu0 %v3095
        %v3214 = vpop.f32.mrf.mxu0
        %v3215 = vadd.f32 0.0, %v3214
        %v3216 = vpop.f32.mrf.mxu0
        %3217 = vmatprep.mubr.f32.mxu0 0.0
        %3218 = vmatmul.mubr.f32.gmra.mxu0 %v3096
        %v3219 = vpop.f32.mrf.mxu0
        %v3220 = vadd.f32 0.0, %v3219
        %v3221 = vpop.f32.mrf.mxu0
        %3222 = vmatprep.mubr.f32.mxu0 0.0
        %3223 = vmatmul.mubr.f32.gmra.mxu0 %v3097
        %v3224 = vpop.f32.mrf.mxu0
        %v3225 = vadd.f32 0.0, %v3224
        %v3226 = vpop.f32.mrf.mxu0
        %3227 = vmatprep.mubr.f32.mxu0 0.0
        %3228 = vmatmul.mubr.f32.gmra.mxu0 %v3098
        %v3229 = vpop.f32.mrf.mxu0
        %v3230 = vadd.f32 0.0, %v3229
        %v3231 = vpop.f32.mrf.mxu0
        %3232 = vmatprep.mubr.f32.mxu0 0.0
        %3233 = vmatmul.mubr.f32.gmra.mxu0 %v3099
        %v3234 = vpop.f32.mrf.mxu0
        %v3235 = vadd.f32 0.0, %v3234
        %v3236 = vpop.f32.mrf.mxu0
        %3237 = vmatprep.mubr.f32.mxu0 0.0
        %3238 = vmatmul.mubr.f32.gmra.mxu0 %v3100
        %v3239 = vpop.f32.mrf.mxu0
        %v3240 = vadd.f32 0.0, %v3239
        %v3241 = vpop.f32.mrf.mxu0
        %3242 = vmatprep.mubr.f32.mxu0 0.0
        %3243 = vmatmul.mubr.f32.gmra.mxu0 %v3101
        %v3244 = vpop.f32.mrf.mxu0
        %v3245 = vadd.f32 0.0, %v3244
        %v3246 = vpop.f32.mrf.mxu0
        %3247 = vmatprep.mubr.f32.mxu0 0.0
        %3248 = vmatmul.mubr.f32.gmra.mxu0 %v3102
        %v3249 = vpop.f32.mrf.mxu0
        %v3250 = vadd.f32 0.0, %v3249
        %v3251 = vpop.f32.mrf.mxu0
        %3252 = vmatprep.mubr.f32.mxu0 0.0
        %3253 = vmatmul.mubr.f32.gmra.mxu0 %v3103
        %v3254 = vpop.f32.mrf.mxu0
        %v3255 = vadd.f32 0.0, %v3254
        %v3256 = vpop.f32.mrf.mxu0
        %3257 = vmatprep.mubr.f32.mxu0 0.0
        %3258 = vmatmul.mubr.f32.gmra.mxu0 %v3104
        %v3259 = vpop.f32.mrf.mxu0
        %v3260 = vadd.f32 0.0, %v3259
        %v3261 = vpop.f32.mrf.mxu0
        %3262 = vmatprep.mubr.f32.mxu0 0.0
        %3263 = vmatmul.mubr.f32.gmra.mxu0 %v3105
        %v3264 = vpop.f32.mrf.mxu0
        %v3265 = vadd.f32 0.0, %v3264
        %v3266 = vpop.f32.mrf.mxu0
        %3267 = vmatprep.mubr.f32.mxu0 0.0
        %3268 = vmatmul.mubr.f32.gmra.mxu0 %v3106
        %v3269 = vpop.f32.mrf.mxu0
        %v3270 = vadd.f32 0.0, %v3269
        %v3271 = vpop.f32.mrf.mxu0
        %3272 = vmatprep.mubr.f32.mxu0 0.0
        %3273 = vmatmul.mubr.f32.gmra.mxu0 %v3107
        %v3274 = vpop.f32.mrf.mxu0
        %v3275 = vadd.f32 0.0, %v3274
        %v3276 = vpop.f32.mrf.mxu0
        %3277 = vmatprep.mubr.f32.mxu0 0.0
        %3278 = vmatmul.mubr.f32.gmra.mxu0 %v3108
        %v3279 = vpop.f32.mrf.mxu0
        %v3280 = vadd.f32 0.0, %v3279
        %v3281 = vpop.f32.mrf.mxu0
        %3282 = vmatprep.mubr.f32.mxu0 0.0
        %3283 = vmatmul.mubr.f32.gmra.mxu0 %v3109
        %v3284 = vpop.f32.mrf.mxu0
        %v3285 = vadd.f32 0.0, %v3284
        %v3286 = vpop.f32.mrf.mxu0
        %3287 = vmatprep.mubr.f32.mxu0 0.0
        %3288 = vmatmul.mubr.f32.gmra.mxu0 %v3110
        %v3289 = vpop.f32.mrf.mxu0
        %v3290 = vadd.f32 0.0, %v3289
        %v3291 = vpop.f32.mrf.mxu0
        %3292 = vmatprep.mubr.f32.mxu0 0.0
        %3293 = vmatmul.mubr.f32.gmra.mxu0 %v3111
        %v3294 = vpop.f32.mrf.mxu0
        %v3295 = vadd.f32 0.0, %v3294
        %v3296 = vpop.f32.mrf.mxu0
        %3297 = vmatprep.mubr.f32.mxu0 0.0
        %3298 = vmatmul.mubr.f32.gmra.mxu0 %v3112
        %v3299 = vpop.f32.mrf.mxu0
        %v3300 = vadd.f32 0.0, %v3299
        %v3301 = vpop.f32.mrf.mxu0
        %3302 = vmatprep.mubr.f32.mxu0 0.0
        %3303 = vmatmul.mubr.f32.gmra.mxu0 %v3113
        %v3304 = vpop.f32.mrf.mxu0
        %v3305 = vadd.f32 0.0, %v3304
        %v3306 = vpop.f32.mrf.mxu0
        %3307 = vmatprep.mubr.f32.mxu0 0.0
        %3308 = vmatmul.mubr.f32.gmra.mxu0 %v3114
        %v3309 = vpop.f32.mrf.mxu0
        %v3310 = vadd.f32 0.0, %v3309
        %v3311 = vpop.f32.mrf.mxu0
        %3312 = vmatprep.mubr.f32.mxu0 0.0
        %3313 = vmatmul.mubr.f32.gmra.mxu0 %v3115
        %v3314 = vpop.f32.mrf.mxu0
        %v3315 = vadd.f32 0.0, %v3314
        %v3316 = vpop.f32.mrf.mxu0
        %3317 = vmatprep.mubr.f32.mxu0 0.0
        %3318 = vmatmul.mubr.f32.gmra.mxu0 %v3116
        %v3319 = vpop.f32.mrf.mxu0
        %v3320 = vadd.f32 0.0, %v3319
        %v3321 = vpop.f32.mrf.mxu0
        %3322 = vmatprep.mubr.f32.mxu0 0.0
        %3323 = vmatmul.mubr.f32.gmra.mxu0 %v3117
        %v3324 = vpop.f32.mrf.mxu0
        %v3325 = vadd.f32 0.0, %v3324
        %v3326 = vpop.f32.mrf.mxu0
        %3327 = vmatprep.mubr.f32.mxu0 0.0
        %3328 = vmatmul.mubr.f32.gmra.mxu0 %v3118
        %v3329 = vpop.f32.mrf.mxu0
        %v3330 = vadd.f32 0.0, %v3329
        %v3331 = vpop.f32.mrf.mxu0
        %3332 = vmatprep.mubr.f32.mxu0 0.0
        %3333 = vmatmul.mubr.f32.gmra.mxu0 %v3119
        %v3334 = vpop.f32.mrf.mxu0
        %v3335 = vadd.f32 0.0, %v3334
        %v3336 = vpop.f32.mrf.mxu0
        %3337 = vmatprep.mubr.f32.mxu0 0.0
        %3338 = vmatmul.mubr.f32.gmra.mxu0 %v3120
        %v3339 = vpop.f32.mrf.mxu0
        %v3340 = vadd.f32 0.0, %v3339
        %v3341 = vpop.f32.mrf.mxu0
        %3342 = vmatprep.mubr.f32.mxu0 0.0
        %3343 = vmatmul.mubr.f32.gmra.mxu0 %v3121
        %v3344 = vpop.f32.mrf.mxu0
        %v3345 = vadd.f32 0.0, %v3344
        %v3346 = vpop.f32.mrf.mxu0
        %3347 = vmatprep.mubr.f32.mxu0 0.0
        %3348 = vmatmul.mubr.f32.gmra.mxu0 %v3122
        %v3349 = vpop.f32.mrf.mxu0
        %v3350 = vadd.f32 0.0, %v3349
        %v3351 = vpop.f32.mrf.mxu0
        %3352 = vmatprep.mubr.f32.mxu0 0.0
        %3353 = vmatmul.mubr.f32.gmra.mxu0 %v3123
        %v3354 = vpop.f32.mrf.mxu0
        %v3355 = vadd.f32 0.0, %v3354
        %v3356 = vpop.f32.mrf.mxu0
        %3357 = vmatprep.mubr.f32.mxu0 0.0
        %3358 = vmatmul.mubr.f32.gmra.mxu0 %v3124
        %v3359 = vpop.f32.mrf.mxu0
        %v3360 = vadd.f32 0.0, %v3359
        %v3361 = vpop.f32.mrf.mxu0
        %3362 = vmatprep.mubr.f32.mxu0 0.0
        %3363 = vmatmul.mubr.f32.gmra.mxu0 %v3125
        %v3364 = vpop.f32.mrf.mxu0
        %v3365 = vadd.f32 0.0, %v3364
        %v3366 = vpop.f32.mrf.mxu0
        %3367 = vdwg.mxu0
        %v3368 = vld [vmem:[%s190] sm:$0xff]
        %v3369 = vld [vmem:[%s190 + $0x8] sm:$0xff]
        %v3370 = vld [vmem:[%s190 + $0x10] sm:$0xff]
        %v3371 = vld [vmem:[%s190 + $0x18] sm:$0xff]
        %v3372 = vld [vmem:[%s190 + $0x20] sm:$0xff]
        %v3373 = vld [vmem:[%s190 + $0x28] sm:$0xff]
        %v3374 = vld [vmem:[%s190 + $0x30] sm:$0xff]
        %v3375 = vld [vmem:[%s190 + $0x38] sm:$0xff]
        %v3376 = vld [vmem:[%s190 + $0x40] sm:$0xff]
        %v3377 = vld [vmem:[%s190 + $0x48] sm:$0xff]
        %v3378 = vld [vmem:[%s190 + $0x50] sm:$0xff]
        %v3379 = vld [vmem:[%s190 + $0x58] sm:$0xff]
        %v3380 = vld [vmem:[%s190 + $0x60] sm:$0xff]
        %v3381 = vld [vmem:[%s190 + $0x68] sm:$0xff]
        %v3382 = vld [vmem:[%s190 + $0x70] sm:$0xff]
        %v3383 = vld [vmem:[%s190 + $0x78] sm:$0xff]
        %v3384 = vld [vmem:[%s190 + $0x80] sm:$0xff]
        %v3385 = vld [vmem:[%s190 + $0x88] sm:$0xff]
        %v3386 = vld [vmem:[%s190 + $0x90] sm:$0xff]
        %v3387 = vld [vmem:[%s190 + $0x98] sm:$0xff]
        %v3388 = vld [vmem:[%s190 + $0xa0] sm:$0xff]
        %v3389 = vld [vmem:[%s190 + $0xa8] sm:$0xff]
        %v3390 = vld [vmem:[%s190 + $0xb0] sm:$0xff]
        %v3391 = vld [vmem:[%s190 + $0xb8] sm:$0xff]
        %v3392 = vld [vmem:[%s190 + $0xc0] sm:$0xff]
        %v3393 = vld [vmem:[%s190 + $0xc8] sm:$0xff]
        %v3394 = vld [vmem:[%s190 + $0xd0] sm:$0xff]
        %v3395 = vld [vmem:[%s190 + $0xd8] sm:$0xff]
        %v3396 = vld [vmem:[%s190 + $0xe0] sm:$0xff]
        %v3397 = vld [vmem:[%s190 + $0xe8] sm:$0xff]
        %v3398 = vld [vmem:[%s190 + $0xf0] sm:$0xff]
        %v3399 = vld [vmem:[%s190 + $0xf8] sm:$0xff]
        %v3400 = vadd.f32 %v3368, %v3210
        %v3401 = vadd.f32 %v3369, %v3215
        %v3402 = vadd.f32 %v3370, %v3220
        %v3403 = vadd.f32 %v3371, %v3225
        %v3404 = vadd.f32 %v3372, %v3230
        %v3405 = vadd.f32 %v3373, %v3235
        %v3406 = vadd.f32 %v3374, %v3240
        %v3407 = vadd.f32 %v3375, %v3245
        %v3408 = vadd.f32 %v3376, %v3250
        %v3409 = vadd.f32 %v3377, %v3255
        %v3410 = vadd.f32 %v3378, %v3260
        %v3411 = vadd.f32 %v3379, %v3265
        %v3412 = vadd.f32 %v3380, %v3270
        %v3413 = vadd.f32 %v3381, %v3275
        %v3414 = vadd.f32 %v3382, %v3280
        %v3415 = vadd.f32 %v3383, %v3285
        %v3416 = vadd.f32 %v3384, %v3290
        %v3417 = vadd.f32 %v3385, %v3295
        %v3418 = vadd.f32 %v3386, %v3300
        %v3419 = vadd.f32 %v3387, %v3305
        %v3420 = vadd.f32 %v3388, %v3310
        %v3421 = vadd.f32 %v3389, %v3315
        %v3422 = vadd.f32 %v3390, %v3320
        %v3423 = vadd.f32 %v3391, %v3325
        %v3424 = vadd.f32 %v3392, %v3330
        %v3425 = vadd.f32 %v3393, %v3335
        %v3426 = vadd.f32 %v3394, %v3340
        %v3427 = vadd.f32 %v3395, %v3345
        %v3428 = vadd.f32 %v3396, %v3350
        %v3429 = vadd.f32 %v3397, %v3355
        %v3430 = vadd.f32 %v3398, %v3360
        %v3431 = vadd.f32 %v3399, %v3365
        %3432 = vst [vmem:[%s190] sm:$0xff] %v3400
        %3433 = vst [vmem:[%s190 + $0x8] sm:$0xff] %v3401
        %3434 = vst [vmem:[%s190 + $0x10] sm:$0xff] %v3402
        %3435 = vst [vmem:[%s190 + $0x18] sm:$0xff] %v3403
        %3436 = vst [vmem:[%s190 + $0x20] sm:$0xff] %v3404
        %3437 = vst [vmem:[%s190 + $0x28] sm:$0xff] %v3405
        %3438 = vst [vmem:[%s190 + $0x30] sm:$0xff] %v3406
        %3439 = vst [vmem:[%s190 + $0x38] sm:$0xff] %v3407
        %3440 = vst [vmem:[%s190 + $0x40] sm:$0xff] %v3408
        %3441 = vst [vmem:[%s190 + $0x48] sm:$0xff] %v3409
        %3442 = vst [vmem:[%s190 + $0x50] sm:$0xff] %v3410
        %3443 = vst [vmem:[%s190 + $0x58] sm:$0xff] %v3411
        %3444 = vst [vmem:[%s190 + $0x60] sm:$0xff] %v3412
        %3445 = vst [vmem:[%s190 + $0x68] sm:$0xff] %v3413
        %3446 = vst [vmem:[%s190 + $0x70] sm:$0xff] %v3414
        %3447 = vst [vmem:[%s190 + $0x78] sm:$0xff] %v3415
        %3448 = vst [vmem:[%s190 + $0x80] sm:$0xff] %v3416
        %3449 = vst [vmem:[%s190 + $0x88] sm:$0xff] %v3417
        %3450 = vst [vmem:[%s190 + $0x90] sm:$0xff] %v3418
        %3451 = vst [vmem:[%s190 + $0x98] sm:$0xff] %v3419
        %3452 = vst [vmem:[%s190 + $0xa0] sm:$0xff] %v3420
        %3453 = vst [vmem:[%s190 + $0xa8] sm:$0xff] %v3421
        %3454 = vst [vmem:[%s190 + $0xb0] sm:$0xff] %v3422
        %3455 = vst [vmem:[%s190 + $0xb8] sm:$0xff] %v3423
        %3456 = vst [vmem:[%s190 + $0xc0] sm:$0xff] %v3424
        %3457 = vst [vmem:[%s190 + $0xc8] sm:$0xff] %v3425
        %3458 = vst [vmem:[%s190 + $0xd0] sm:$0xff] %v3426
        %3459 = vst [vmem:[%s190 + $0xd8] sm:$0xff] %v3427
        %3460 = vst [vmem:[%s190 + $0xe0] sm:$0xff] %v3428
        %3461 = vst [vmem:[%s190 + $0xe8] sm:$0xff] %v3429
        %3462 = vst [vmem:[%s190 + $0xf0] sm:$0xff] %v3430
        %3463 = vst [vmem:[%s190 + $0xf8] sm:$0xff] %v3431
        %v3464 = vld [vmem:[%s1242 + $0x1] sm:$0xff]
        %v3465 = vld [vmem:[%s1242 + $0x9] sm:$0xff]
        %v3466 = vld [vmem:[%s1242 + $0x19] sm:$0xff]
        %v3467 = vld [vmem:[%s1242 + $0x21] sm:$0xff]
        %v3468 = vld [vmem:[%s1242 + $0x31] sm:$0xff]
        %v3469 = vld [vmem:[%s1242 + $0x39] sm:$0xff]
        %v3470 = vld [vmem:[%s1242 + $0x49] sm:$0xff]
        %v3471 = vld [vmem:[%s1242 + $0x51] sm:$0xff]
        %v3472 = vld [vmem:[%s1242 + $0x61] sm:$0xff]
        %v3473 = vld [vmem:[%s1242 + $0x69] sm:$0xff]
        %v3474 = vld [vmem:[%s1242 + $0x79] sm:$0xff]
        %v3475 = vld [vmem:[%s1242 + $0x81] sm:$0xff]
        %v3476 = vld [vmem:[%s1242 + $0x91] sm:$0xff]
        %v3477 = vld [vmem:[%s1242 + $0x99] sm:$0xff]
        %v3478 = vld [vmem:[%s1242 + $0xa9] sm:$0xff]
        %v3479 = vld [vmem:[%s1242 + $0xb1] sm:$0xff]
        %v3480 = vld [vmem:[%s1242 + $0xc1] sm:$0xff]
        %v3481 = vld [vmem:[%s1242 + $0xc9] sm:$0xff]
        %v3482 = vld [vmem:[%s1242 + $0xd9] sm:$0xff]
        %v3483 = vld [vmem:[%s1242 + $0xe1] sm:$0xff]
        %v3484 = vld [vmem:[%s1242 + $0xf1] sm:$0xff]
        %v3485 = vld [vmem:[%s1242 + $0xf9] sm:$0xff]
        %v3486 = vld [vmem:[%s1242 + $0x109] sm:$0xff]
        %v3487 = vld [vmem:[%s1242 + $0x111] sm:$0xff]
        %v3488 = vld [vmem:[%s1242 + $0x121] sm:$0xff]
        %v3489 = vld [vmem:[%s1242 + $0x129] sm:$0xff]
        %v3490 = vld [vmem:[%s1242 + $0x139] sm:$0xff]
        %v3491 = vld [vmem:[%s1242 + $0x141] sm:$0xff]
        %v3492 = vld [vmem:[%s1242 + $0x151] sm:$0xff]
        %v3493 = vld [vmem:[%s1242 + $0x159] sm:$0xff]
        %v3494 = vld [vmem:[%s1242 + $0x169] sm:$0xff]
        %v3495 = vld [vmem:[%s1242 + $0x171] sm:$0xff]
        %v3496 = vld [vmem:[%s190] sm:$0xff]
        %v3497 = vld [vmem:[%s190 + $0x8] sm:$0xff]
        %v3498 = vld [vmem:[%s190 + $0x10] sm:$0xff]
        %v3499 = vld [vmem:[%s190 + $0x18] sm:$0xff]
        %v3500 = vld [vmem:[%s190 + $0x20] sm:$0xff]
        %v3501 = vld [vmem:[%s190 + $0x28] sm:$0xff]
        %v3502 = vld [vmem:[%s190 + $0x30] sm:$0xff]
        %v3503 = vld [vmem:[%s190 + $0x38] sm:$0xff]
        %v3504 = vld [vmem:[%s190 + $0x40] sm:$0xff]
        %v3505 = vld [vmem:[%s190 + $0x48] sm:$0xff]
        %v3506 = vld [vmem:[%s190 + $0x50] sm:$0xff]
        %v3507 = vld [vmem:[%s190 + $0x58] sm:$0xff]
        %v3508 = vld [vmem:[%s190 + $0x60] sm:$0xff]
        %v3509 = vld [vmem:[%s190 + $0x68] sm:$0xff]
        %v3510 = vld [vmem:[%s190 + $0x70] sm:$0xff]
        %v3511 = vld [vmem:[%s190 + $0x78] sm:$0xff]
        %v3512 = vld [vmem:[%s190 + $0x80] sm:$0xff]
        %v3513 = vld [vmem:[%s190 + $0x88] sm:$0xff]
        %v3514 = vld [vmem:[%s190 + $0x90] sm:$0xff]
        %v3515 = vld [vmem:[%s190 + $0x98] sm:$0xff]
        %v3516 = vld [vmem:[%s190 + $0xa0] sm:$0xff]
        %v3517 = vld [vmem:[%s190 + $0xa8] sm:$0xff]
        %v3518 = vld [vmem:[%s190 + $0xb0] sm:$0xff]
        %v3519 = vld [vmem:[%s190 + $0xb8] sm:$0xff]
        %v3520 = vld [vmem:[%s190 + $0xc0] sm:$0xff]
        %v3521 = vld [vmem:[%s190 + $0xc8] sm:$0xff]
        %v3522 = vld [vmem:[%s190 + $0xd0] sm:$0xff]
        %v3523 = vld [vmem:[%s190 + $0xd8] sm:$0xff]
        %v3524 = vld [vmem:[%s190 + $0xe0] sm:$0xff]
        %v3525 = vld [vmem:[%s190 + $0xe8] sm:$0xff]
        %v3526 = vld [vmem:[%s190 + $0xf0] sm:$0xff]
        %v3527 = vld [vmem:[%s190 + $0xf8] sm:$0xff]
        %v3528 = vld [vmem:[%s2] sm:$0x1]
        %v3530 = vlaneseq
        %v3531 = vshrl.u32 %v3530, 7
        %v3532 = vsub.s32 0, %v3531
        %v3533 = vrot.slane %v3528, %v3532
        %v3535 = vmul.f32 %v3496, %v3533
        %v3536 = vmul.f32 %v3497, %v3533
        %v3537 = vmul.f32 %v3498, %v3533
        %v3538 = vmul.f32 %v3499, %v3533
        %v3539 = vmul.f32 %v3500, %v3533
        %v3540 = vmul.f32 %v3501, %v3533
        %v3541 = vmul.f32 %v3502, %v3533
        %v3542 = vmul.f32 %v3503, %v3533
        %v3543 = vmul.f32 %v3504, %v3533
        %v3544 = vmul.f32 %v3505, %v3533
        %v3545 = vmul.f32 %v3506, %v3533
        %v3546 = vmul.f32 %v3507, %v3533
        %v3547 = vmul.f32 %v3508, %v3533
        %v3548 = vmul.f32 %v3509, %v3533
        %v3549 = vmul.f32 %v3510, %v3533
        %v3550 = vmul.f32 %v3511, %v3533
        %v3551 = vmul.f32 %v3512, %v3533
        %v3552 = vmul.f32 %v3513, %v3533
        %v3553 = vmul.f32 %v3514, %v3533
        %v3554 = vmul.f32 %v3515, %v3533
        %v3555 = vmul.f32 %v3516, %v3533
        %v3556 = vmul.f32 %v3517, %v3533
        %v3557 = vmul.f32 %v3518, %v3533
        %v3558 = vmul.f32 %v3519, %v3533
        %v3559 = vmul.f32 %v3520, %v3533
        %v3560 = vmul.f32 %v3521, %v3533
        %v3561 = vmul.f32 %v3522, %v3533
        %v3562 = vmul.f32 %v3523, %v3533
        %v3563 = vmul.f32 %v3524, %v3533
        %v3564 = vmul.f32 %v3525, %v3533
        %v3565 = vmul.f32 %v3526, %v3533
        %v3566 = vmul.f32 %v3527, %v3533
        %v3567 = vadd.f32 %v3464, %v3535
        %v3568 = vadd.f32 %v3465, %v3536
        %v3569 = vadd.f32 %v3466, %v3537
        %v3570 = vadd.f32 %v3467, %v3538
        %v3571 = vadd.f32 %v3468, %v3539
        %v3572 = vadd.f32 %v3469, %v3540
        %v3573 = vadd.f32 %v3470, %v3541
        %v3574 = vadd.f32 %v3471, %v3542
        %v3575 = vadd.f32 %v3472, %v3543
        %v3576 = vadd.f32 %v3473, %v3544
        %v3577 = vadd.f32 %v3474, %v3545
        %v3578 = vadd.f32 %v3475, %v3546
        %v3579 = vadd.f32 %v3476, %v3547
        %v3580 = vadd.f32 %v3477, %v3548
        %v3581 = vadd.f32 %v3478, %v3549
        %v3582 = vadd.f32 %v3479, %v3550
        %v3583 = vadd.f32 %v3480, %v3551
        %v3584 = vadd.f32 %v3481, %v3552
        %v3585 = vadd.f32 %v3482, %v3553
        %v3586 = vadd.f32 %v3483, %v3554
        %v3587 = vadd.f32 %v3484, %v3555
        %v3588 = vadd.f32 %v3485, %v3556
        %v3589 = vadd.f32 %v3486, %v3557
        %v3590 = vadd.f32 %v3487, %v3558
        %v3591 = vadd.f32 %v3488, %v3559
        %v3592 = vadd.f32 %v3489, %v3560
        %v3593 = vadd.f32 %v3490, %v3561
        %v3594 = vadd.f32 %v3491, %v3562
        %v3595 = vadd.f32 %v3492, %v3563
        %v3596 = vadd.f32 %v3493, %v3564
        %v3597 = vadd.f32 %v3494, %v3565
        %v3598 = vadd.f32 %v3495, %v3566
        %v3599 = vld [vmem:[%s3] sm:$0x1]
        %v3601 = vlaneseq
        %v3602 = vshrl.u32 %v3601, 7
        %v3603 = vsub.s32 0, %v3602
        %v3604 = vrot.slane %v3599, %v3603
        %v3606 = vadd.f32 %v3567, %v3604
        %v3607 = vadd.f32 %v3568, %v3604
        %v3608 = vadd.f32 %v3569, %v3604
        %v3609 = vadd.f32 %v3570, %v3604
        %v3610 = vadd.f32 %v3571, %v3604
        %v3611 = vadd.f32 %v3572, %v3604
        %v3612 = vadd.f32 %v3573, %v3604
        %v3613 = vadd.f32 %v3574, %v3604
        %v3614 = vadd.f32 %v3575, %v3604
        %v3615 = vadd.f32 %v3576, %v3604
        %v3616 = vadd.f32 %v3577, %v3604
        %v3617 = vadd.f32 %v3578, %v3604
        %v3618 = vadd.f32 %v3579, %v3604
        %v3619 = vadd.f32 %v3580, %v3604
        %v3620 = vadd.f32 %v3581, %v3604
        %v3621 = vadd.f32 %v3582, %v3604
        %v3622 = vadd.f32 %v3583, %v3604
        %v3623 = vadd.f32 %v3584, %v3604
        %v3624 = vadd.f32 %v3585, %v3604
        %v3625 = vadd.f32 %v3586, %v3604
        %v3626 = vadd.f32 %v3587, %v3604
        %v3627 = vadd.f32 %v3588, %v3604
        %v3628 = vadd.f32 %v3589, %v3604
        %v3629 = vadd.f32 %v3590, %v3604
        %v3630 = vadd.f32 %v3591, %v3604
        %v3631 = vadd.f32 %v3592, %v3604
        %v3632 = vadd.f32 %v3593, %v3604
        %v3633 = vadd.f32 %v3594, %v3604
        %v3634 = vadd.f32 %v3595, %v3604
        %v3635 = vadd.f32 %v3596, %v3604
        %v3636 = vadd.f32 %v3597, %v3604
        %v3637 = vadd.f32 %v3598, %v3604
        %v3638 = vmax.f32 %v3606, 0.0
        %v3639 = vmax.f32 %v3607, 0.0
        %v3640 = vmax.f32 %v3608, 0.0
        %v3641 = vmax.f32 %v3609, 0.0
        %v3642 = vmax.f32 %v3610, 0.0
        %v3643 = vmax.f32 %v3611, 0.0
        %v3644 = vmax.f32 %v3612, 0.0
        %v3645 = vmax.f32 %v3613, 0.0
        %v3646 = vmax.f32 %v3614, 0.0
        %v3647 = vmax.f32 %v3615, 0.0
        %v3648 = vmax.f32 %v3616, 0.0
        %v3649 = vmax.f32 %v3617, 0.0
        %v3650 = vmax.f32 %v3618, 0.0
        %v3651 = vmax.f32 %v3619, 0.0
        %v3652 = vmax.f32 %v3620, 0.0
        %v3653 = vmax.f32 %v3621, 0.0
        %v3654 = vmax.f32 %v3622, 0.0
        %v3655 = vmax.f32 %v3623, 0.0
        %v3656 = vmax.f32 %v3624, 0.0
        %v3657 = vmax.f32 %v3625, 0.0
        %v3658 = vmax.f32 %v3626, 0.0
        %v3659 = vmax.f32 %v3627, 0.0
        %v3660 = vmax.f32 %v3628, 0.0
        %v3661 = vmax.f32 %v3629, 0.0
        %v3662 = vmax.f32 %v3630, 0.0
        %v3663 = vmax.f32 %v3631, 0.0
        %v3664 = vmax.f32 %v3632, 0.0
        %v3665 = vmax.f32 %v3633, 0.0
        %v3666 = vmax.f32 %v3634, 0.0
        %v3667 = vmax.f32 %v3635, 0.0
        %v3668 = vmax.f32 %v3636, 0.0
        %v3669 = vmax.f32 %v3637, 0.0
        %3670 = vst [vmem:[%s190] sm:$0xff] %v3638
        %3671 = vst [vmem:[%s190 + $0x8] sm:$0xff] %v3639
        %3672 = vst [vmem:[%s190 + $0x10] sm:$0xff] %v3640
        %3673 = vst [vmem:[%s190 + $0x18] sm:$0xff] %v3641
        %3674 = vst [vmem:[%s190 + $0x20] sm:$0xff] %v3642
        %3675 = vst [vmem:[%s190 + $0x28] sm:$0xff] %v3643
        %3676 = vst [vmem:[%s190 + $0x30] sm:$0xff] %v3644
        %3677 = vst [vmem:[%s190 + $0x38] sm:$0xff] %v3645
        %3678 = vst [vmem:[%s190 + $0x40] sm:$0xff] %v3646
        %3679 = vst [vmem:[%s190 + $0x48] sm:$0xff] %v3647
        %3680 = vst [vmem:[%s190 + $0x50] sm:$0xff] %v3648
        %3681 = vst [vmem:[%s190 + $0x58] sm:$0xff] %v3649
        %3682 = vst [vmem:[%s190 + $0x60] sm:$0xff] %v3650
        %3683 = vst [vmem:[%s190 + $0x68] sm:$0xff] %v3651
        %3684 = vst [vmem:[%s190 + $0x70] sm:$0xff] %v3652
        %3685 = vst [vmem:[%s190 + $0x78] sm:$0xff] %v3653
        %3686 = vst [vmem:[%s190 + $0x80] sm:$0xff] %v3654
        %3687 = vst [vmem:[%s190 + $0x88] sm:$0xff] %v3655
        %3688 = vst [vmem:[%s190 + $0x90] sm:$0xff] %v3656
        %3689 = vst [vmem:[%s190 + $0x98] sm:$0xff] %v3657
        %3690 = vst [vmem:[%s190 + $0xa0] sm:$0xff] %v3658
        %3691 = vst [vmem:[%s190 + $0xa8] sm:$0xff] %v3659
        %3692 = vst [vmem:[%s190 + $0xb0] sm:$0xff] %v3660
        %3693 = vst [vmem:[%s190 + $0xb8] sm:$0xff] %v3661
        %3694 = vst [vmem:[%s190 + $0xc0] sm:$0xff] %v3662
        %3695 = vst [vmem:[%s190 + $0xc8] sm:$0xff] %v3663
        %3696 = vst [vmem:[%s190 + $0xd0] sm:$0xff] %v3664
        %3697 = vst [vmem:[%s190 + $0xd8] sm:$0xff] %v3665
        %3698 = vst [vmem:[%s190 + $0xe0] sm:$0xff] %v3666
        %3699 = vst [vmem:[%s190 + $0xe8] sm:$0xff] %v3667
        %3700 = vst [vmem:[%s190 + $0xf0] sm:$0xff] %v3668
        %3701 = vst [vmem:[%s190 + $0xf8] sm:$0xff] %v3669
        %s3702 = sand.u32 %s115, 1
        %s3703 = scalar_lea.sflag [#allocation3], %s3702
        %s3704 = sand.u32 %s115, 1
        %s3705 = smul.addr %s3704, 256
        %s3706 = scalar_lea.vmem [#allocation2], %s3705
        // Predicated region
        $region37: #{tpu_custom_call.1} parent=35 // pred_check
          %p3707 = pneg %p125
        $region38: #{tpu_custom_call.1} parent=35 // pred_check_branch
          %3709 = sbr.rel (%p3707) target = $region40
        $region39: #{tpu_custom_call.1} parent=35 // pred_region
          %s3710 = smul.u32 32, %s18
          %s3712 = ssub.s32 4096, 4096
          %3713 = vsyncadd %s3703, %s3712
          %s3714 = smul.addr %s3710, 128
          %s3715 = scalar_lea.hbm %s4, %s3714
          %s3716 = sshll.u32 %s3706, 4
          %s3717 = int_to_ptr.vmem [resolvable:$true] %s3716
          %3722 = dma.vmem_to_hbm [thread:$0]  %s3717, 4096, %s3715, %s3703, 128, 128, 8
        $region40: #{tpu_custom_call.1} parent=35 // pred_fallthru
          _
      $region36: #{tpu_custom_call.1} parent=5 // pred_fallthru
        _
      %p3723 = scmp.le.s32.totalorder 2, %s13
      // Predicated region
      $region41: #{tpu_custom_call.1} parent=5 // pred_check
        %p3724 = pneg %p3723
      $region42: #{tpu_custom_call.1} parent=5 // pred_check_branch
        %3726 = sbr.rel (%p3724) target = $region44
      $region43: #{tpu_custom_call.1} parent=5 // pred_region
        %s3727 = ssub.s32 %s13, 2
        // Predicated region
        $region45: #{tpu_custom_call.1} parent=43 // pred_check
          %p3728 = pneg %p131
        $region46: #{tpu_custom_call.1} parent=43 // pred_check_branch
          %3730 = sbr.rel (%p3728) target = $region48
        $region47: #{tpu_custom_call.1} parent=43 // pred_region
          %s3731 = sand.u32 %s116, 1
          %s3732 = scalar_lea.sflag [#allocation3], %s3731
          %s3733 = sand.u32 %s116, 1
          %s3734 = smul.addr %s3733, 256
          %s3735 = scalar_lea.vmem [#allocation2], %s3734
          %3736 = dma.done %s3732, 4096
        $region48: #{tpu_custom_call.1} parent=43 // pred_fallthru
          _
      $region44: #{tpu_custom_call.1} parent=5 // pred_fallthru
        _
    $region6: #{tpu_custom_call.1} parent=1 // loop_footer
      %s17 = sadd.s32 1, %s13
    $region7: #{tpu_custom_call.1} parent=1 // loop_footer_branch
      %12 = sbr.rel target = $region3
    $region8: #{tpu_custom_call.1} parent=1 // loop_exit
      _
    %3737 = vsyncpa [#allocation3], 1
    %s3738 = scalar_lea.sflag [#allocation3], 1
    %3739 = vsyncpa %s3738, 1

</llo_original>
